<compile_context>
chip_gen: v5e
topology: v5e:2x2
jax: 0.10.0
libtpu: 0.0.40
codegen_flags: <defaults>
</compile_context>

<pallas_src>
import jax
import jax.numpy as jnp
from jax.experimental import pallas as pl
from jax.experimental.pallas import tpu as pltpu

# Module / problem configuration (small shapes consistent with the module).
N, H, W = 2, 16, 16
CIN, COUT = 4, 4
STRIDE = 1
EXPAND = 6
HID = round(CIN * EXPAND)          # hidden_dim = 24
EPS = 1e-5
USE_RES = (STRIDE == 1 and CIN == COUT)

NHW = N * H * W                    # 512 pixels (sublane dim)
CP = 128                           # lane-dense padded channel width

# Padded-row staging layout for the mask-free 3x3 depthwise conv.
WP = 24                            # padded sublane stride per image row (>= W+2, mult of 8)
TOP = 32                           # top zero pad (>= WP+1 so shift -WP-1 stays in bounds)
GAP = 32                           # zero pad rows between / after images (>= W+1)
IMG = H * WP                       # 384 data sublanes per image
IMG_STRIDE = IMG + GAP             # 416 sublanes image-to-image
SPAN_START = TOP                   # first data sublane in scratch
SPAN = (N - 1) * IMG_STRIDE + IMG  # 800 contiguous sublanes covering all data
SCR_ROWS = TOP + N * IMG_STRIDE    # 864 total scratch sublanes (all written)


def _relu6(h):
    return jnp.clip(h, 0.0, 6.0)


def _bn_fused(h, eps=EPS):
    """BatchNorm2d (training, weight=1, bias=0) on 2-D [pixels, channels].

    Single pass: sum and sum-of-squares together, var = E[x^2] - mean^2,
    rsqrt folded directly into the normalizing multiply.
    NOTE: E[x^2]-mean^2 can cancel badly in f32 for large-mean production
    activations; switch to the two-pass form at real scales.
    """
    inv_n = 1.0 / NHW
    mean = jnp.sum(h, axis=0, keepdims=True) * inv_n
    ex2 = jnp.sum(h * h, axis=0, keepdims=True) * inv_n
    var = jnp.maximum(ex2 - mean * mean, 0.0)
    return (h - mean) * jax.lax.rsqrt(var + eps)


def _bn_train(h, eps=EPS):
    """Two-pass reference BatchNorm (used only by the pure-JAX reference)."""
    axes = tuple(range(h.ndim - 1))
    mean = jnp.mean(h, axis=axes, keepdims=True)
    var = jnp.mean((h - mean) ** 2, axis=axes, keepdims=True)
    return (h - mean) * jax.lax.rsqrt(var + eps)


def inverted_residual_kernel(x_ref, w1_ref, dw_ref, w2_ref, o_ref, h_scr):
    f32 = jnp.float32

    # ---- 1x1 expand conv (bias=False) + BN + ReLU6 (MXU, K padded to 128) ----
    # x_ref is read here and again only at the residual add (short live range).
    h = jnp.dot(x_ref[...], w1_ref[...], preferred_element_type=f32)
    h = _relu6(_bn_fused(h))

    # ---- stage into padded-row layout (every store sublane-aligned) ----
    zeros_gap = jnp.zeros((GAP, CP), f32)        # GAP == TOP == 32
    zeros_pad = jnp.zeros((WP - W, CP), f32)     # 8 trailing pad columns / row
    h_scr[pl.ds(0, TOP), :] = zeros_gap
    for n in range(N):
        base = TOP + n * IMG_STRIDE
        for i in range(H):
            r = base + i * WP
            c = (n * H + i) * W
            h_scr[pl.ds(r, W), :] = h[c:c + W, :]              # aligned [16,CP]
            h_scr[pl.ds(r + W, WP - W), :] = zeros_pad         # aligned [8,CP]
        h_scr[pl.ds(base + IMG, GAP), :] = zeros_gap           # pad row below image
    # `h` is dead here: the centre tap is re-read from h_scr below.

    # ---- 3x3 depthwise conv, padding=1, stride=1, groups=HID (mask-free) ----
    # Neighbour (i+dh, j+dw) of a pixel sits at flat padded offset dh*WP + dw;
    # every out-of-image neighbour lands on an already-zero pad sublane, so
    # each tap is one shifted read + one VPU FMA (no compares / selects).
    dwv = dw_ref[...]                                          # [9, CP]
    taps = [dwv[k:k + 1, :] for k in range(9)]                 # hoisted broadcasts

    acc = h_scr[pl.ds(SPAN_START, SPAN), :] * taps[4]          # centre tap (1,1)
    for kh in range(3):
        for kw in range(3):
            if kh == 1 and kw == 1:
                continue
            s = (kh - 1) * WP + (kw - 1)
            shifted = h_scr[pl.ds(SPAN_START + s, SPAN), :]    # [SPAN, CP]
            acc = acc + shifted * taps[kh * 3 + kw]

    # ---- compact padded acc back to [NHW, CP] (aligned [16, CP] slices) ----
    rows = []
    for n in range(N):
        for i in range(H):
            r = n * IMG_STRIDE + i * WP
            rows.append(acc[r:r + W, :])
    g = jnp.concatenate(rows, axis=0)                          # [NHW, CP]

    # AvgPool2d(stride) is the identity for stride == 1.
    g = _relu6(_bn_fused(g))

    # ---- 1x1 project conv (bias=False) + BN (MXU) ----
    out = jnp.dot(g, w2_ref[...], preferred_element_type=f32)
    out = _bn_fused(out)

    # ---- residual connection (stride==1 and inp==oup) ----
    if USE_RES:
        out = out + x_ref[...]                                 # x re-read here only
    o_ref[...] = out                                           # lane-dense store


def inverted_residual(x_nchw, w1_torch, dw_torch, w2_torch):
    """x_nchw: [N,CIN,H,W]; torch-layout weights. Returns NCHW output."""
    f32 = jnp.float32
    # Layout plumbing (all reshapes/transposes/padding outside the kernel).
    x2d = jnp.transpose(x_nchw, (0, 2, 3, 1)).astype(f32).reshape(NHW, CIN)
    x_pad = jnp.zeros((NHW, CP), f32).at[:, :CIN].set(x2d)

    w1 = jnp.transpose(w1_torch[:, :, 0, 0], (1, 0))                     # [CIN,HID]
    w1_pad = jnp.zeros((CP, CP), f32).at[:CIN, :HID].set(w1)
    dw = jnp.transpose(dw_torch[:, 0, :, :], (1, 2, 0)).reshape(9, HID)  # [9,HID]
    dw_pad = jnp.zeros((9, CP), f32).at[:, :HID].set(dw)
    w2 = jnp.transpose(w2_torch[:, :, 0, 0], (1, 0))                     # [HID,COUT]
    w2_pad = jnp.zeros((CP, CP), f32).at[:HID, :COUT].set(w2)

    y2d = pl.pallas_call(
        inverted_residual_kernel,
        out_shape=jax.ShapeDtypeStruct((NHW, CP), f32),
        in_specs=[pl.BlockSpec(memory_space=pltpu.MemorySpace.VMEM)] * 4,
        out_specs=pl.BlockSpec(memory_space=pltpu.MemorySpace.VMEM),
        scratch_shapes=[pltpu.VMEM((SCR_ROWS, CP), f32)],
    )(x_pad, w1_pad, dw_pad, w2_pad)

    y = y2d[:, :COUT].reshape(N, H, W, COUT)
    return jnp.transpose(y, (0, 3, 1, 2))                      # back to NCHW


def reference_forward(x_nchw, w1_torch, dw_torch, w2_torch):
    """Pure-JAX reference mirroring the PyTorch forward (NHWC internally)."""
    x = jnp.transpose(x_nchw, (0, 2, 3, 1)).astype(jnp.float32)
    w1 = jnp.transpose(w1_torch[:, :, 0, 0], (1, 0))
    dw_hwio = jnp.transpose(dw_torch[:, 0, :, :], (1, 2, 0))[:, :, None, :]  # [3,3,1,HID]
    w2 = jnp.transpose(w2_torch[:, :, 0, 0], (1, 0))

    h = jnp.einsum('nhwc,cd->nhwd', x, w1)
    h = _relu6(_bn_train(h))
    h = jax.lax.conv_general_dilated(
        h, dw_hwio, window_strides=(1, 1), padding='SAME',
        dimension_numbers=('NHWC', 'HWIO', 'NHWC'), feature_group_count=HID)
    h = _relu6(_bn_train(h))
    out = jnp.einsum('nhwd,de->nhwe', h, w2)
    out = _bn_train(out)
    out = out + x
    return jnp.transpose(out, (0, 3, 1, 2))


if __name__ == "__main__":
    key = jax.random.PRNGKey(0)
    k1, k2, k3, kx = jax.random.split(key, 4)

    # Deterministic xavier_uniform-style init matching torch parameter shapes.
    b1 = (6.0 / (CIN + HID)) ** 0.5                  # Conv2d(CIN,HID,1,bias=False)
    w1_torch = jax.random.uniform(k1, (HID, CIN, 1, 1), jnp.float32, -b1, b1)
    bd = (6.0 / (9 + HID * 9)) ** 0.5                # depthwise Conv2d(HID,HID,3,groups=HID)
    dw_torch = jax.random.uniform(k2, (HID, 1, 3, 3), jnp.float32, -bd, bd)
    b2 = (6.0 / (HID + COUT)) ** 0.5                 # Conv2d(HID,COUT,1,bias=False)
    w2_torch = jax.random.uniform(k3, (COUT, HID, 1, 1), jnp.float32, -b2, b2)

    x = jax.random.normal(kx, (N, CIN, H, W), jnp.float32)

    y = inverted_residual(x, w1_torch, dw_torch, w2_torch)
    y = jax.block_until_ready(y)

    y_ref = reference_forward(x, w1_torch, dw_torch, w2_torch)
    assert y.shape == (N, COUT, H, W)
    assert jnp.allclose(y, y_ref, atol=2e-4, rtol=2e-4), \
        f"max abs err {jnp.max(jnp.abs(y - y_ref))}"

    print("KERNEL_OK")
</pallas_src>

<mosaic_0001>
module attributes {stable_mosaic.version = 11 : i64} {
  func.func @inverted_residual_kernel(%arg0: memref<512x128xf32, #tpu.memory_space<vmem>>, %arg1: memref<128x128xf32, #tpu.memory_space<vmem>>, %arg2: memref<9x128xf32, #tpu.memory_space<vmem>>, %arg3: memref<128x128xf32, #tpu.memory_space<vmem>>, %arg4: memref<512x128xf32, #tpu.memory_space<vmem>>, %arg5: memref<864x128xf32, #tpu.memory_space<vmem>>) attributes {dimension_semantics = [], scalar_prefetch = 0 : i64, scratch_operands = 1 : i64, tpu.core_type = #tpu.core_type<tc>} {
    %c0 = arith.constant 0 : index
    %c0_0 = arith.constant 0 : index
    %0 = vector.load %arg0[%c0, %c0_0] : memref<512x128xf32, #tpu.memory_space<vmem>>, vector<512x128xf32>
    %c0_1 = arith.constant 0 : index
    %c0_2 = arith.constant 0 : index
    %1 = vector.load %arg1[%c0_1, %c0_2] : memref<128x128xf32, #tpu.memory_space<vmem>>, vector<128x128xf32>
    %cst = arith.constant dense<0.000000e+00> : vector<512x128xf32>
    %2 = tpu.matmul %0, %1, %cst {dimension_numbers = #tpu.dot_dimension_numbers<[1], [0], [0], [1], [0, 0, 1, 1], [], []>} : vector<512x128xf32>, vector<128x128xf32>, vector<512x128xf32> -> vector<512x128xf32>
    %cst_3 = arith.constant dense<0.000000e+00> : vector<128xf32>
    %3 = vector.multi_reduction <add>, %2, %cst_3 [0] : vector<512x128xf32> to vector<128xf32>
    %4 = vector.shape_cast %3 : vector<128xf32> to vector<1x128xf32>
    %cst_4 = arith.constant 0.001953125 : f32
    %5 = vector.broadcast %cst_4 : f32 to vector<1x128xf32>
    %6 = arith.mulf %4, %5 : vector<1x128xf32>
    %7 = arith.mulf %2, %2 : vector<512x128xf32>
    %cst_5 = arith.constant dense<0.000000e+00> : vector<128xf32>
    %8 = vector.multi_reduction <add>, %7, %cst_5 [0] : vector<512x128xf32> to vector<128xf32>
    %9 = vector.shape_cast %8 : vector<128xf32> to vector<1x128xf32>
    %cst_6 = arith.constant 0.001953125 : f32
    %10 = vector.broadcast %cst_6 : f32 to vector<1x128xf32>
    %11 = arith.mulf %9, %10 : vector<1x128xf32>
    %12 = arith.mulf %6, %6 : vector<1x128xf32>
    %13 = arith.subf %11, %12 : vector<1x128xf32>
    %cst_7 = arith.constant 0.000000e+00 : f32
    %14 = vector.broadcast %cst_7 : f32 to vector<1x128xf32>
    %15 = arith.maximumf %13, %14 : vector<1x128xf32>
    %16 = vector.broadcast %6 : vector<1x128xf32> to vector<512x128xf32>
    %17 = arith.subf %2, %16 : vector<512x128xf32>
    %cst_8 = arith.constant 9.99999974E-6 : f32
    %18 = vector.broadcast %cst_8 : f32 to vector<1x128xf32>
    %19 = arith.addf %15, %18 : vector<1x128xf32>
    %20 = math.rsqrt %19 : vector<1x128xf32>
    %21 = vector.broadcast %20 : vector<1x128xf32> to vector<512x128xf32>
    %22 = arith.mulf %17, %21 : vector<512x128xf32>
    %cst_9 = arith.constant 0.000000e+00 : f32
    %cst_10 = arith.constant 6.000000e+00 : f32
    %23 = vector.broadcast %cst_9 : f32 to vector<512x128xf32>
    %24 = arith.maximumf %23, %22 : vector<512x128xf32>
    %25 = vector.broadcast %cst_10 : f32 to vector<512x128xf32>
    %26 = arith.minimumf %25, %24 : vector<512x128xf32>
    %cst_11 = arith.constant 0.000000e+00 : f32
    %27 = vector.broadcast %cst_11 : f32 to vector<32x128xf32>
    %cst_12 = arith.constant 0.000000e+00 : f32
    %28 = vector.broadcast %cst_12 : f32 to vector<8x128xf32>
    %c0_13 = arith.constant 0 : index
    %c0_14 = arith.constant 0 : index
    %29 = vector.load %arg5[%c0_13, %c0_14] : memref<864x128xf32, #tpu.memory_space<vmem>>, vector<32x128xf32>
    tpu.vector_store %arg5[%c0_13, %c0_14], %27 {strides = array<i32>} : memref<864x128xf32, #tpu.memory_space<vmem>>, vector<32x128xf32>,
    %30 = vector.extract_strided_slice %26 {offsets = [0, 0], sizes = [16, 128], strides = [1, 1]} : vector<512x128xf32> to vector<16x128xf32>
    %c32 = arith.constant 32 : index
    %c0_15 = arith.constant 0 : index
    %31 = vector.load %arg5[%c32, %c0_15] : memref<864x128xf32, #tpu.memory_space<vmem>>, vector<16x128xf32>
    tpu.vector_store %arg5[%c32, %c0_15], %30 {strides = array<i32>} : memref<864x128xf32, #tpu.memory_space<vmem>>, vector<16x128xf32>,
    %c48 = arith.constant 48 : index
    %c0_16 = arith.constant 0 : index
    %32 = vector.load %arg5[%c48, %c0_16] : memref<864x128xf32, #tpu.memory_space<vmem>>, vector<8x128xf32>
    tpu.vector_store %arg5[%c48, %c0_16], %28 {strides = array<i32>} : memref<864x128xf32, #tpu.memory_space<vmem>>, vector<8x128xf32>,
    %33 = vector.extract_strided_slice %26 {offsets = [16, 0], sizes = [16, 128], strides = [1, 1]} : vector<512x128xf32> to vector<16x128xf32>
    %c56 = arith.constant 56 : index
    %c0_17 = arith.constant 0 : index
    %34 = vector.load %arg5[%c56, %c0_17] : memref<864x128xf32, #tpu.memory_space<vmem>>, vector<16x128xf32>
    tpu.vector_store %arg5[%c56, %c0_17], %33 {strides = array<i32>} : memref<864x128xf32, #tpu.memory_space<vmem>>, vector<16x128xf32>,
    %c72 = arith.constant 72 : index
    %c0_18 = arith.constant 0 : index
    %35 = vector.load %arg5[%c72, %c0_18] : memref<864x128xf32, #tpu.memory_space<vmem>>, vector<8x128xf32>
    tpu.vector_store %arg5[%c72, %c0_18], %28 {strides = array<i32>} : memref<864x128xf32, #tpu.memory_space<vmem>>, vector<8x128xf32>,
    %36 = vector.extract_strided_slice %26 {offsets = [32, 0], sizes = [16, 128], strides = [1, 1]} : vector<512x128xf32> to vector<16x128xf32>
    %c80 = arith.constant 80 : index
    %c0_19 = arith.constant 0 : index
    %37 = vector.load %arg5[%c80, %c0_19] : memref<864x128xf32, #tpu.memory_space<vmem>>, vector<16x128xf32>
    tpu.vector_store %arg5[%c80, %c0_19], %36 {strides = array<i32>} : memref<864x128xf32, #tpu.memory_space<vmem>>, vector<16x128xf32>,
    %c96 = arith.constant 96 : index
    %c0_20 = arith.constant 0 : index
    %38 = vector.load %arg5[%c96, %c0_20] : memref<864x128xf32, #tpu.memory_space<vmem>>, vector<8x128xf32>
    tpu.vector_store %arg5[%c96, %c0_20], %28 {strides = array<i32>} : memref<864x128xf32, #tpu.memory_space<vmem>>, vector<8x128xf32>,
    %39 = vector.extract_strided_slice %26 {offsets = [48, 0], sizes = [16, 128], strides = [1, 1]} : vector<512x128xf32> to vector<16x128xf32>
    %c104 = arith.constant 104 : index
    %c0_21 = arith.constant 0 : index
    %40 = vector.load %arg5[%c104, %c0_21] : memref<864x128xf32, #tpu.memory_space<vmem>>, vector<16x128xf32>
    tpu.vector_store %arg5[%c104, %c0_21], %39 {strides = array<i32>} : memref<864x128xf32, #tpu.memory_space<vmem>>, vector<16x128xf32>,
    %c120 = arith.constant 120 : index
    %c0_22 = arith.constant 0 : index
    %41 = vector.load %arg5[%c120, %c0_22] : memref<864x128xf32, #tpu.memory_space<vmem>>, vector<8x128xf32>
    tpu.vector_store %arg5[%c120, %c0_22], %28 {strides = array<i32>} : memref<864x128xf32, #tpu.memory_space<vmem>>, vector<8x128xf32>,
    %42 = vector.extract_strided_slice %26 {offsets = [64, 0], sizes = [16, 128], strides = [1, 1]} : vector<512x128xf32> to vector<16x128xf32>
    %c128 = arith.constant 128 : index
    %c0_23 = arith.constant 0 : index
    %43 = vector.load %arg5[%c128, %c0_23] : memref<864x128xf32, #tpu.memory_space<vmem>>, vector<16x128xf32>
    tpu.vector_store %arg5[%c128, %c0_23], %42 {strides = array<i32>} : memref<864x128xf32, #tpu.memory_space<vmem>>, vector<16x128xf32>,
    %c144 = arith.constant 144 : index
    %c0_24 = arith.constant 0 : index
    %44 = vector.load %arg5[%c144, %c0_24] : memref<864x128xf32, #tpu.memory_space<vmem>>, vector<8x128xf32>
    tpu.vector_store %arg5[%c144, %c0_24], %28 {strides = array<i32>} : memref<864x128xf32, #tpu.memory_space<vmem>>, vector<8x128xf32>,
    %45 = vector.extract_strided_slice %26 {offsets = [80, 0], sizes = [16, 128], strides = [1, 1]} : vector<512x128xf32> to vector<16x128xf32>
    %c152 = arith.constant 152 : index
    %c0_25 = arith.constant 0 : index
    %46 = vector.load %arg5[%c152, %c0_25] : memref<864x128xf32, #tpu.memory_space<vmem>>, vector<16x128xf32>
    tpu.vector_store %arg5[%c152, %c0_25], %45 {strides = array<i32>} : memref<864x128xf32, #tpu.memory_space<vmem>>, vector<16x128xf32>,
    %c168 = arith.constant 168 : index
    %c0_26 = arith.constant 0 : index
    %47 = vector.load %arg5[%c168, %c0_26] : memref<864x128xf32, #tpu.memory_space<vmem>>, vector<8x128xf32>
    tpu.vector_store %arg5[%c168, %c0_26], %28 {strides = array<i32>} : memref<864x128xf32, #tpu.memory_space<vmem>>, vector<8x128xf32>,
    %48 = vector.extract_strided_slice %26 {offsets = [96, 0], sizes = [16, 128], strides = [1, 1]} : vector<512x128xf32> to vector<16x128xf32>
    %c176 = arith.constant 176 : index
    %c0_27 = arith.constant 0 : index
    %49 = vector.load %arg5[%c176, %c0_27] : memref<864x128xf32, #tpu.memory_space<vmem>>, vector<16x128xf32>
    tpu.vector_store %arg5[%c176, %c0_27], %48 {strides = array<i32>} : memref<864x128xf32, #tpu.memory_space<vmem>>, vector<16x128xf32>,
    %c192 = arith.constant 192 : index
    %c0_28 = arith.constant 0 : index
    %50 = vector.load %arg5[%c192, %c0_28] : memref<864x128xf32, #tpu.memory_space<vmem>>, vector<8x128xf32>
    tpu.vector_store %arg5[%c192, %c0_28], %28 {strides = array<i32>} : memref<864x128xf32, #tpu.memory_space<vmem>>, vector<8x128xf32>,
    %51 = vector.extract_strided_slice %26 {offsets = [112, 0], sizes = [16, 128], strides = [1, 1]} : vector<512x128xf32> to vector<16x128xf32>
    %c200 = arith.constant 200 : index
    %c0_29 = arith.constant 0 : index
    %52 = vector.load %arg5[%c200, %c0_29] : memref<864x128xf32, #tpu.memory_space<vmem>>, vector<16x128xf32>
    tpu.vector_store %arg5[%c200, %c0_29], %51 {strides = array<i32>} : memref<864x128xf32, #tpu.memory_space<vmem>>, vector<16x128xf32>,
    %c216 = arith.constant 216 : index
    %c0_30 = arith.constant 0 : index
    %53 = vector.load %arg5[%c216, %c0_30] : memref<864x128xf32, #tpu.memory_space<vmem>>, vector<8x128xf32>
    tpu.vector_store %arg5[%c216, %c0_30], %28 {strides = array<i32>} : memref<864x128xf32, #tpu.memory_space<vmem>>, vector<8x128xf32>,
    %54 = vector.extract_strided_slice %26 {offsets = [128, 0], sizes = [16, 128], strides = [1, 1]} : vector<512x128xf32> to vector<16x128xf32>
    %c224 = arith.constant 224 : index
    %c0_31 = arith.constant 0 : index
    %55 = vector.load %arg5[%c224, %c0_31] : memref<864x128xf32, #tpu.memory_space<vmem>>, vector<16x128xf32>
    tpu.vector_store %arg5[%c224, %c0_31], %54 {strides = array<i32>} : memref<864x128xf32, #tpu.memory_space<vmem>>, vector<16x128xf32>,
    %c240 = arith.constant 240 : index
    %c0_32 = arith.constant 0 : index
    %56 = vector.load %arg5[%c240, %c0_32] : memref<864x128xf32, #tpu.memory_space<vmem>>, vector<8x128xf32>
    tpu.vector_store %arg5[%c240, %c0_32], %28 {strides = array<i32>} : memref<864x128xf32, #tpu.memory_space<vmem>>, vector<8x128xf32>,
    %57 = vector.extract_strided_slice %26 {offsets = [144, 0], sizes = [16, 128], strides = [1, 1]} : vector<512x128xf32> to vector<16x128xf32>
    %c248 = arith.constant 248 : index
    %c0_33 = arith.constant 0 : index
    %58 = vector.load %arg5[%c248, %c0_33] : memref<864x128xf32, #tpu.memory_space<vmem>>, vector<16x128xf32>
    tpu.vector_store %arg5[%c248, %c0_33], %57 {strides = array<i32>} : memref<864x128xf32, #tpu.memory_space<vmem>>, vector<16x128xf32>,
    %c264 = arith.constant 264 : index
    %c0_34 = arith.constant 0 : index
    %59 = vector.load %arg5[%c264, %c0_34] : memref<864x128xf32, #tpu.memory_space<vmem>>, vector<8x128xf32>
    tpu.vector_store %arg5[%c264, %c0_34], %28 {strides = array<i32>} : memref<864x128xf32, #tpu.memory_space<vmem>>, vector<8x128xf32>,
    %60 = vector.extract_strided_slice %26 {offsets = [160, 0], sizes = [16, 128], strides = [1, 1]} : vector<512x128xf32> to vector<16x128xf32>
    %c272 = arith.constant 272 : index
    %c0_35 = arith.constant 0 : index
    %61 = vector.load %arg5[%c272, %c0_35] : memref<864x128xf32, #tpu.memory_space<vmem>>, vector<16x128xf32>
    tpu.vector_store %arg5[%c272, %c0_35], %60 {strides = array<i32>} : memref<864x128xf32, #tpu.memory_space<vmem>>, vector<16x128xf32>,
    %c288 = arith.constant 288 : index
    %c0_36 = arith.constant 0 : index
    %62 = vector.load %arg5[%c288, %c0_36] : memref<864x128xf32, #tpu.memory_space<vmem>>, vector<8x128xf32>
    tpu.vector_store %arg5[%c288, %c0_36], %28 {strides = array<i32>} : memref<864x128xf32, #tpu.memory_space<vmem>>, vector<8x128xf32>,
    %63 = vector.extract_strided_slice %26 {offsets = [176, 0], sizes = [16, 128], strides = [1, 1]} : vector<512x128xf32> to vector<16x128xf32>
    %c296 = arith.constant 296 : index
    %c0_37 = arith.constant 0 : index
    %64 = vector.load %arg5[%c296, %c0_37] : memref<864x128xf32, #tpu.memory_space<vmem>>, vector<16x128xf32>
    tpu.vector_store %arg5[%c296, %c0_37], %63 {strides = array<i32>} : memref<864x128xf32, #tpu.memory_space<vmem>>, vector<16x128xf32>,
    %c312 = arith.constant 312 : index
    %c0_38 = arith.constant 0 : index
    %65 = vector.load %arg5[%c312, %c0_38] : memref<864x128xf32, #tpu.memory_space<vmem>>, vector<8x128xf32>
    tpu.vector_store %arg5[%c312, %c0_38], %28 {strides = array<i32>} : memref<864x128xf32, #tpu.memory_space<vmem>>, vector<8x128xf32>,
    %66 = vector.extract_strided_slice %26 {offsets = [192, 0], sizes = [16, 128], strides = [1, 1]} : vector<512x128xf32> to vector<16x128xf32>
    %c320 = arith.constant 320 : index
    %c0_39 = arith.constant 0 : index
    %67 = vector.load %arg5[%c320, %c0_39] : memref<864x128xf32, #tpu.memory_space<vmem>>, vector<16x128xf32>
    tpu.vector_store %arg5[%c320, %c0_39], %66 {strides = array<i32>} : memref<864x128xf32, #tpu.memory_space<vmem>>, vector<16x128xf32>,
    %c336 = arith.constant 336 : index
    %c0_40 = arith.constant 0 : index
    %68 = vector.load %arg5[%c336, %c0_40] : memref<864x128xf32, #tpu.memory_space<vmem>>, vector<8x128xf32>
    tpu.vector_store %arg5[%c336, %c0_40], %28 {strides = array<i32>} : memref<864x128xf32, #tpu.memory_space<vmem>>, vector<8x128xf32>,
    %69 = vector.extract_strided_slice %26 {offsets = [208, 0], sizes = [16, 128], strides = [1, 1]} : vector<512x128xf32> to vector<16x128xf32>
    %c344 = arith.constant 344 : index
    %c0_41 = arith.constant 0 : index
    %70 = vector.load %arg5[%c344, %c0_41] : memref<864x128xf32, #tpu.memory_space<vmem>>, vector<16x128xf32>
    tpu.vector_store %arg5[%c344, %c0_41], %69 {strides = array<i32>} : memref<864x128xf32, #tpu.memory_space<vmem>>, vector<16x128xf32>,
    %c360 = arith.constant 360 : index
    %c0_42 = arith.constant 0 : index
    %71 = vector.load %arg5[%c360, %c0_42] : memref<864x128xf32, #tpu.memory_space<vmem>>, vector<8x128xf32>
    tpu.vector_store %arg5[%c360, %c0_42], %28 {strides = array<i32>} : memref<864x128xf32, #tpu.memory_space<vmem>>, vector<8x128xf32>,
    %72 = vector.extract_strided_slice %26 {offsets = [224, 0], sizes = [16, 128], strides = [1, 1]} : vector<512x128xf32> to vector<16x128xf32>
    %c368 = arith.constant 368 : index
    %c0_43 = arith.constant 0 : index
    %73 = vector.load %arg5[%c368, %c0_43] : memref<864x128xf32, #tpu.memory_space<vmem>>, vector<16x128xf32>
    tpu.vector_store %arg5[%c368, %c0_43], %72 {strides = array<i32>} : memref<864x128xf32, #tpu.memory_space<vmem>>, vector<16x128xf32>,
    %c384 = arith.constant 384 : index
    %c0_44 = arith.constant 0 : index
    %74 = vector.load %arg5[%c384, %c0_44] : memref<864x128xf32, #tpu.memory_space<vmem>>, vector<8x128xf32>
    tpu.vector_store %arg5[%c384, %c0_44], %28 {strides = array<i32>} : memref<864x128xf32, #tpu.memory_space<vmem>>, vector<8x128xf32>,
    %75 = vector.extract_strided_slice %26 {offsets = [240, 0], sizes = [16, 128], strides = [1, 1]} : vector<512x128xf32> to vector<16x128xf32>
    %c392 = arith.constant 392 : index
    %c0_45 = arith.constant 0 : index
    %76 = vector.load %arg5[%c392, %c0_45] : memref<864x128xf32, #tpu.memory_space<vmem>>, vector<16x128xf32>
    tpu.vector_store %arg5[%c392, %c0_45], %75 {strides = array<i32>} : memref<864x128xf32, #tpu.memory_space<vmem>>, vector<16x128xf32>,
    %c408 = arith.constant 408 : index
    %c0_46 = arith.constant 0 : index
    %77 = vector.load %arg5[%c408, %c0_46] : memref<864x128xf32, #tpu.memory_space<vmem>>, vector<8x128xf32>
    tpu.vector_store %arg5[%c408, %c0_46], %28 {strides = array<i32>} : memref<864x128xf32, #tpu.memory_space<vmem>>, vector<8x128xf32>,
    %c416 = arith.constant 416 : index
    %c0_47 = arith.constant 0 : index
    %78 = vector.load %arg5[%c416, %c0_47] : memref<864x128xf32, #tpu.memory_space<vmem>>, vector<32x128xf32>
    tpu.vector_store %arg5[%c416, %c0_47], %27 {strides = array<i32>} : memref<864x128xf32, #tpu.memory_space<vmem>>, vector<32x128xf32>,
    %79 = vector.extract_strided_slice %26 {offsets = [256, 0], sizes = [16, 128], strides = [1, 1]} : vector<512x128xf32> to vector<16x128xf32>
    %c448 = arith.constant 448 : index
    %c0_48 = arith.constant 0 : index
    %80 = vector.load %arg5[%c448, %c0_48] : memref<864x128xf32, #tpu.memory_space<vmem>>, vector<16x128xf32>
    tpu.vector_store %arg5[%c448, %c0_48], %79 {strides = array<i32>} : memref<864x128xf32, #tpu.memory_space<vmem>>, vector<16x128xf32>,
    %c464 = arith.constant 464 : index
    %c0_49 = arith.constant 0 : index
    %81 = vector.load %arg5[%c464, %c0_49] : memref<864x128xf32, #tpu.memory_space<vmem>>, vector<8x128xf32>
    tpu.vector_store %arg5[%c464, %c0_49], %28 {strides = array<i32>} : memref<864x128xf32, #tpu.memory_space<vmem>>, vector<8x128xf32>,
    %82 = vector.extract_strided_slice %26 {offsets = [272, 0], sizes = [16, 128], strides = [1, 1]} : vector<512x128xf32> to vector<16x128xf32>
    %c472 = arith.constant 472 : index
    %c0_50 = arith.constant 0 : index
    %83 = vector.load %arg5[%c472, %c0_50] : memref<864x128xf32, #tpu.memory_space<vmem>>, vector<16x128xf32>
    tpu.vector_store %arg5[%c472, %c0_50], %82 {strides = array<i32>} : memref<864x128xf32, #tpu.memory_space<vmem>>, vector<16x128xf32>,
    %c488 = arith.constant 488 : index
    %c0_51 = arith.constant 0 : index
    %84 = vector.load %arg5[%c488, %c0_51] : memref<864x128xf32, #tpu.memory_space<vmem>>, vector<8x128xf32>
    tpu.vector_store %arg5[%c488, %c0_51], %28 {strides = array<i32>} : memref<864x128xf32, #tpu.memory_space<vmem>>, vector<8x128xf32>,
    %85 = vector.extract_strided_slice %26 {offsets = [288, 0], sizes = [16, 128], strides = [1, 1]} : vector<512x128xf32> to vector<16x128xf32>
    %c496 = arith.constant 496 : index
    %c0_52 = arith.constant 0 : index
    %86 = vector.load %arg5[%c496, %c0_52] : memref<864x128xf32, #tpu.memory_space<vmem>>, vector<16x128xf32>
    tpu.vector_store %arg5[%c496, %c0_52], %85 {strides = array<i32>} : memref<864x128xf32, #tpu.memory_space<vmem>>, vector<16x128xf32>,
    %c512 = arith.constant 512 : index
    %c0_53 = arith.constant 0 : index
    %87 = vector.load %arg5[%c512, %c0_53] : memref<864x128xf32, #tpu.memory_space<vmem>>, vector<8x128xf32>
    tpu.vector_store %arg5[%c512, %c0_53], %28 {strides = array<i32>} : memref<864x128xf32, #tpu.memory_space<vmem>>, vector<8x128xf32>,
    %88 = vector.extract_strided_slice %26 {offsets = [304, 0], sizes = [16, 128], strides = [1, 1]} : vector<512x128xf32> to vector<16x128xf32>
    %c520 = arith.constant 520 : index
    %c0_54 = arith.constant 0 : index
    %89 = vector.load %arg5[%c520, %c0_54] : memref<864x128xf32, #tpu.memory_space<vmem>>, vector<16x128xf32>
    tpu.vector_store %arg5[%c520, %c0_54], %88 {strides = array<i32>} : memref<864x128xf32, #tpu.memory_space<vmem>>, vector<16x128xf32>,
    %c536 = arith.constant 536 : index
    %c0_55 = arith.constant 0 : index
    %90 = vector.load %arg5[%c536, %c0_55] : memref<864x128xf32, #tpu.memory_space<vmem>>, vector<8x128xf32>
    tpu.vector_store %arg5[%c536, %c0_55], %28 {strides = array<i32>} : memref<864x128xf32, #tpu.memory_space<vmem>>, vector<8x128xf32>,
    %91 = vector.extract_strided_slice %26 {offsets = [320, 0], sizes = [16, 128], strides = [1, 1]} : vector<512x128xf32> to vector<16x128xf32>
    %c544 = arith.constant 544 : index
    %c0_56 = arith.constant 0 : index
    %92 = vector.load %arg5[%c544, %c0_56] : memref<864x128xf32, #tpu.memory_space<vmem>>, vector<16x128xf32>
    tpu.vector_store %arg5[%c544, %c0_56], %91 {strides = array<i32>} : memref<864x128xf32, #tpu.memory_space<vmem>>, vector<16x128xf32>,
    %c560 = arith.constant 560 : index
    %c0_57 = arith.constant 0 : index
    %93 = vector.load %arg5[%c560, %c0_57] : memref<864x128xf32, #tpu.memory_space<vmem>>, vector<8x128xf32>
    tpu.vector_store %arg5[%c560, %c0_57], %28 {strides = array<i32>} : memref<864x128xf32, #tpu.memory_space<vmem>>, vector<8x128xf32>,
    %94 = vector.extract_strided_slice %26 {offsets = [336, 0], sizes = [16, 128], strides = [1, 1]} : vector<512x128xf32> to vector<16x128xf32>
    %c568 = arith.constant 568 : index
    %c0_58 = arith.constant 0 : index
    %95 = vector.load %arg5[%c568, %c0_58] : memref<864x128xf32, #tpu.memory_space<vmem>>, vector<16x128xf32>
    tpu.vector_store %arg5[%c568, %c0_58], %94 {strides = array<i32>} : memref<864x128xf32, #tpu.memory_space<vmem>>, vector<16x128xf32>,
    %c584 = arith.constant 584 : index
    %c0_59 = arith.constant 0 : index
    %96 = vector.load %arg5[%c584, %c0_59] : memref<864x128xf32, #tpu.memory_space<vmem>>, vector<8x128xf32>
    tpu.vector_store %arg5[%c584, %c0_59], %28 {strides = array<i32>} : memref<864x128xf32, #tpu.memory_space<vmem>>, vector<8x128xf32>,
    %97 = vector.extract_strided_slice %26 {offsets = [352, 0], sizes = [16, 128], strides = [1, 1]} : vector<512x128xf32> to vector<16x128xf32>
    %c592 = arith.constant 592 : index
    %c0_60 = arith.constant 0 : index
    %98 = vector.load %arg5[%c592, %c0_60] : memref<864x128xf32, #tpu.memory_space<vmem>>, vector<16x128xf32>
    tpu.vector_store %arg5[%c592, %c0_60], %97 {strides = array<i32>} : memref<864x128xf32, #tpu.memory_space<vmem>>, vector<16x128xf32>,
    %c608 = arith.constant 608 : index
    %c0_61 = arith.constant 0 : index
    %99 = vector.load %arg5[%c608, %c0_61] : memref<864x128xf32, #tpu.memory_space<vmem>>, vector<8x128xf32>
    tpu.vector_store %arg5[%c608, %c0_61], %28 {strides = array<i32>} : memref<864x128xf32, #tpu.memory_space<vmem>>, vector<8x128xf32>,
    %100 = vector.extract_strided_slice %26 {offsets = [368, 0], sizes = [16, 128], strides = [1, 1]} : vector<512x128xf32> to vector<16x128xf32>
    %c616 = arith.constant 616 : index
    %c0_62 = arith.constant 0 : index
    %101 = vector.load %arg5[%c616, %c0_62] : memref<864x128xf32, #tpu.memory_space<vmem>>, vector<16x128xf32>
    tpu.vector_store %arg5[%c616, %c0_62], %100 {strides = array<i32>} : memref<864x128xf32, #tpu.memory_space<vmem>>, vector<16x128xf32>,
    %c632 = arith.constant 632 : index
    %c0_63 = arith.constant 0 : index
    %102 = vector.load %arg5[%c632, %c0_63] : memref<864x128xf32, #tpu.memory_space<vmem>>, vector<8x128xf32>
    tpu.vector_store %arg5[%c632, %c0_63], %28 {strides = array<i32>} : memref<864x128xf32, #tpu.memory_space<vmem>>, vector<8x128xf32>,
    %103 = vector.extract_strided_slice %26 {offsets = [384, 0], sizes = [16, 128], strides = [1, 1]} : vector<512x128xf32> to vector<16x128xf32>
    %c640 = arith.constant 640 : index
    %c0_64 = arith.constant 0 : index
    %104 = vector.load %arg5[%c640, %c0_64] : memref<864x128xf32, #tpu.memory_space<vmem>>, vector<16x128xf32>
    tpu.vector_store %arg5[%c640, %c0_64], %103 {strides = array<i32>} : memref<864x128xf32, #tpu.memory_space<vmem>>, vector<16x128xf32>,
    %c656 = arith.constant 656 : index
    %c0_65 = arith.constant 0 : index
    %105 = vector.load %arg5[%c656, %c0_65] : memref<864x128xf32, #tpu.memory_space<vmem>>, vector<8x128xf32>
    tpu.vector_store %arg5[%c656, %c0_65], %28 {strides = array<i32>} : memref<864x128xf32, #tpu.memory_space<vmem>>, vector<8x128xf32>,
    %106 = vector.extract_strided_slice %26 {offsets = [400, 0], sizes = [16, 128], strides = [1, 1]} : vector<512x128xf32> to vector<16x128xf32>
    %c664 = arith.constant 664 : index
    %c0_66 = arith.constant 0 : index
    %107 = vector.load %arg5[%c664, %c0_66] : memref<864x128xf32, #tpu.memory_space<vmem>>, vector<16x128xf32>
    tpu.vector_store %arg5[%c664, %c0_66], %106 {strides = array<i32>} : memref<864x128xf32, #tpu.memory_space<vmem>>, vector<16x128xf32>,
    %c680 = arith.constant 680 : index
    %c0_67 = arith.constant 0 : index
    %108 = vector.load %arg5[%c680, %c0_67] : memref<864x128xf32, #tpu.memory_space<vmem>>, vector<8x128xf32>
    tpu.vector_store %arg5[%c680, %c0_67], %28 {strides = array<i32>} : memref<864x128xf32, #tpu.memory_space<vmem>>, vector<8x128xf32>,
    %109 = vector.extract_strided_slice %26 {offsets = [416, 0], sizes = [16, 128], strides = [1, 1]} : vector<512x128xf32> to vector<16x128xf32>
    %c688 = arith.constant 688 : index
    %c0_68 = arith.constant 0 : index
    %110 = vector.load %arg5[%c688, %c0_68] : memref<864x128xf32, #tpu.memory_space<vmem>>, vector<16x128xf32>
    tpu.vector_store %arg5[%c688, %c0_68], %109 {strides = array<i32>} : memref<864x128xf32, #tpu.memory_space<vmem>>, vector<16x128xf32>,
    %c704 = arith.constant 704 : index
    %c0_69 = arith.constant 0 : index
    %111 = vector.load %arg5[%c704, %c0_69] : memref<864x128xf32, #tpu.memory_space<vmem>>, vector<8x128xf32>
    tpu.vector_store %arg5[%c704, %c0_69], %28 {strides = array<i32>} : memref<864x128xf32, #tpu.memory_space<vmem>>, vector<8x128xf32>,
    %112 = vector.extract_strided_slice %26 {offsets = [432, 0], sizes = [16, 128], strides = [1, 1]} : vector<512x128xf32> to vector<16x128xf32>
    %c712 = arith.constant 712 : index
    %c0_70 = arith.constant 0 : index
    %113 = vector.load %arg5[%c712, %c0_70] : memref<864x128xf32, #tpu.memory_space<vmem>>, vector<16x128xf32>
    tpu.vector_store %arg5[%c712, %c0_70], %112 {strides = array<i32>} : memref<864x128xf32, #tpu.memory_space<vmem>>, vector<16x128xf32>,
    %c728 = arith.constant 728 : index
    %c0_71 = arith.constant 0 : index
    %114 = vector.load %arg5[%c728, %c0_71] : memref<864x128xf32, #tpu.memory_space<vmem>>, vector<8x128xf32>
    tpu.vector_store %arg5[%c728, %c0_71], %28 {strides = array<i32>} : memref<864x128xf32, #tpu.memory_space<vmem>>, vector<8x128xf32>,
    %115 = vector.extract_strided_slice %26 {offsets = [448, 0], sizes = [16, 128], strides = [1, 1]} : vector<512x128xf32> to vector<16x128xf32>
    %c736 = arith.constant 736 : index
    %c0_72 = arith.constant 0 : index
    %116 = vector.load %arg5[%c736, %c0_72] : memref<864x128xf32, #tpu.memory_space<vmem>>, vector<16x128xf32>
    tpu.vector_store %arg5[%c736, %c0_72], %115 {strides = array<i32>} : memref<864x128xf32, #tpu.memory_space<vmem>>, vector<16x128xf32>,
    %c752 = arith.constant 752 : index
    %c0_73 = arith.constant 0 : index
    %117 = vector.load %arg5[%c752, %c0_73] : memref<864x128xf32, #tpu.memory_space<vmem>>, vector<8x128xf32>
    tpu.vector_store %arg5[%c752, %c0_73], %28 {strides = array<i32>} : memref<864x128xf32, #tpu.memory_space<vmem>>, vector<8x128xf32>,
    %118 = vector.extract_strided_slice %26 {offsets = [464, 0], sizes = [16, 128], strides = [1, 1]} : vector<512x128xf32> to vector<16x128xf32>
    %c760 = arith.constant 760 : index
    %c0_74 = arith.constant 0 : index
    %119 = vector.load %arg5[%c760, %c0_74] : memref<864x128xf32, #tpu.memory_space<vmem>>, vector<16x128xf32>
    tpu.vector_store %arg5[%c760, %c0_74], %118 {strides = array<i32>} : memref<864x128xf32, #tpu.memory_space<vmem>>, vector<16x128xf32>,
    %c776 = arith.constant 776 : index
    %c0_75 = arith.constant 0 : index
    %120 = vector.load %arg5[%c776, %c0_75] : memref<864x128xf32, #tpu.memory_space<vmem>>, vector<8x128xf32>
    tpu.vector_store %arg5[%c776, %c0_75], %28 {strides = array<i32>} : memref<864x128xf32, #tpu.memory_space<vmem>>, vector<8x128xf32>,
    %121 = vector.extract_strided_slice %26 {offsets = [480, 0], sizes = [16, 128], strides = [1, 1]} : vector<512x128xf32> to vector<16x128xf32>
    %c784 = arith.constant 784 : index
    %c0_76 = arith.constant 0 : index
    %122 = vector.load %arg5[%c784, %c0_76] : memref<864x128xf32, #tpu.memory_space<vmem>>, vector<16x128xf32>
    tpu.vector_store %arg5[%c784, %c0_76], %121 {strides = array<i32>} : memref<864x128xf32, #tpu.memory_space<vmem>>, vector<16x128xf32>,
    %c800 = arith.constant 800 : index
    %c0_77 = arith.constant 0 : index
    %123 = vector.load %arg5[%c800, %c0_77] : memref<864x128xf32, #tpu.memory_space<vmem>>, vector<8x128xf32>
    tpu.vector_store %arg5[%c800, %c0_77], %28 {strides = array<i32>} : memref<864x128xf32, #tpu.memory_space<vmem>>, vector<8x128xf32>,
    %124 = vector.extract_strided_slice %26 {offsets = [496, 0], sizes = [16, 128], strides = [1, 1]} : vector<512x128xf32> to vector<16x128xf32>
    %c808 = arith.constant 808 : index
    %c0_78 = arith.constant 0 : index
    %125 = vector.load %arg5[%c808, %c0_78] : memref<864x128xf32, #tpu.memory_space<vmem>>, vector<16x128xf32>
    tpu.vector_store %arg5[%c808, %c0_78], %124 {strides = array<i32>} : memref<864x128xf32, #tpu.memory_space<vmem>>, vector<16x128xf32>,
    %c824 = arith.constant 824 : index
    %c0_79 = arith.constant 0 : index
    %126 = vector.load %arg5[%c824, %c0_79] : memref<864x128xf32, #tpu.memory_space<vmem>>, vector<8x128xf32>
    tpu.vector_store %arg5[%c824, %c0_79], %28 {strides = array<i32>} : memref<864x128xf32, #tpu.memory_space<vmem>>, vector<8x128xf32>,
    %c832 = arith.constant 832 : index
    %c0_80 = arith.constant 0 : index
    %127 = vector.load %arg5[%c832, %c0_80] : memref<864x128xf32, #tpu.memory_space<vmem>>, vector<32x128xf32>
    tpu.vector_store %arg5[%c832, %c0_80], %27 {strides = array<i32>} : memref<864x128xf32, #tpu.memory_space<vmem>>, vector<32x128xf32>,
    %c0_81 = arith.constant 0 : index
    %c0_82 = arith.constant 0 : index
    %128 = vector.load %arg2[%c0_81, %c0_82] : memref<9x128xf32, #tpu.memory_space<vmem>>, vector<9x128xf32>
    %129 = vector.extract_strided_slice %128 {offsets = [0, 0], sizes = [1, 128], strides = [1, 1]} : vector<9x128xf32> to vector<1x128xf32>
    %130 = vector.extract_strided_slice %128 {offsets = [1, 0], sizes = [1, 128], strides = [1, 1]} : vector<9x128xf32> to vector<1x128xf32>
    %131 = vector.extract_strided_slice %128 {offsets = [2, 0], sizes = [1, 128], strides = [1, 1]} : vector<9x128xf32> to vector<1x128xf32>
    %132 = vector.extract_strided_slice %128 {offsets = [3, 0], sizes = [1, 128], strides = [1, 1]} : vector<9x128xf32> to vector<1x128xf32>
    %133 = vector.extract_strided_slice %128 {offsets = [4, 0], sizes = [1, 128], strides = [1, 1]} : vector<9x128xf32> to vector<1x128xf32>
    %134 = vector.extract_strided_slice %128 {offsets = [5, 0], sizes = [1, 128], strides = [1, 1]} : vector<9x128xf32> to vector<1x128xf32>
    %135 = vector.extract_strided_slice %128 {offsets = [6, 0], sizes = [1, 128], strides = [1, 1]} : vector<9x128xf32> to vector<1x128xf32>
    %136 = vector.extract_strided_slice %128 {offsets = [7, 0], sizes = [1, 128], strides = [1, 1]} : vector<9x128xf32> to vector<1x128xf32>
    %137 = vector.extract_strided_slice %128 {offsets = [8, 0], sizes = [1, 128], strides = [1, 1]} : vector<9x128xf32> to vector<1x128xf32>
    %c32_83 = arith.constant 32 : index
    %c0_84 = arith.constant 0 : index
    %138 = vector.load %arg5[%c32_83, %c0_84] : memref<864x128xf32, #tpu.memory_space<vmem>>, vector<800x128xf32>
    %139 = vector.broadcast %133 : vector<1x128xf32> to vector<800x128xf32>
    %140 = arith.mulf %138, %139 : vector<800x128xf32>
    %c7 = arith.constant 7 : index
    %c0_85 = arith.constant 0 : index
    %141 = vector.load %arg5[%c7, %c0_85] : memref<864x128xf32, #tpu.memory_space<vmem>>, vector<800x128xf32>
    %142 = vector.broadcast %129 : vector<1x128xf32> to vector<800x128xf32>
    %143 = arith.mulf %141, %142 : vector<800x128xf32>
    %144 = arith.addf %140, %143 : vector<800x128xf32>
    %c8 = arith.constant 8 : index
    %c0_86 = arith.constant 0 : index
    %145 = vector.load %arg5[%c8, %c0_86] : memref<864x128xf32, #tpu.memory_space<vmem>>, vector<800x128xf32>
    %146 = vector.broadcast %130 : vector<1x128xf32> to vector<800x128xf32>
    %147 = arith.mulf %145, %146 : vector<800x128xf32>
    %148 = arith.addf %144, %147 : vector<800x128xf32>
    %c9 = arith.constant 9 : index
    %c0_87 = arith.constant 0 : index
    %149 = vector.load %arg5[%c9, %c0_87] : memref<864x128xf32, #tpu.memory_space<vmem>>, vector<800x128xf32>
    %150 = vector.broadcast %131 : vector<1x128xf32> to vector<800x128xf32>
    %151 = arith.mulf %149, %150 : vector<800x128xf32>
    %152 = arith.addf %148, %151 : vector<800x128xf32>
    %c31 = arith.constant 31 : index
    %c0_88 = arith.constant 0 : index
    %153 = vector.load %arg5[%c31, %c0_88] : memref<864x128xf32, #tpu.memory_space<vmem>>, vector<800x128xf32>
    %154 = vector.broadcast %132 : vector<1x128xf32> to vector<800x128xf32>
    %155 = arith.mulf %153, %154 : vector<800x128xf32>
    %156 = arith.addf %152, %155 : vector<800x128xf32>
    %c33 = arith.constant 33 : index
    %c0_89 = arith.constant 0 : index
    %157 = vector.load %arg5[%c33, %c0_89] : memref<864x128xf32, #tpu.memory_space<vmem>>, vector<800x128xf32>
    %158 = vector.broadcast %134 : vector<1x128xf32> to vector<800x128xf32>
    %159 = arith.mulf %157, %158 : vector<800x128xf32>
    %160 = arith.addf %156, %159 : vector<800x128xf32>
    %c55 = arith.constant 55 : index
    %c0_90 = arith.constant 0 : index
    %161 = vector.load %arg5[%c55, %c0_90] : memref<864x128xf32, #tpu.memory_space<vmem>>, vector<800x128xf32>
    %162 = vector.broadcast %135 : vector<1x128xf32> to vector<800x128xf32>
    %163 = arith.mulf %161, %162 : vector<800x128xf32>
    %164 = arith.addf %160, %163 : vector<800x128xf32>
    %c56_91 = arith.constant 56 : index
    %c0_92 = arith.constant 0 : index
    %165 = vector.load %arg5[%c56_91, %c0_92] : memref<864x128xf32, #tpu.memory_space<vmem>>, vector<800x128xf32>
    %166 = vector.broadcast %136 : vector<1x128xf32> to vector<800x128xf32>
    %167 = arith.mulf %165, %166 : vector<800x128xf32>
    %168 = arith.addf %164, %167 : vector<800x128xf32>
    %c57 = arith.constant 57 : index
    %c0_93 = arith.constant 0 : index
    %169 = vector.load %arg5[%c57, %c0_93] : memref<864x128xf32, #tpu.memory_space<vmem>>, vector<800x128xf32>
    %170 = vector.broadcast %137 : vector<1x128xf32> to vector<800x128xf32>
    %171 = arith.mulf %169, %170 : vector<800x128xf32>
    %172 = arith.addf %168, %171 : vector<800x128xf32>
    %173 = vector.extract_strided_slice %172 {offsets = [0, 0], sizes = [16, 128], strides = [1, 1]} : vector<800x128xf32> to vector<16x128xf32>
    %174 = vector.extract_strided_slice %172 {offsets = [24, 0], sizes = [16, 128], strides = [1, 1]} : vector<800x128xf32> to vector<16x128xf32>
    %175 = vector.extract_strided_slice %172 {offsets = [48, 0], sizes = [16, 128], strides = [1, 1]} : vector<800x128xf32> to vector<16x128xf32>
    %176 = vector.extract_strided_slice %172 {offsets = [72, 0], sizes = [16, 128], strides = [1, 1]} : vector<800x128xf32> to vector<16x128xf32>
    %177 = vector.extract_strided_slice %172 {offsets = [96, 0], sizes = [16, 128], strides = [1, 1]} : vector<800x128xf32> to vector<16x128xf32>
    %178 = vector.extract_strided_slice %172 {offsets = [120, 0], sizes = [16, 128], strides = [1, 1]} : vector<800x128xf32> to vector<16x128xf32>
    %179 = vector.extract_strided_slice %172 {offsets = [144, 0], sizes = [16, 128], strides = [1, 1]} : vector<800x128xf32> to vector<16x128xf32>
    %180 = vector.extract_strided_slice %172 {offsets = [168, 0], sizes = [16, 128], strides = [1, 1]} : vector<800x128xf32> to vector<16x128xf32>
    %181 = vector.extract_strided_slice %172 {offsets = [192, 0], sizes = [16, 128], strides = [1, 1]} : vector<800x128xf32> to vector<16x128xf32>
    %182 = vector.extract_strided_slice %172 {offsets = [216, 0], sizes = [16, 128], strides = [1, 1]} : vector<800x128xf32> to vector<16x128xf32>
    %183 = vector.extract_strided_slice %172 {offsets = [240, 0], sizes = [16, 128], strides = [1, 1]} : vector<800x128xf32> to vector<16x128xf32>
    %184 = vector.extract_strided_slice %172 {offsets = [264, 0], sizes = [16, 128], strides = [1, 1]} : vector<800x128xf32> to vector<16x128xf32>
    %185 = vector.extract_strided_slice %172 {offsets = [288, 0], sizes = [16, 128], strides = [1, 1]} : vector<800x128xf32> to vector<16x128xf32>
    %186 = vector.extract_strided_slice %172 {offsets = [312, 0], sizes = [16, 128], strides = [1, 1]} : vector<800x128xf32> to vector<16x128xf32>
    %187 = vector.extract_strided_slice %172 {offsets = [336, 0], sizes = [16, 128], strides = [1, 1]} : vector<800x128xf32> to vector<16x128xf32>
    %188 = vector.extract_strided_slice %172 {offsets = [360, 0], sizes = [16, 128], strides = [1, 1]} : vector<800x128xf32> to vector<16x128xf32>
    %189 = vector.extract_strided_slice %172 {offsets = [416, 0], sizes = [16, 128], strides = [1, 1]} : vector<800x128xf32> to vector<16x128xf32>
    %190 = vector.extract_strided_slice %172 {offsets = [440, 0], sizes = [16, 128], strides = [1, 1]} : vector<800x128xf32> to vector<16x128xf32>
    %191 = vector.extract_strided_slice %172 {offsets = [464, 0], sizes = [16, 128], strides = [1, 1]} : vector<800x128xf32> to vector<16x128xf32>
    %192 = vector.extract_strided_slice %172 {offsets = [488, 0], sizes = [16, 128], strides = [1, 1]} : vector<800x128xf32> to vector<16x128xf32>
    %193 = vector.extract_strided_slice %172 {offsets = [512, 0], sizes = [16, 128], strides = [1, 1]} : vector<800x128xf32> to vector<16x128xf32>
    %194 = vector.extract_strided_slice %172 {offsets = [536, 0], sizes = [16, 128], strides = [1, 1]} : vector<800x128xf32> to vector<16x128xf32>
    %195 = vector.extract_strided_slice %172 {offsets = [560, 0], sizes = [16, 128], strides = [1, 1]} : vector<800x128xf32> to vector<16x128xf32>
    %196 = vector.extract_strided_slice %172 {offsets = [584, 0], sizes = [16, 128], strides = [1, 1]} : vector<800x128xf32> to vector<16x128xf32>
    %197 = vector.extract_strided_slice %172 {offsets = [608, 0], sizes = [16, 128], strides = [1, 1]} : vector<800x128xf32> to vector<16x128xf32>
    %198 = vector.extract_strided_slice %172 {offsets = [632, 0], sizes = [16, 128], strides = [1, 1]} : vector<800x128xf32> to vector<16x128xf32>
    %199 = vector.extract_strided_slice %172 {offsets = [656, 0], sizes = [16, 128], strides = [1, 1]} : vector<800x128xf32> to vector<16x128xf32>
    %200 = vector.extract_strided_slice %172 {offsets = [680, 0], sizes = [16, 128], strides = [1, 1]} : vector<800x128xf32> to vector<16x128xf32>
    %201 = vector.extract_strided_slice %172 {offsets = [704, 0], sizes = [16, 128], strides = [1, 1]} : vector<800x128xf32> to vector<16x128xf32>
    %202 = vector.extract_strided_slice %172 {offsets = [728, 0], sizes = [16, 128], strides = [1, 1]} : vector<800x128xf32> to vector<16x128xf32>
    %203 = vector.extract_strided_slice %172 {offsets = [752, 0], sizes = [16, 128], strides = [1, 1]} : vector<800x128xf32> to vector<16x128xf32>
    %204 = vector.extract_strided_slice %172 {offsets = [776, 0], sizes = [16, 128], strides = [1, 1]} : vector<800x128xf32> to vector<16x128xf32>
    %205 = tpu.concatenate %173, %174, %175, %176, %177, %178, %179, %180, %181, %182, %183, %184, %185, %186, %187, %188 in 0 : vector<16x128xf32>, vector<16x128xf32>, vector<16x128xf32>, vector<16x128xf32>, vector<16x128xf32>, vector<16x128xf32>, vector<16x128xf32>, vector<16x128xf32>, vector<16x128xf32>, vector<16x128xf32>, vector<16x128xf32>, vector<16x128xf32>, vector<16x128xf32>, vector<16x128xf32>, vector<16x128xf32>, vector<16x128xf32> -> vector<256x128xf32>
    %206 = tpu.concatenate %189, %190, %191, %192, %193, %194, %195, %196, %197, %198, %199, %200, %201, %202, %203, %204 in 0 : vector<16x128xf32>, vector<16x128xf32>, vector<16x128xf32>, vector<16x128xf32>, vector<16x128xf32>, vector<16x128xf32>, vector<16x128xf32>, vector<16x128xf32>, vector<16x128xf32>, vector<16x128xf32>, vector<16x128xf32>, vector<16x128xf32>, vector<16x128xf32>, vector<16x128xf32>, vector<16x128xf32>, vector<16x128xf32> -> vector<256x128xf32>
    %207 = tpu.concatenate %205, %206 in 0 : vector<256x128xf32>, vector<256x128xf32> -> vector<512x128xf32>
    %cst_94 = arith.constant dense<0.000000e+00> : vector<128xf32>
    %208 = vector.multi_reduction <add>, %207, %cst_94 [0] : vector<512x128xf32> to vector<128xf32>
    %209 = vector.shape_cast %208 : vector<128xf32> to vector<1x128xf32>
    %cst_95 = arith.constant 0.001953125 : f32
    %210 = vector.broadcast %cst_95 : f32 to vector<1x128xf32>
    %211 = arith.mulf %209, %210 : vector<1x128xf32>
    %212 = arith.mulf %207, %207 : vector<512x128xf32>
    %cst_96 = arith.constant dense<0.000000e+00> : vector<128xf32>
    %213 = vector.multi_reduction <add>, %212, %cst_96 [0] : vector<512x128xf32> to vector<128xf32>
    %214 = vector.shape_cast %213 : vector<128xf32> to vector<1x128xf32>
    %cst_97 = arith.constant 0.001953125 : f32
    %215 = vector.broadcast %cst_97 : f32 to vector<1x128xf32>
    %216 = arith.mulf %214, %215 : vector<1x128xf32>
    %217 = arith.mulf %211, %211 : vector<1x128xf32>
    %218 = arith.subf %216, %217 : vector<1x128xf32>
    %cst_98 = arith.constant 0.000000e+00 : f32
    %219 = vector.broadcast %cst_98 : f32 to vector<1x128xf32>
    %220 = arith.maximumf %218, %219 : vector<1x128xf32>
    %221 = vector.broadcast %211 : vector<1x128xf32> to vector<512x128xf32>
    %222 = arith.subf %207, %221 : vector<512x128xf32>
    %cst_99 = arith.constant 9.99999974E-6 : f32
    %223 = vector.broadcast %cst_99 : f32 to vector<1x128xf32>
    %224 = arith.addf %220, %223 : vector<1x128xf32>
    %225 = math.rsqrt %224 : vector<1x128xf32>
    %226 = vector.broadcast %225 : vector<1x128xf32> to vector<512x128xf32>
    %227 = arith.mulf %222, %226 : vector<512x128xf32>
    %cst_100 = arith.constant 0.000000e+00 : f32
    %cst_101 = arith.constant 6.000000e+00 : f32
    %228 = vector.broadcast %cst_100 : f32 to vector<512x128xf32>
    %229 = arith.maximumf %228, %227 : vector<512x128xf32>
    %230 = vector.broadcast %cst_101 : f32 to vector<512x128xf32>
    %231 = arith.minimumf %230, %229 : vector<512x128xf32>
    %c0_102 = arith.constant 0 : index
    %c0_103 = arith.constant 0 : index
    %232 = vector.load %arg3[%c0_102, %c0_103] : memref<128x128xf32, #tpu.memory_space<vmem>>, vector<128x128xf32>
    %cst_104 = arith.constant dense<0.000000e+00> : vector<512x128xf32>
    %233 = tpu.matmul %231, %232, %cst_104 {dimension_numbers = #tpu.dot_dimension_numbers<[1], [0], [0], [1], [0, 0, 1, 1], [], []>} : vector<512x128xf32>, vector<128x128xf32>, vector<512x128xf32> -> vector<512x128xf32>
    %cst_105 = arith.constant dense<0.000000e+00> : vector<128xf32>
    %234 = vector.multi_reduction <add>, %233, %cst_105 [0] : vector<512x128xf32> to vector<128xf32>
    %235 = vector.shape_cast %234 : vector<128xf32> to vector<1x128xf32>
    %cst_106 = arith.constant 0.001953125 : f32
    %236 = vector.broadcast %cst_106 : f32 to vector<1x128xf32>
    %237 = arith.mulf %235, %236 : vector<1x128xf32>
    %238 = arith.mulf %233, %233 : vector<512x128xf32>
    %cst_107 = arith.constant dense<0.000000e+00> : vector<128xf32>
    %239 = vector.multi_reduction <add>, %238, %cst_107 [0] : vector<512x128xf32> to vector<128xf32>
    %240 = vector.shape_cast %239 : vector<128xf32> to vector<1x128xf32>
    %cst_108 = arith.constant 0.001953125 : f32
    %241 = vector.broadcast %cst_108 : f32 to vector<1x128xf32>
    %242 = arith.mulf %240, %241 : vector<1x128xf32>
    %243 = arith.mulf %237, %237 : vector<1x128xf32>
    %244 = arith.subf %242, %243 : vector<1x128xf32>
    %cst_109 = arith.constant 0.000000e+00 : f32
    %245 = vector.broadcast %cst_109 : f32 to vector<1x128xf32>
    %246 = arith.maximumf %244, %245 : vector<1x128xf32>
    %247 = vector.broadcast %237 : vector<1x128xf32> to vector<512x128xf32>
    %248 = arith.subf %233, %247 : vector<512x128xf32>
    %cst_110 = arith.constant 9.99999974E-6 : f32
    %249 = vector.broadcast %cst_110 : f32 to vector<1x128xf32>
    %250 = arith.addf %246, %249 : vector<1x128xf32>
    %251 = math.rsqrt %250 : vector<1x128xf32>
    %252 = vector.broadcast %251 : vector<1x128xf32> to vector<512x128xf32>
    %253 = arith.mulf %248, %252 : vector<512x128xf32>
    %c0_111 = arith.constant 0 : index
    %c0_112 = arith.constant 0 : index
    %254 = vector.load %arg0[%c0_111, %c0_112] : memref<512x128xf32, #tpu.memory_space<vmem>>, vector<512x128xf32>
    %255 = arith.addf %253, %254 : vector<512x128xf32>
    %c0_113 = arith.constant 0 : index
    %c0_114 = arith.constant 0 : index
    %256 = vector.load %arg4[%c0_113, %c0_114] : memref<512x128xf32, #tpu.memory_space<vmem>>, vector<512x128xf32>
    tpu.vector_store %arg4[%c0_113, %c0_114], %255 {strides = array<i32>} : memref<512x128xf32, #tpu.memory_space<vmem>>, vector<512x128xf32>,
    return
  }
}

</mosaic_0001>

<llo_original>
// kernel: tpu_custom_call.1
$region0: #{tpu_custom_call.1}
  #allocation0 [shape = 'u32[]', space=smem, size = 0x4, offset = 0x4, fixed_abs, tag = 'smem constant byte address 0x4 - core index']
  #allocation1 [shape = 'u32[72,128]{1,0:T(1,128)}', space=vmem, size = 0x9000, scoped, tag = 'internal scratch']
  #allocation2 [shape = 'f32[864,128]{1,0:T(8,128)}', space=vmem, size = 0x6c000, scoped, tag = 'scratch operand']
  %s0 = inlined_call_operand.hbm [shape: f32[512,128], index: 0, kind: input, shape index: {}]
  %s1 = inlined_call_operand.hbm [shape: f32[128,128], index: 1, kind: input, shape index: {}]
  %s2 = inlined_call_operand.hbm [shape: f32[9,128], index: 2, kind: input, shape index: {}]
  %s3 = inlined_call_operand.hbm [shape: f32[128,128], index: 3, kind: input, shape index: {}]
  %s4 = inlined_call_operand.hbm [shape: f32[512,128], index: 4, kind: output, shape index: {}]
  %s5 = sld [smem:[#allocation0]]
  $region42: #{tpu_custom_call.1} parent=0
    _
  %s7 = ssub.s32 1, %s5
  %s8 = scalar_select 0, %s7, %s5
  $region1: #{tpu_custom_call.1} parent=0
    #allocation3 [shape = 'u8[262144]{0}', space=vmem, size = 0x40000, scoped, tag = 'input window, operand 0, single buffered']
    #allocation4 [shape = 's32[1]{0}', space=sflag, size = 0x4, scoped, tag = 'scoped memory for tpu_custom_call.1']
    #allocation5 [shape = 's32[1]{0}', space=sflag, size = 0x4, scoped, tag = 'scoped memory for tpu_custom_call.1']
    #allocation6 [shape = 'u8[65536]{0}', space=vmem, size = 0x10000, scoped, tag = 'input window, operand 1, single buffered']
    #allocation7 [shape = 's32[1]{0}', space=sflag, size = 0x4, scoped, tag = 'scoped memory for tpu_custom_call.1']
    #allocation8 [shape = 'u8[8192]{0}', space=vmem, size = 0x2000, scoped, tag = 'input window, operand 2, single buffered']
    #allocation9 [shape = 'u8[65536]{0}', space=vmem, size = 0x10000, scoped, tag = 'input window, operand 3, single buffered']
    #allocation10 [shape = 's32[1]{0}', space=sflag, size = 0x4, scoped, tag = 'scoped memory for tpu_custom_call.1']
    #allocation11 [shape = 'u8[262144]{0}', space=vmem, size = 0x40000, scoped, tag = 'output window, operand 0, single buffered']
    %9 = vsyncpa [#allocation4], 0
    %10 = vsyncpa [#allocation7], 0
    %11 = vsyncpa [#allocation10], 0
    %12 = vsyncpa [#allocation5], 0
    // Predicated region
    $region2: #{tpu_custom_call.1} parent=1 // pred_check
      _
    $region3: #{tpu_custom_call.1} parent=1 // pred_check_branch
      %14 = sbr.rel (0) target = $region5
    $region4: #{tpu_custom_call.1} parent=1 // pred_region
      %16 = vsyncadd [#allocation4], 0
      %s17 = sshll.u32 %s0, 4
      %s18 = int_to_ptr.hbm [resolvable:$true] %s17
      %s19 = sshll.u32 [#allocation3], 4
      %s20 = int_to_ptr.vmem [resolvable:$true] %s19
      %25 = dma.hbm_to_vmem [thread:$0]  %s18, 8192, %s20, [#allocation4], 128, 128, 8
    $region5: #{tpu_custom_call.1} parent=1 // pred_fallthru
      _
    // Predicated region
    $region6: #{tpu_custom_call.1} parent=1 // pred_check
      _
    $region7: #{tpu_custom_call.1} parent=1 // pred_check_branch
      %27 = sbr.rel (0) target = $region9
    $region8: #{tpu_custom_call.1} parent=1 // pred_region
      %29 = vsyncadd [#allocation7], 0
      %s30 = sshll.u32 %s1, 4
      %s31 = int_to_ptr.hbm [resolvable:$true] %s30
      %s32 = sshll.u32 [#allocation6], 4
      %s33 = int_to_ptr.vmem [resolvable:$true] %s32
      %38 = dma.hbm_to_vmem [thread:$0]  %s31, 2048, %s33, [#allocation7], 128, 128, 8
    $region9: #{tpu_custom_call.1} parent=1 // pred_fallthru
      _
    // Predicated region
    $region10: #{tpu_custom_call.1} parent=1 // pred_check
      _
    $region11: #{tpu_custom_call.1} parent=1 // pred_check_branch
      %40 = sbr.rel (0) target = $region13
    $region12: #{tpu_custom_call.1} parent=1 // pred_region
      %42 = vsyncadd [#allocation7], 0
      %s43 = sshll.u32 %s2, 4
      %s44 = int_to_ptr.hbm [resolvable:$true] %s43
      %s45 = sshll.u32 [#allocation8], 4
      %s46 = int_to_ptr.vmem [resolvable:$true] %s45
      %51 = dma.hbm_to_vmem [thread:$0]  %s44, 256, %s46, [#allocation7], 128, 128, 8
    $region13: #{tpu_custom_call.1} parent=1 // pred_fallthru
      _
    // Predicated region
    $region14: #{tpu_custom_call.1} parent=1 // pred_check
      _
    $region15: #{tpu_custom_call.1} parent=1 // pred_check_branch
      %53 = sbr.rel (0) target = $region17
    $region16: #{tpu_custom_call.1} parent=1 // pred_region
      %55 = vsyncadd [#allocation10], 0
      %s56 = sshll.u32 %s3, 4
      %s57 = int_to_ptr.hbm [resolvable:$true] %s56
      %s58 = sshll.u32 [#allocation9], 4
      %s59 = int_to_ptr.vmem [resolvable:$true] %s58
      %64 = dma.hbm_to_vmem [thread:$0]  %s57, 2048, %s59, [#allocation10], 128, 128, 8
    $region17: #{tpu_custom_call.1} parent=1 // pred_fallthru
      _
    // Predicated region
    $region18: #{tpu_custom_call.1} parent=1 // pred_check
      _
    $region19: #{tpu_custom_call.1} parent=1 // pred_check_branch
      %66 = sbr.rel (0) target = $region21
    $region20: #{tpu_custom_call.1} parent=1 // pred_region
      %68 = dma.done [#allocation4], 8192
    $region21: #{tpu_custom_call.1} parent=1 // pred_fallthru
      _
    // Predicated region
    $region22: #{tpu_custom_call.1} parent=1 // pred_check
      _
    $region23: #{tpu_custom_call.1} parent=1 // pred_check_branch
      %70 = sbr.rel (0) target = $region25
    $region24: #{tpu_custom_call.1} parent=1 // pred_region
      %72 = dma.done [#allocation7], 2048
    $region25: #{tpu_custom_call.1} parent=1 // pred_fallthru
      _
    // Predicated region
    $region26: #{tpu_custom_call.1} parent=1 // pred_check
      _
    $region27: #{tpu_custom_call.1} parent=1 // pred_check_branch
      %74 = sbr.rel (0) target = $region29
    $region28: #{tpu_custom_call.1} parent=1 // pred_region
      %76 = dma.done [#allocation7], 256
    $region29: #{tpu_custom_call.1} parent=1 // pred_fallthru
      _
    // Predicated region
    $region30: #{tpu_custom_call.1} parent=1 // pred_check
      _
    $region31: #{tpu_custom_call.1} parent=1 // pred_check_branch
      %78 = sbr.rel (0) target = $region33
    $region32: #{tpu_custom_call.1} parent=1 // pred_region
      %80 = dma.done [#allocation10], 2048
    $region33: #{tpu_custom_call.1} parent=1 // pred_fallthru
      _
    %v81 = vld [vmem:[#allocation3] sm:$0xff]
    %v82 = vld [vmem:[#allocation3 + $0x8] sm:$0xff]
    %v83 = vld [vmem:[#allocation3 + $0x10] sm:$0xff]
    %v84 = vld [vmem:[#allocation3 + $0x18] sm:$0xff]
    %v85 = vld [vmem:[#allocation3 + $0x20] sm:$0xff]
    %v86 = vld [vmem:[#allocation3 + $0x28] sm:$0xff]
    %v87 = vld [vmem:[#allocation3 + $0x30] sm:$0xff]
    %v88 = vld [vmem:[#allocation3 + $0x38] sm:$0xff]
    %v89 = vld [vmem:[#allocation3 + $0x40] sm:$0xff]
    %v90 = vld [vmem:[#allocation3 + $0x48] sm:$0xff]
    %v91 = vld [vmem:[#allocation3 + $0x50] sm:$0xff]
    %v92 = vld [vmem:[#allocation3 + $0x58] sm:$0xff]
    %v93 = vld [vmem:[#allocation3 + $0x60] sm:$0xff]
    %v94 = vld [vmem:[#allocation3 + $0x68] sm:$0xff]
    %v95 = vld [vmem:[#allocation3 + $0x70] sm:$0xff]
    %v96 = vld [vmem:[#allocation3 + $0x78] sm:$0xff]
    %v97 = vld [vmem:[#allocation3 + $0x80] sm:$0xff]
    %v98 = vld [vmem:[#allocation3 + $0x88] sm:$0xff]
    %v99 = vld [vmem:[#allocation3 + $0x90] sm:$0xff]
    %v100 = vld [vmem:[#allocation3 + $0x98] sm:$0xff]
    %v101 = vld [vmem:[#allocation3 + $0xa0] sm:$0xff]
    %v102 = vld [vmem:[#allocation3 + $0xa8] sm:$0xff]
    %v103 = vld [vmem:[#allocation3 + $0xb0] sm:$0xff]
    %v104 = vld [vmem:[#allocation3 + $0xb8] sm:$0xff]
    %v105 = vld [vmem:[#allocation3 + $0xc0] sm:$0xff]
    %v106 = vld [vmem:[#allocation3 + $0xc8] sm:$0xff]
    %v107 = vld [vmem:[#allocation3 + $0xd0] sm:$0xff]
    %v108 = vld [vmem:[#allocation3 + $0xd8] sm:$0xff]
    %v109 = vld [vmem:[#allocation3 + $0xe0] sm:$0xff]
    %v110 = vld [vmem:[#allocation3 + $0xe8] sm:$0xff]
    %v111 = vld [vmem:[#allocation3 + $0xf0] sm:$0xff]
    %v112 = vld [vmem:[#allocation3 + $0xf8] sm:$0xff]
    %v113 = vld [vmem:[#allocation3 + $0x100] sm:$0xff]
    %v114 = vld [vmem:[#allocation3 + $0x108] sm:$0xff]
    %v115 = vld [vmem:[#allocation3 + $0x110] sm:$0xff]
    %v116 = vld [vmem:[#allocation3 + $0x118] sm:$0xff]
    %v117 = vld [vmem:[#allocation3 + $0x120] sm:$0xff]
    %v118 = vld [vmem:[#allocation3 + $0x128] sm:$0xff]
    %v119 = vld [vmem:[#allocation3 + $0x130] sm:$0xff]
    %v120 = vld [vmem:[#allocation3 + $0x138] sm:$0xff]
    %v121 = vld [vmem:[#allocation3 + $0x140] sm:$0xff]
    %v122 = vld [vmem:[#allocation3 + $0x148] sm:$0xff]
    %v123 = vld [vmem:[#allocation3 + $0x150] sm:$0xff]
    %v124 = vld [vmem:[#allocation3 + $0x158] sm:$0xff]
    %v125 = vld [vmem:[#allocation3 + $0x160] sm:$0xff]
    %v126 = vld [vmem:[#allocation3 + $0x168] sm:$0xff]
    %v127 = vld [vmem:[#allocation3 + $0x170] sm:$0xff]
    %v128 = vld [vmem:[#allocation3 + $0x178] sm:$0xff]
    %v129 = vld [vmem:[#allocation3 + $0x180] sm:$0xff]
    %v130 = vld [vmem:[#allocation3 + $0x188] sm:$0xff]
    %v131 = vld [vmem:[#allocation3 + $0x190] sm:$0xff]
    %v132 = vld [vmem:[#allocation3 + $0x198] sm:$0xff]
    %v133 = vld [vmem:[#allocation3 + $0x1a0] sm:$0xff]
    %v134 = vld [vmem:[#allocation3 + $0x1a8] sm:$0xff]
    %v135 = vld [vmem:[#allocation3 + $0x1b0] sm:$0xff]
    %v136 = vld [vmem:[#allocation3 + $0x1b8] sm:$0xff]
    %v137 = vld [vmem:[#allocation3 + $0x1c0] sm:$0xff]
    %v138 = vld [vmem:[#allocation3 + $0x1c8] sm:$0xff]
    %v139 = vld [vmem:[#allocation3 + $0x1d0] sm:$0xff]
    %v140 = vld [vmem:[#allocation3 + $0x1d8] sm:$0xff]
    %v141 = vld [vmem:[#allocation3 + $0x1e0] sm:$0xff]
    %v142 = vld [vmem:[#allocation3 + $0x1e8] sm:$0xff]
    %v143 = vld [vmem:[#allocation3 + $0x1f0] sm:$0xff]
    %v144 = vld [vmem:[#allocation3 + $0x1f8] sm:$0xff]
    %v145 = vld [vmem:[#allocation6] sm:$0xff]
    %v146 = vld [vmem:[#allocation6 + $0x8] sm:$0xff]
    %v147 = vld [vmem:[#allocation6 + $0x10] sm:$0xff]
    %v148 = vld [vmem:[#allocation6 + $0x18] sm:$0xff]
    %v149 = vld [vmem:[#allocation6 + $0x20] sm:$0xff]
    %v150 = vld [vmem:[#allocation6 + $0x28] sm:$0xff]
    %v151 = vld [vmem:[#allocation6 + $0x30] sm:$0xff]
    %v152 = vld [vmem:[#allocation6 + $0x38] sm:$0xff]
    %v153 = vld [vmem:[#allocation6 + $0x40] sm:$0xff]
    %v154 = vld [vmem:[#allocation6 + $0x48] sm:$0xff]
    %v155 = vld [vmem:[#allocation6 + $0x50] sm:$0xff]
    %v156 = vld [vmem:[#allocation6 + $0x58] sm:$0xff]
    %v157 = vld [vmem:[#allocation6 + $0x60] sm:$0xff]
    %v158 = vld [vmem:[#allocation6 + $0x68] sm:$0xff]
    %v159 = vld [vmem:[#allocation6 + $0x70] sm:$0xff]
    %v160 = vld [vmem:[#allocation6 + $0x78] sm:$0xff]
    %161 = vmatpush.msra.mxu0 %v160
    %162 = vmatpush.msra.mxu0 %v159
    %163 = vmatpush.msra.mxu0 %v158
    %164 = vmatpush.msra.mxu0 %v157
    %165 = vmatpush.msra.mxu0 %v156
    %166 = vmatpush.msra.mxu0 %v155
    %167 = vmatpush.msra.mxu0 %v154
    %168 = vmatpush.msra.mxu0 %v153
    %169 = vmatpush.msra.mxu0 %v152
    %170 = vmatpush.msra.mxu0 %v151
    %171 = vmatpush.msra.mxu0 %v150
    %172 = vmatpush.msra.mxu0 %v149
    %173 = vmatpush.msra.mxu0 %v148
    %174 = vmatpush.msra.mxu0 %v147
    %175 = vmatpush.msra.mxu0 %v146
    %176 = vmatpush.msra.mxu0 %v145
    %177 = vmatmul.f32.gmra.mxu0 %v81
    %v178 = vpop.f32.mrf.mxu0
    %v179 = vadd.f32 0.0, %v178
    %180 = vmatmul.f32.gmra.mxu0 %v82
    %v181 = vpop.f32.mrf.mxu0
    %v182 = vadd.f32 0.0, %v181
    %183 = vmatmul.f32.gmra.mxu0 %v83
    %v184 = vpop.f32.mrf.mxu0
    %v185 = vadd.f32 0.0, %v184
    %186 = vmatmul.f32.gmra.mxu0 %v84
    %v187 = vpop.f32.mrf.mxu0
    %v188 = vadd.f32 0.0, %v187
    %189 = vmatmul.f32.gmra.mxu0 %v85
    %v190 = vpop.f32.mrf.mxu0
    %v191 = vadd.f32 0.0, %v190
    %192 = vmatmul.f32.gmra.mxu0 %v86
    %v193 = vpop.f32.mrf.mxu0
    %v194 = vadd.f32 0.0, %v193
    %195 = vmatmul.f32.gmra.mxu0 %v87
    %v196 = vpop.f32.mrf.mxu0
    %v197 = vadd.f32 0.0, %v196
    %198 = vmatmul.f32.gmra.mxu0 %v88
    %v199 = vpop.f32.mrf.mxu0
    %v200 = vadd.f32 0.0, %v199
    %201 = vmatmul.f32.gmra.mxu0 %v89
    %v202 = vpop.f32.mrf.mxu0
    %v203 = vadd.f32 0.0, %v202
    %204 = vmatmul.f32.gmra.mxu0 %v90
    %v205 = vpop.f32.mrf.mxu0
    %v206 = vadd.f32 0.0, %v205
    %207 = vmatmul.f32.gmra.mxu0 %v91
    %v208 = vpop.f32.mrf.mxu0
    %v209 = vadd.f32 0.0, %v208
    %210 = vmatmul.f32.gmra.mxu0 %v92
    %v211 = vpop.f32.mrf.mxu0
    %v212 = vadd.f32 0.0, %v211
    %213 = vmatmul.f32.gmra.mxu0 %v93
    %v214 = vpop.f32.mrf.mxu0
    %v215 = vadd.f32 0.0, %v214
    %216 = vmatmul.f32.gmra.mxu0 %v94
    %v217 = vpop.f32.mrf.mxu0
    %v218 = vadd.f32 0.0, %v217
    %219 = vmatmul.f32.gmra.mxu0 %v95
    %v220 = vpop.f32.mrf.mxu0
    %v221 = vadd.f32 0.0, %v220
    %222 = vmatmul.f32.gmra.mxu0 %v96
    %v223 = vpop.f32.mrf.mxu0
    %v224 = vadd.f32 0.0, %v223
    %225 = vmatmul.f32.gmra.mxu0 %v97
    %v226 = vpop.f32.mrf.mxu0
    %v227 = vadd.f32 0.0, %v226
    %228 = vmatmul.f32.gmra.mxu0 %v98
    %v229 = vpop.f32.mrf.mxu0
    %v230 = vadd.f32 0.0, %v229
    %231 = vmatmul.f32.gmra.mxu0 %v99
    %v232 = vpop.f32.mrf.mxu0
    %v233 = vadd.f32 0.0, %v232
    %234 = vmatmul.f32.gmra.mxu0 %v100
    %v235 = vpop.f32.mrf.mxu0
    %v236 = vadd.f32 0.0, %v235
    %237 = vmatmul.f32.gmra.mxu0 %v101
    %v238 = vpop.f32.mrf.mxu0
    %v239 = vadd.f32 0.0, %v238
    %240 = vmatmul.f32.gmra.mxu0 %v102
    %v241 = vpop.f32.mrf.mxu0
    %v242 = vadd.f32 0.0, %v241
    %243 = vmatmul.f32.gmra.mxu0 %v103
    %v244 = vpop.f32.mrf.mxu0
    %v245 = vadd.f32 0.0, %v244
    %246 = vmatmul.f32.gmra.mxu0 %v104
    %v247 = vpop.f32.mrf.mxu0
    %v248 = vadd.f32 0.0, %v247
    %249 = vmatmul.f32.gmra.mxu0 %v105
    %v250 = vpop.f32.mrf.mxu0
    %v251 = vadd.f32 0.0, %v250
    %252 = vmatmul.f32.gmra.mxu0 %v106
    %v253 = vpop.f32.mrf.mxu0
    %v254 = vadd.f32 0.0, %v253
    %255 = vmatmul.f32.gmra.mxu0 %v107
    %v256 = vpop.f32.mrf.mxu0
    %v257 = vadd.f32 0.0, %v256
    %258 = vmatmul.f32.gmra.mxu0 %v108
    %v259 = vpop.f32.mrf.mxu0
    %v260 = vadd.f32 0.0, %v259
    %261 = vmatmul.f32.gmra.mxu0 %v109
    %v262 = vpop.f32.mrf.mxu0
    %v263 = vadd.f32 0.0, %v262
    %264 = vmatmul.f32.gmra.mxu0 %v110
    %v265 = vpop.f32.mrf.mxu0
    %v266 = vadd.f32 0.0, %v265
    %267 = vmatmul.f32.gmra.mxu0 %v111
    %v268 = vpop.f32.mrf.mxu0
    %v269 = vadd.f32 0.0, %v268
    %270 = vmatmul.f32.gmra.mxu0 %v112
    %v271 = vpop.f32.mrf.mxu0
    %v272 = vadd.f32 0.0, %v271
    %273 = vmatmul.f32.gmra.mxu0 %v113
    %v274 = vpop.f32.mrf.mxu0
    %v275 = vadd.f32 0.0, %v274
    %276 = vmatmul.f32.gmra.mxu0 %v114
    %v277 = vpop.f32.mrf.mxu0
    %v278 = vadd.f32 0.0, %v277
    %279 = vmatmul.f32.gmra.mxu0 %v115
    %v280 = vpop.f32.mrf.mxu0
    %v281 = vadd.f32 0.0, %v280
    %282 = vmatmul.f32.gmra.mxu0 %v116
    %v283 = vpop.f32.mrf.mxu0
    %v284 = vadd.f32 0.0, %v283
    %285 = vmatmul.f32.gmra.mxu0 %v117
    %v286 = vpop.f32.mrf.mxu0
    %v287 = vadd.f32 0.0, %v286
    %288 = vmatmul.f32.gmra.mxu0 %v118
    %v289 = vpop.f32.mrf.mxu0
    %v290 = vadd.f32 0.0, %v289
    %291 = vmatmul.f32.gmra.mxu0 %v119
    %v292 = vpop.f32.mrf.mxu0
    %v293 = vadd.f32 0.0, %v292
    %294 = vmatmul.f32.gmra.mxu0 %v120
    %v295 = vpop.f32.mrf.mxu0
    %v296 = vadd.f32 0.0, %v295
    %297 = vmatmul.f32.gmra.mxu0 %v121
    %v298 = vpop.f32.mrf.mxu0
    %v299 = vadd.f32 0.0, %v298
    %300 = vmatmul.f32.gmra.mxu0 %v122
    %v301 = vpop.f32.mrf.mxu0
    %v302 = vadd.f32 0.0, %v301
    %303 = vmatmul.f32.gmra.mxu0 %v123
    %v304 = vpop.f32.mrf.mxu0
    %v305 = vadd.f32 0.0, %v304
    %306 = vmatmul.f32.gmra.mxu0 %v124
    %v307 = vpop.f32.mrf.mxu0
    %v308 = vadd.f32 0.0, %v307
    %309 = vmatmul.f32.gmra.mxu0 %v125
    %v310 = vpop.f32.mrf.mxu0
    %v311 = vadd.f32 0.0, %v310
    %312 = vmatmul.f32.gmra.mxu0 %v126
    %v313 = vpop.f32.mrf.mxu0
    %v314 = vadd.f32 0.0, %v313
    %315 = vmatmul.f32.gmra.mxu0 %v127
    %v316 = vpop.f32.mrf.mxu0
    %v317 = vadd.f32 0.0, %v316
    %318 = vmatmul.f32.gmra.mxu0 %v128
    %v319 = vpop.f32.mrf.mxu0
    %v320 = vadd.f32 0.0, %v319
    %321 = vmatmul.f32.gmra.mxu0 %v129
    %v322 = vpop.f32.mrf.mxu0
    %v323 = vadd.f32 0.0, %v322
    %324 = vmatmul.f32.gmra.mxu0 %v130
    %v325 = vpop.f32.mrf.mxu0
    %v326 = vadd.f32 0.0, %v325
    %327 = vmatmul.f32.gmra.mxu0 %v131
    %v328 = vpop.f32.mrf.mxu0
    %v329 = vadd.f32 0.0, %v328
    %330 = vmatmul.f32.gmra.mxu0 %v132
    %v331 = vpop.f32.mrf.mxu0
    %v332 = vadd.f32 0.0, %v331
    %333 = vmatmul.f32.gmra.mxu0 %v133
    %v334 = vpop.f32.mrf.mxu0
    %v335 = vadd.f32 0.0, %v334
    %336 = vmatmul.f32.gmra.mxu0 %v134
    %v337 = vpop.f32.mrf.mxu0
    %v338 = vadd.f32 0.0, %v337
    %339 = vmatmul.f32.gmra.mxu0 %v135
    %v340 = vpop.f32.mrf.mxu0
    %v341 = vadd.f32 0.0, %v340
    %342 = vmatmul.f32.gmra.mxu0 %v136
    %v343 = vpop.f32.mrf.mxu0
    %v344 = vadd.f32 0.0, %v343
    %345 = vmatmul.f32.gmra.mxu0 %v137
    %v346 = vpop.f32.mrf.mxu0
    %v347 = vadd.f32 0.0, %v346
    %348 = vmatmul.f32.gmra.mxu0 %v138
    %v349 = vpop.f32.mrf.mxu0
    %v350 = vadd.f32 0.0, %v349
    %351 = vmatmul.f32.gmra.mxu0 %v139
    %v352 = vpop.f32.mrf.mxu0
    %v353 = vadd.f32 0.0, %v352
    %354 = vmatmul.f32.gmra.mxu0 %v140
    %v355 = vpop.f32.mrf.mxu0
    %v356 = vadd.f32 0.0, %v355
    %357 = vmatmul.f32.gmra.mxu0 %v141
    %v358 = vpop.f32.mrf.mxu0
    %v359 = vadd.f32 0.0, %v358
    %360 = vmatmul.f32.gmra.mxu0 %v142
    %v361 = vpop.f32.mrf.mxu0
    %v362 = vadd.f32 0.0, %v361
    %363 = vmatmul.f32.gmra.mxu0 %v143
    %v364 = vpop.f32.mrf.mxu0
    %v365 = vadd.f32 0.0, %v364
    %366 = vmatmul.f32.gmra.mxu0 %v144
    %v367 = vpop.f32.mrf.mxu0
    %v368 = vadd.f32 0.0, %v367
    %369 = vdwg.mxu0
    %v370 = vadd.f32 %v179, %v182
    %v371 = vadd.f32 %v370, %v185
    %v372 = vadd.f32 %v371, %v188
    %v373 = vadd.f32 %v372, %v191
    %v374 = vadd.f32 %v373, %v194
    %v375 = vadd.f32 %v374, %v197
    %v376 = vadd.f32 %v375, %v200
    %v377 = vadd.f32 %v376, %v203
    %v378 = vadd.f32 %v377, %v206
    %v379 = vadd.f32 %v378, %v209
    %v380 = vadd.f32 %v379, %v212
    %v381 = vadd.f32 %v380, %v215
    %v382 = vadd.f32 %v381, %v218
    %v383 = vadd.f32 %v382, %v221
    %v384 = vadd.f32 %v383, %v224
    %v385 = vadd.f32 %v384, %v227
    %v386 = vadd.f32 %v385, %v230
    %v387 = vadd.f32 %v386, %v233
    %v388 = vadd.f32 %v387, %v236
    %v389 = vadd.f32 %v388, %v239
    %v390 = vadd.f32 %v389, %v242
    %v391 = vadd.f32 %v390, %v245
    %v392 = vadd.f32 %v391, %v248
    %v393 = vadd.f32 %v392, %v251
    %v394 = vadd.f32 %v393, %v254
    %v395 = vadd.f32 %v394, %v257
    %v396 = vadd.f32 %v395, %v260
    %v397 = vadd.f32 %v396, %v263
    %v398 = vadd.f32 %v397, %v266
    %v399 = vadd.f32 %v398, %v269
    %v400 = vadd.f32 %v399, %v272
    %v401 = vadd.f32 %v400, %v275
    %v402 = vadd.f32 %v401, %v278
    %v403 = vadd.f32 %v402, %v281
    %v404 = vadd.f32 %v403, %v284
    %v405 = vadd.f32 %v404, %v287
    %v406 = vadd.f32 %v405, %v290
    %v407 = vadd.f32 %v406, %v293
    %v408 = vadd.f32 %v407, %v296
    %v409 = vadd.f32 %v408, %v299
    %v410 = vadd.f32 %v409, %v302
    %v411 = vadd.f32 %v410, %v305
    %v412 = vadd.f32 %v411, %v308
    %v413 = vadd.f32 %v412, %v311
    %v414 = vadd.f32 %v413, %v314
    %v415 = vadd.f32 %v414, %v317
    %v416 = vadd.f32 %v415, %v320
    %v417 = vadd.f32 %v416, %v323
    %v418 = vadd.f32 %v417, %v326
    %v419 = vadd.f32 %v418, %v329
    %v420 = vadd.f32 %v419, %v332
    %v421 = vadd.f32 %v420, %v335
    %v422 = vadd.f32 %v421, %v338
    %v423 = vadd.f32 %v422, %v341
    %v424 = vadd.f32 %v423, %v344
    %v425 = vadd.f32 %v424, %v347
    %v426 = vadd.f32 %v425, %v350
    %v427 = vadd.f32 %v426, %v353
    %v428 = vadd.f32 %v427, %v356
    %v429 = vadd.f32 %v428, %v359
    %v430 = vadd.f32 %v429, %v362
    %v431 = vadd.f32 %v430, %v365
    %v432 = vadd.f32 %v431, %v368
    %v433 = vrot.slane %v432, 4
    %v434 = vadd.f32 %v432, %v433
    %v435 = vrot.slane %v434, 2
    %v436 = vadd.f32 %v434, %v435
    %v437 = vrot.slane %v436, 1
    %v438 = vadd.f32 %v436, %v437
    %v439 = vmul.f32 %v438, 0.001953125
    %v440 = vmul.f32 %v179, %v179
    %v441 = vmul.f32 %v182, %v182
    %v442 = vmul.f32 %v185, %v185
    %v443 = vmul.f32 %v188, %v188
    %v444 = vmul.f32 %v191, %v191
    %v445 = vmul.f32 %v194, %v194
    %v446 = vmul.f32 %v197, %v197
    %v447 = vmul.f32 %v200, %v200
    %v448 = vmul.f32 %v203, %v203
    %v449 = vmul.f32 %v206, %v206
    %v450 = vmul.f32 %v209, %v209
    %v451 = vmul.f32 %v212, %v212
    %v452 = vmul.f32 %v215, %v215
    %v453 = vmul.f32 %v218, %v218
    %v454 = vmul.f32 %v221, %v221
    %v455 = vmul.f32 %v224, %v224
    %v456 = vmul.f32 %v227, %v227
    %v457 = vmul.f32 %v230, %v230
    %v458 = vmul.f32 %v233, %v233
    %v459 = vmul.f32 %v236, %v236
    %v460 = vmul.f32 %v239, %v239
    %v461 = vmul.f32 %v242, %v242
    %v462 = vmul.f32 %v245, %v245
    %v463 = vmul.f32 %v248, %v248
    %v464 = vmul.f32 %v251, %v251
    %v465 = vmul.f32 %v254, %v254
    %v466 = vmul.f32 %v257, %v257
    %v467 = vmul.f32 %v260, %v260
    %v468 = vmul.f32 %v263, %v263
    %v469 = vmul.f32 %v266, %v266
    %v470 = vmul.f32 %v269, %v269
    %v471 = vmul.f32 %v272, %v272
    %v472 = vmul.f32 %v275, %v275
    %v473 = vmul.f32 %v278, %v278
    %v474 = vmul.f32 %v281, %v281
    %v475 = vmul.f32 %v284, %v284
    %v476 = vmul.f32 %v287, %v287
    %v477 = vmul.f32 %v290, %v290
    %v478 = vmul.f32 %v293, %v293
    %v479 = vmul.f32 %v296, %v296
    %v480 = vmul.f32 %v299, %v299
    %v481 = vmul.f32 %v302, %v302
    %v482 = vmul.f32 %v305, %v305
    %v483 = vmul.f32 %v308, %v308
    %v484 = vmul.f32 %v311, %v311
    %v485 = vmul.f32 %v314, %v314
    %v486 = vmul.f32 %v317, %v317
    %v487 = vmul.f32 %v320, %v320
    %v488 = vmul.f32 %v323, %v323
    %v489 = vmul.f32 %v326, %v326
    %v490 = vmul.f32 %v329, %v329
    %v491 = vmul.f32 %v332, %v332
    %v492 = vmul.f32 %v335, %v335
    %v493 = vmul.f32 %v338, %v338
    %v494 = vmul.f32 %v341, %v341
    %v495 = vmul.f32 %v344, %v344
    %v496 = vmul.f32 %v347, %v347
    %v497 = vmul.f32 %v350, %v350
    %v498 = vmul.f32 %v353, %v353
    %v499 = vmul.f32 %v356, %v356
    %v500 = vmul.f32 %v359, %v359
    %v501 = vmul.f32 %v362, %v362
    %v502 = vmul.f32 %v365, %v365
    %v503 = vmul.f32 %v368, %v368
    %v504 = vadd.f32 %v440, %v441
    %v505 = vadd.f32 %v504, %v442
    %v506 = vadd.f32 %v505, %v443
    %v507 = vadd.f32 %v506, %v444
    %v508 = vadd.f32 %v507, %v445
    %v509 = vadd.f32 %v508, %v446
    %v510 = vadd.f32 %v509, %v447
    %v511 = vadd.f32 %v510, %v448
    %v512 = vadd.f32 %v511, %v449
    %v513 = vadd.f32 %v512, %v450
    %v514 = vadd.f32 %v513, %v451
    %v515 = vadd.f32 %v514, %v452
    %v516 = vadd.f32 %v515, %v453
    %v517 = vadd.f32 %v516, %v454
    %v518 = vadd.f32 %v517, %v455
    %v519 = vadd.f32 %v518, %v456
    %v520 = vadd.f32 %v519, %v457
    %v521 = vadd.f32 %v520, %v458
    %v522 = vadd.f32 %v521, %v459
    %v523 = vadd.f32 %v522, %v460
    %v524 = vadd.f32 %v523, %v461
    %v525 = vadd.f32 %v524, %v462
    %v526 = vadd.f32 %v525, %v463
    %v527 = vadd.f32 %v526, %v464
    %v528 = vadd.f32 %v527, %v465
    %v529 = vadd.f32 %v528, %v466
    %v530 = vadd.f32 %v529, %v467
    %v531 = vadd.f32 %v530, %v468
    %v532 = vadd.f32 %v531, %v469
    %v533 = vadd.f32 %v532, %v470
    %v534 = vadd.f32 %v533, %v471
    %v535 = vadd.f32 %v534, %v472
    %v536 = vadd.f32 %v535, %v473
    %v537 = vadd.f32 %v536, %v474
    %v538 = vadd.f32 %v537, %v475
    %v539 = vadd.f32 %v538, %v476
    %v540 = vadd.f32 %v539, %v477
    %v541 = vadd.f32 %v540, %v478
    %v542 = vadd.f32 %v541, %v479
    %v543 = vadd.f32 %v542, %v480
    %v544 = vadd.f32 %v543, %v481
    %v545 = vadd.f32 %v544, %v482
    %v546 = vadd.f32 %v545, %v483
    %v547 = vadd.f32 %v546, %v484
    %v548 = vadd.f32 %v547, %v485
    %v549 = vadd.f32 %v548, %v486
    %v550 = vadd.f32 %v549, %v487
    %v551 = vadd.f32 %v550, %v488
    %v552 = vadd.f32 %v551, %v489
    %v553 = vadd.f32 %v552, %v490
    %v554 = vadd.f32 %v553, %v491
    %v555 = vadd.f32 %v554, %v492
    %v556 = vadd.f32 %v555, %v493
    %v557 = vadd.f32 %v556, %v494
    %v558 = vadd.f32 %v557, %v495
    %v559 = vadd.f32 %v558, %v496
    %v560 = vadd.f32 %v559, %v497
    %v561 = vadd.f32 %v560, %v498
    %v562 = vadd.f32 %v561, %v499
    %v563 = vadd.f32 %v562, %v500
    %v564 = vadd.f32 %v563, %v501
    %v565 = vadd.f32 %v564, %v502
    %v566 = vadd.f32 %v565, %v503
    %v567 = vrot.slane %v566, 4
    %v568 = vadd.f32 %v566, %v567
    %v569 = vrot.slane %v568, 2
    %v570 = vadd.f32 %v568, %v569
    %v571 = vrot.slane %v570, 1
    %v572 = vadd.f32 %v570, %v571
    %v573 = vmul.f32 %v572, 0.001953125
    %v574 = vmul.f32 %v439, %v439
    %v575 = vsub.f32 %v573, %v574
    %v576 = vmax.f32 %v575, 0.0
    %v577 = vsub.f32 %v179, %v439
    %v578 = vsub.f32 %v182, %v439
    %v579 = vsub.f32 %v185, %v439
    %v580 = vsub.f32 %v188, %v439
    %v581 = vsub.f32 %v191, %v439
    %v582 = vsub.f32 %v194, %v439
    %v583 = vsub.f32 %v197, %v439
    %v584 = vsub.f32 %v200, %v439
    %v585 = vsub.f32 %v203, %v439
    %v586 = vsub.f32 %v206, %v439
    %v587 = vsub.f32 %v209, %v439
    %v588 = vsub.f32 %v212, %v439
    %v589 = vsub.f32 %v215, %v439
    %v590 = vsub.f32 %v218, %v439
    %v591 = vsub.f32 %v221, %v439
    %v592 = vsub.f32 %v224, %v439
    %v593 = vsub.f32 %v227, %v439
    %v594 = vsub.f32 %v230, %v439
    %v595 = vsub.f32 %v233, %v439
    %v596 = vsub.f32 %v236, %v439
    %v597 = vsub.f32 %v239, %v439
    %v598 = vsub.f32 %v242, %v439
    %v599 = vsub.f32 %v245, %v439
    %v600 = vsub.f32 %v248, %v439
    %v601 = vsub.f32 %v251, %v439
    %v602 = vsub.f32 %v254, %v439
    %v603 = vsub.f32 %v257, %v439
    %v604 = vsub.f32 %v260, %v439
    %v605 = vsub.f32 %v263, %v439
    %v606 = vsub.f32 %v266, %v439
    %v607 = vsub.f32 %v269, %v439
    %v608 = vsub.f32 %v272, %v439
    %v609 = vsub.f32 %v275, %v439
    %v610 = vsub.f32 %v278, %v439
    %v611 = vsub.f32 %v281, %v439
    %v612 = vsub.f32 %v284, %v439
    %v613 = vsub.f32 %v287, %v439
    %v614 = vsub.f32 %v290, %v439
    %v615 = vsub.f32 %v293, %v439
    %v616 = vsub.f32 %v296, %v439
    %v617 = vsub.f32 %v299, %v439
    %v618 = vsub.f32 %v302, %v439
    %v619 = vsub.f32 %v305, %v439
    %v620 = vsub.f32 %v308, %v439
    %v621 = vsub.f32 %v311, %v439
    %v622 = vsub.f32 %v314, %v439
    %v623 = vsub.f32 %v317, %v439
    %v624 = vsub.f32 %v320, %v439
    %v625 = vsub.f32 %v323, %v439
    %v626 = vsub.f32 %v326, %v439
    %v627 = vsub.f32 %v329, %v439
    %v628 = vsub.f32 %v332, %v439
    %v629 = vsub.f32 %v335, %v439
    %v630 = vsub.f32 %v338, %v439
    %v631 = vsub.f32 %v341, %v439
    %v632 = vsub.f32 %v344, %v439
    %v633 = vsub.f32 %v347, %v439
    %v634 = vsub.f32 %v350, %v439
    %v635 = vsub.f32 %v353, %v439
    %v636 = vsub.f32 %v356, %v439
    %v637 = vsub.f32 %v359, %v439
    %v638 = vsub.f32 %v362, %v439
    %v639 = vsub.f32 %v365, %v439
    %v640 = vsub.f32 %v368, %v439
    %v641 = vadd.f32 %v576, 1e-05
    %v642 = vrsqrt.pop %v641
    %v643 = vmul.f32 %v642, %v641
    %v644 = vmul.f32 %v643, %v642
    %v645 = vmul.f32 0.5, %v644
    %v646 = vsub.f32 1.5, %v645
    %v647 = vmul.f32 %v642, %v646
    %vm648 = vweird.f32 %v641
    %vm649 = vweird.f32 %v642
    %vm650 = vmor %vm648, %vm649
    %v651 = vsel %vm650, %v642, %v647
    %v652 = vmul.f32 %v577, %v651
    %v653 = vmul.f32 %v578, %v651
    %v654 = vmul.f32 %v579, %v651
    %v655 = vmul.f32 %v580, %v651
    %v656 = vmul.f32 %v581, %v651
    %v657 = vmul.f32 %v582, %v651
    %v658 = vmul.f32 %v583, %v651
    %v659 = vmul.f32 %v584, %v651
    %v660 = vmul.f32 %v585, %v651
    %v661 = vmul.f32 %v586, %v651
    %v662 = vmul.f32 %v587, %v651
    %v663 = vmul.f32 %v588, %v651
    %v664 = vmul.f32 %v589, %v651
    %v665 = vmul.f32 %v590, %v651
    %v666 = vmul.f32 %v591, %v651
    %v667 = vmul.f32 %v592, %v651
    %v668 = vmul.f32 %v593, %v651
    %v669 = vmul.f32 %v594, %v651
    %v670 = vmul.f32 %v595, %v651
    %v671 = vmul.f32 %v596, %v651
    %v672 = vmul.f32 %v597, %v651
    %v673 = vmul.f32 %v598, %v651
    %v674 = vmul.f32 %v599, %v651
    %v675 = vmul.f32 %v600, %v651
    %v676 = vmul.f32 %v601, %v651
    %v677 = vmul.f32 %v602, %v651
    %v678 = vmul.f32 %v603, %v651
    %v679 = vmul.f32 %v604, %v651
    %v680 = vmul.f32 %v605, %v651
    %v681 = vmul.f32 %v606, %v651
    %v682 = vmul.f32 %v607, %v651
    %v683 = vmul.f32 %v608, %v651
    %v684 = vmul.f32 %v609, %v651
    %v685 = vmul.f32 %v610, %v651
    %v686 = vmul.f32 %v611, %v651
    %v687 = vmul.f32 %v612, %v651
    %v688 = vmul.f32 %v613, %v651
    %v689 = vmul.f32 %v614, %v651
    %v690 = vmul.f32 %v615, %v651
    %v691 = vmul.f32 %v616, %v651
    %v692 = vmul.f32 %v617, %v651
    %v693 = vmul.f32 %v618, %v651
    %v694 = vmul.f32 %v619, %v651
    %v695 = vmul.f32 %v620, %v651
    %v696 = vmul.f32 %v621, %v651
    %v697 = vmul.f32 %v622, %v651
    %v698 = vmul.f32 %v623, %v651
    %v699 = vmul.f32 %v624, %v651
    %v700 = vmul.f32 %v625, %v651
    %v701 = vmul.f32 %v626, %v651
    %v702 = vmul.f32 %v627, %v651
    %v703 = vmul.f32 %v628, %v651
    %v704 = vmul.f32 %v629, %v651
    %v705 = vmul.f32 %v630, %v651
    %v706 = vmul.f32 %v631, %v651
    %v707 = vmul.f32 %v632, %v651
    %v708 = vmul.f32 %v633, %v651
    %v709 = vmul.f32 %v634, %v651
    %v710 = vmul.f32 %v635, %v651
    %v711 = vmul.f32 %v636, %v651
    %v712 = vmul.f32 %v637, %v651
    %v713 = vmul.f32 %v638, %v651
    %v714 = vmul.f32 %v639, %v651
    %v715 = vmul.f32 %v640, %v651
    %v716 = vmax.f32 %v652, 0.0
    %v717 = vmax.f32 %v653, 0.0
    %v718 = vmax.f32 %v654, 0.0
    %v719 = vmax.f32 %v655, 0.0
    %v720 = vmax.f32 %v656, 0.0
    %v721 = vmax.f32 %v657, 0.0
    %v722 = vmax.f32 %v658, 0.0
    %v723 = vmax.f32 %v659, 0.0
    %v724 = vmax.f32 %v660, 0.0
    %v725 = vmax.f32 %v661, 0.0
    %v726 = vmax.f32 %v662, 0.0
    %v727 = vmax.f32 %v663, 0.0
    %v728 = vmax.f32 %v664, 0.0
    %v729 = vmax.f32 %v665, 0.0
    %v730 = vmax.f32 %v666, 0.0
    %v731 = vmax.f32 %v667, 0.0
    %v732 = vmax.f32 %v668, 0.0
    %v733 = vmax.f32 %v669, 0.0
    %v734 = vmax.f32 %v670, 0.0
    %v735 = vmax.f32 %v671, 0.0
    %v736 = vmax.f32 %v672, 0.0
    %v737 = vmax.f32 %v673, 0.0
    %v738 = vmax.f32 %v674, 0.0
    %v739 = vmax.f32 %v675, 0.0
    %v740 = vmax.f32 %v676, 0.0
    %v741 = vmax.f32 %v677, 0.0
    %v742 = vmax.f32 %v678, 0.0
    %v743 = vmax.f32 %v679, 0.0
    %v744 = vmax.f32 %v680, 0.0
    %v745 = vmax.f32 %v681, 0.0
    %v746 = vmax.f32 %v682, 0.0
    %v747 = vmax.f32 %v683, 0.0
    %v748 = vmax.f32 %v684, 0.0
    %v749 = vmax.f32 %v685, 0.0
    %v750 = vmax.f32 %v686, 0.0
    %v751 = vmax.f32 %v687, 0.0
    %v752 = vmax.f32 %v688, 0.0
    %v753 = vmax.f32 %v689, 0.0
    %v754 = vmax.f32 %v690, 0.0
    %v755 = vmax.f32 %v691, 0.0
    %v756 = vmax.f32 %v692, 0.0
    %v757 = vmax.f32 %v693, 0.0
    %v758 = vmax.f32 %v694, 0.0
    %v759 = vmax.f32 %v695, 0.0
    %v760 = vmax.f32 %v696, 0.0
    %v761 = vmax.f32 %v697, 0.0
    %v762 = vmax.f32 %v698, 0.0
    %v763 = vmax.f32 %v699, 0.0
    %v764 = vmax.f32 %v700, 0.0
    %v765 = vmax.f32 %v701, 0.0
    %v766 = vmax.f32 %v702, 0.0
    %v767 = vmax.f32 %v703, 0.0
    %v768 = vmax.f32 %v704, 0.0
    %v769 = vmax.f32 %v705, 0.0
    %v770 = vmax.f32 %v706, 0.0
    %v771 = vmax.f32 %v707, 0.0
    %v772 = vmax.f32 %v708, 0.0
    %v773 = vmax.f32 %v709, 0.0
    %v774 = vmax.f32 %v710, 0.0
    %v775 = vmax.f32 %v711, 0.0
    %v776 = vmax.f32 %v712, 0.0
    %v777 = vmax.f32 %v713, 0.0
    %v778 = vmax.f32 %v714, 0.0
    %v779 = vmax.f32 %v715, 0.0
    %v780 = vmin.f32 %v716, 6.0
    %v781 = vmin.f32 %v717, 6.0
    %v782 = vmin.f32 %v718, 6.0
    %v783 = vmin.f32 %v719, 6.0
    %v784 = vmin.f32 %v720, 6.0
    %v785 = vmin.f32 %v721, 6.0
    %v786 = vmin.f32 %v722, 6.0
    %v787 = vmin.f32 %v723, 6.0
    %v788 = vmin.f32 %v724, 6.0
    %v789 = vmin.f32 %v725, 6.0
    %v790 = vmin.f32 %v726, 6.0
    %v791 = vmin.f32 %v727, 6.0
    %v792 = vmin.f32 %v728, 6.0
    %v793 = vmin.f32 %v729, 6.0
    %v794 = vmin.f32 %v730, 6.0
    %v795 = vmin.f32 %v731, 6.0
    %v796 = vmin.f32 %v732, 6.0
    %v797 = vmin.f32 %v733, 6.0
    %v798 = vmin.f32 %v734, 6.0
    %v799 = vmin.f32 %v735, 6.0
    %v800 = vmin.f32 %v736, 6.0
    %v801 = vmin.f32 %v737, 6.0
    %v802 = vmin.f32 %v738, 6.0
    %v803 = vmin.f32 %v739, 6.0
    %v804 = vmin.f32 %v740, 6.0
    %v805 = vmin.f32 %v741, 6.0
    %v806 = vmin.f32 %v742, 6.0
    %v807 = vmin.f32 %v743, 6.0
    %v808 = vmin.f32 %v744, 6.0
    %v809 = vmin.f32 %v745, 6.0
    %v810 = vmin.f32 %v746, 6.0
    %v811 = vmin.f32 %v747, 6.0
    %v812 = vmin.f32 %v748, 6.0
    %v813 = vmin.f32 %v749, 6.0
    %v814 = vmin.f32 %v750, 6.0
    %v815 = vmin.f32 %v751, 6.0
    %v816 = vmin.f32 %v752, 6.0
    %v817 = vmin.f32 %v753, 6.0
    %v818 = vmin.f32 %v754, 6.0
    %v819 = vmin.f32 %v755, 6.0
    %v820 = vmin.f32 %v756, 6.0
    %v821 = vmin.f32 %v757, 6.0
    %v822 = vmin.f32 %v758, 6.0
    %v823 = vmin.f32 %v759, 6.0
    %v824 = vmin.f32 %v760, 6.0
    %v825 = vmin.f32 %v761, 6.0
    %v826 = vmin.f32 %v762, 6.0
    %v827 = vmin.f32 %v763, 6.0
    %v828 = vmin.f32 %v764, 6.0
    %v829 = vmin.f32 %v765, 6.0
    %v830 = vmin.f32 %v766, 6.0
    %v831 = vmin.f32 %v767, 6.0
    %v832 = vmin.f32 %v768, 6.0
    %v833 = vmin.f32 %v769, 6.0
    %v834 = vmin.f32 %v770, 6.0
    %v835 = vmin.f32 %v771, 6.0
    %v836 = vmin.f32 %v772, 6.0
    %v837 = vmin.f32 %v773, 6.0
    %v838 = vmin.f32 %v774, 6.0
    %v839 = vmin.f32 %v775, 6.0
    %v840 = vmin.f32 %v776, 6.0
    %v841 = vmin.f32 %v777, 6.0
    %v842 = vmin.f32 %v778, 6.0
    %v843 = vmin.f32 %v779, 6.0
    %844 = vst [vmem:[#allocation2] sm:$0xff] 0.0
    %845 = vst [vmem:[#allocation2 + $0x8] sm:$0xff] 0.0
    %846 = vst [vmem:[#allocation2 + $0x10] sm:$0xff] 0.0
    %847 = vst [vmem:[#allocation2 + $0x18] sm:$0xff] 0.0
    %848 = vst [vmem:[#allocation2 + $0x20] sm:$0xff] %v780
    %849 = vst [vmem:[#allocation2 + $0x28] sm:$0xff] %v781
    %850 = vst [vmem:[#allocation2 + $0x30] sm:$0xff] 0.0
    %851 = vst [vmem:[#allocation2 + $0x38] sm:$0xff] %v782
    %852 = vst [vmem:[#allocation2 + $0x40] sm:$0xff] %v783
    %853 = vst [vmem:[#allocation2 + $0x48] sm:$0xff] 0.0
    %854 = vst [vmem:[#allocation2 + $0x50] sm:$0xff] %v784
    %855 = vst [vmem:[#allocation2 + $0x58] sm:$0xff] %v785
    %856 = vst [vmem:[#allocation2 + $0x60] sm:$0xff] 0.0
    %857 = vst [vmem:[#allocation2 + $0x68] sm:$0xff] %v786
    %858 = vst [vmem:[#allocation2 + $0x70] sm:$0xff] %v787
    %859 = vst [vmem:[#allocation2 + $0x78] sm:$0xff] 0.0
    %860 = vst [vmem:[#allocation2 + $0x80] sm:$0xff] %v788
    %861 = vst [vmem:[#allocation2 + $0x88] sm:$0xff] %v789
    %862 = vst [vmem:[#allocation2 + $0x90] sm:$0xff] 0.0
    %863 = vst [vmem:[#allocation2 + $0x98] sm:$0xff] %v790
    %864 = vst [vmem:[#allocation2 + $0xa0] sm:$0xff] %v791
    %865 = vst [vmem:[#allocation2 + $0xa8] sm:$0xff] 0.0
    %866 = vst [vmem:[#allocation2 + $0xb0] sm:$0xff] %v792
    %867 = vst [vmem:[#allocation2 + $0xb8] sm:$0xff] %v793
    %868 = vst [vmem:[#allocation2 + $0xc0] sm:$0xff] 0.0
    %869 = vst [vmem:[#allocation2 + $0xc8] sm:$0xff] %v794
    %870 = vst [vmem:[#allocation2 + $0xd0] sm:$0xff] %v795
    %871 = vst [vmem:[#allocation2 + $0xd8] sm:$0xff] 0.0
    %872 = vst [vmem:[#allocation2 + $0xe0] sm:$0xff] %v796
    %873 = vst [vmem:[#allocation2 + $0xe8] sm:$0xff] %v797
    %874 = vst [vmem:[#allocation2 + $0xf0] sm:$0xff] 0.0
    %875 = vst [vmem:[#allocation2 + $0xf8] sm:$0xff] %v798
    %876 = vst [vmem:[#allocation2 + $0x100] sm:$0xff] %v799
    %877 = vst [vmem:[#allocation2 + $0x108] sm:$0xff] 0.0
    %878 = vst [vmem:[#allocation2 + $0x110] sm:$0xff] %v800
    %879 = vst [vmem:[#allocation2 + $0x118] sm:$0xff] %v801
    %880 = vst [vmem:[#allocation2 + $0x120] sm:$0xff] 0.0
    %881 = vst [vmem:[#allocation2 + $0x128] sm:$0xff] %v802
    %882 = vst [vmem:[#allocation2 + $0x130] sm:$0xff] %v803
    %883 = vst [vmem:[#allocation2 + $0x138] sm:$0xff] 0.0
    %884 = vst [vmem:[#allocation2 + $0x140] sm:$0xff] %v804
    %885 = vst [vmem:[#allocation2 + $0x148] sm:$0xff] %v805
    %886 = vst [vmem:[#allocation2 + $0x150] sm:$0xff] 0.0
    %887 = vst [vmem:[#allocation2 + $0x158] sm:$0xff] %v806
    %888 = vst [vmem:[#allocation2 + $0x160] sm:$0xff] %v807
    %889 = vst [vmem:[#allocation2 + $0x168] sm:$0xff] 0.0
    %890 = vst [vmem:[#allocation2 + $0x170] sm:$0xff] %v808
    %891 = vst [vmem:[#allocation2 + $0x178] sm:$0xff] %v809
    %892 = vst [vmem:[#allocation2 + $0x180] sm:$0xff] 0.0
    %893 = vst [vmem:[#allocation2 + $0x188] sm:$0xff] %v810
    %894 = vst [vmem:[#allocation2 + $0x190] sm:$0xff] %v811
    %895 = vst [vmem:[#allocation2 + $0x198] sm:$0xff] 0.0
    %896 = vst [vmem:[#allocation2 + $0x1a0] sm:$0xff] 0.0
    %897 = vst [vmem:[#allocation2 + $0x1a8] sm:$0xff] 0.0
    %898 = vst [vmem:[#allocation2 + $0x1b0] sm:$0xff] 0.0
    %899 = vst [vmem:[#allocation2 + $0x1b8] sm:$0xff] 0.0
    %900 = vst [vmem:[#allocation2 + $0x1c0] sm:$0xff] %v812
    %901 = vst [vmem:[#allocation2 + $0x1c8] sm:$0xff] %v813
    %902 = vst [vmem:[#allocation2 + $0x1d0] sm:$0xff] 0.0
    %903 = vst [vmem:[#allocation2 + $0x1d8] sm:$0xff] %v814
    %904 = vst [vmem:[#allocation2 + $0x1e0] sm:$0xff] %v815
    %905 = vst [vmem:[#allocation2 + $0x1e8] sm:$0xff] 0.0
    %906 = vst [vmem:[#allocation2 + $0x1f0] sm:$0xff] %v816
    %907 = vst [vmem:[#allocation2 + $0x1f8] sm:$0xff] %v817
    %908 = vst [vmem:[#allocation2 + $0x200] sm:$0xff] 0.0
    %909 = vst [vmem:[#allocation2 + $0x208] sm:$0xff] %v818
    %910 = vst [vmem:[#allocation2 + $0x210] sm:$0xff] %v819
    %911 = vst [vmem:[#allocation2 + $0x218] sm:$0xff] 0.0
    %912 = vst [vmem:[#allocation2 + $0x220] sm:$0xff] %v820
    %913 = vst [vmem:[#allocation2 + $0x228] sm:$0xff] %v821
    %914 = vst [vmem:[#allocation2 + $0x230] sm:$0xff] 0.0
    %915 = vst [vmem:[#allocation2 + $0x238] sm:$0xff] %v822
    %916 = vst [vmem:[#allocation2 + $0x240] sm:$0xff] %v823
    %917 = vst [vmem:[#allocation2 + $0x248] sm:$0xff] 0.0
    %918 = vst [vmem:[#allocation2 + $0x250] sm:$0xff] %v824
    %919 = vst [vmem:[#allocation2 + $0x258] sm:$0xff] %v825
    %920 = vst [vmem:[#allocation2 + $0x260] sm:$0xff] 0.0
    %921 = vst [vmem:[#allocation2 + $0x268] sm:$0xff] %v826
    %922 = vst [vmem:[#allocation2 + $0x270] sm:$0xff] %v827
    %923 = vst [vmem:[#allocation2 + $0x278] sm:$0xff] 0.0
    %924 = vst [vmem:[#allocation2 + $0x280] sm:$0xff] %v828
    %925 = vst [vmem:[#allocation2 + $0x288] sm:$0xff] %v829
    %926 = vst [vmem:[#allocation2 + $0x290] sm:$0xff] 0.0
    %927 = vst [vmem:[#allocation2 + $0x298] sm:$0xff] %v830
    %928 = vst [vmem:[#allocation2 + $0x2a0] sm:$0xff] %v831
    %929 = vst [vmem:[#allocation2 + $0x2a8] sm:$0xff] 0.0
    %930 = vst [vmem:[#allocation2 + $0x2b0] sm:$0xff] %v832
    %931 = vst [vmem:[#allocation2 + $0x2b8] sm:$0xff] %v833
    %932 = vst [vmem:[#allocation2 + $0x2c0] sm:$0xff] 0.0
    %933 = vst [vmem:[#allocation2 + $0x2c8] sm:$0xff] %v834
    %934 = vst [vmem:[#allocation2 + $0x2d0] sm:$0xff] %v835
    %935 = vst [vmem:[#allocation2 + $0x2d8] sm:$0xff] 0.0
    %936 = vst [vmem:[#allocation2 + $0x2e0] sm:$0xff] %v836
    %937 = vst [vmem:[#allocation2 + $0x2e8] sm:$0xff] %v837
    %938 = vst [vmem:[#allocation2 + $0x2f0] sm:$0xff] 0.0
    %939 = vst [vmem:[#allocation2 + $0x2f8] sm:$0xff] %v838
    %940 = vst [vmem:[#allocation2 + $0x300] sm:$0xff] %v839
    %941 = vst [vmem:[#allocation2 + $0x308] sm:$0xff] 0.0
    %942 = vst [vmem:[#allocation2 + $0x310] sm:$0xff] %v840
    %943 = vst [vmem:[#allocation2 + $0x318] sm:$0xff] %v841
    %944 = vst [vmem:[#allocation2 + $0x320] sm:$0xff] 0.0
    %945 = vst [vmem:[#allocation2 + $0x328] sm:$0xff] %v842
    %946 = vst [vmem:[#allocation2 + $0x330] sm:$0xff] %v843
    %947 = vst [vmem:[#allocation2 + $0x338] sm:$0xff] 0.0
    %948 = vst [vmem:[#allocation2 + $0x340] sm:$0xff] 0.0
    %949 = vst [vmem:[#allocation2 + $0x348] sm:$0xff] 0.0
    %950 = vst [vmem:[#allocation2 + $0x350] sm:$0xff] 0.0
    %951 = vst [vmem:[#allocation2 + $0x358] sm:$0xff] 0.0
    %v952 = vld [vmem:[#allocation8] sm:$0xff]
    %v953 = vld [vmem:[#allocation8 + $0x8] sm:$0x1]
    %v954 = vld [vmem:[#allocation2 + $0x20] sm:$0xff]
    %v955 = vld [vmem:[#allocation2 + $0x28] sm:$0xff]
    %v956 = vld [vmem:[#allocation2 + $0x38] sm:$0xff]
    %v957 = vld [vmem:[#allocation2 + $0x40] sm:$0xff]
    %v958 = vld [vmem:[#allocation2 + $0x50] sm:$0xff]
    %v959 = vld [vmem:[#allocation2 + $0x58] sm:$0xff]
    %v960 = vld [vmem:[#allocation2 + $0x68] sm:$0xff]
    %v961 = vld [vmem:[#allocation2 + $0x70] sm:$0xff]
    %v962 = vld [vmem:[#allocation2 + $0x80] sm:$0xff]
    %v963 = vld [vmem:[#allocation2 + $0x88] sm:$0xff]
    %v964 = vld [vmem:[#allocation2 + $0x98] sm:$0xff]
    %v965 = vld [vmem:[#allocation2 + $0xa0] sm:$0xff]
    %v966 = vld [vmem:[#allocation2 + $0xb0] sm:$0xff]
    %v967 = vld [vmem:[#allocation2 + $0xb8] sm:$0xff]
    %v968 = vld [vmem:[#allocation2 + $0xc8] sm:$0xff]
    %v969 = vld [vmem:[#allocation2 + $0xd0] sm:$0xff]
    %v970 = vld [vmem:[#allocation2 + $0xe0] sm:$0xff]
    %v971 = vld [vmem:[#allocation2 + $0xe8] sm:$0xff]
    %v972 = vld [vmem:[#allocation2 + $0xf8] sm:$0xff]
    %v973 = vld [vmem:[#allocation2 + $0x100] sm:$0xff]
    %v974 = vld [vmem:[#allocation2 + $0x110] sm:$0xff]
    %v975 = vld [vmem:[#allocation2 + $0x118] sm:$0xff]
    %v976 = vld [vmem:[#allocation2 + $0x128] sm:$0xff]
    %v977 = vld [vmem:[#allocation2 + $0x130] sm:$0xff]
    %v978 = vld [vmem:[#allocation2 + $0x140] sm:$0xff]
    %v979 = vld [vmem:[#allocation2 + $0x148] sm:$0xff]
    %v980 = vld [vmem:[#allocation2 + $0x158] sm:$0xff]
    %v981 = vld [vmem:[#allocation2 + $0x160] sm:$0xff]
    %v982 = vld [vmem:[#allocation2 + $0x170] sm:$0xff]
    %v983 = vld [vmem:[#allocation2 + $0x178] sm:$0xff]
    %v984 = vld [vmem:[#allocation2 + $0x188] sm:$0xff]
    %v985 = vld [vmem:[#allocation2 + $0x190] sm:$0xff]
    %v986 = vld [vmem:[#allocation2 + $0x1c0] sm:$0xff]
    %v987 = vld [vmem:[#allocation2 + $0x1c8] sm:$0xff]
    %v988 = vld [vmem:[#allocation2 + $0x1d8] sm:$0xff]
    %v989 = vld [vmem:[#allocation2 + $0x1e0] sm:$0xff]
    %v990 = vld [vmem:[#allocation2 + $0x1f0] sm:$0xff]
    %v991 = vld [vmem:[#allocation2 + $0x1f8] sm:$0xff]
    %v992 = vld [vmem:[#allocation2 + $0x208] sm:$0xff]
    %v993 = vld [vmem:[#allocation2 + $0x210] sm:$0xff]
    %v994 = vld [vmem:[#allocation2 + $0x220] sm:$0xff]
    %v995 = vld [vmem:[#allocation2 + $0x228] sm:$0xff]
    %v996 = vld [vmem:[#allocation2 + $0x238] sm:$0xff]
    %v997 = vld [vmem:[#allocation2 + $0x240] sm:$0xff]
    %v998 = vld [vmem:[#allocation2 + $0x250] sm:$0xff]
    %v999 = vld [vmem:[#allocation2 + $0x258] sm:$0xff]
    %v1000 = vld [vmem:[#allocation2 + $0x268] sm:$0xff]
    %v1001 = vld [vmem:[#allocation2 + $0x270] sm:$0xff]
    %v1002 = vld [vmem:[#allocation2 + $0x280] sm:$0xff]
    %v1003 = vld [vmem:[#allocation2 + $0x288] sm:$0xff]
    %v1004 = vld [vmem:[#allocation2 + $0x298] sm:$0xff]
    %v1005 = vld [vmem:[#allocation2 + $0x2a0] sm:$0xff]
    %v1006 = vld [vmem:[#allocation2 + $0x2b0] sm:$0xff]
    %v1007 = vld [vmem:[#allocation2 + $0x2b8] sm:$0xff]
    %v1008 = vld [vmem:[#allocation2 + $0x2c8] sm:$0xff]
    %v1009 = vld [vmem:[#allocation2 + $0x2d0] sm:$0xff]
    %v1010 = vld [vmem:[#allocation2 + $0x2e0] sm:$0xff]
    %v1011 = vld [vmem:[#allocation2 + $0x2e8] sm:$0xff]
    %v1012 = vld [vmem:[#allocation2 + $0x2f8] sm:$0xff]
    %v1013 = vld [vmem:[#allocation2 + $0x300] sm:$0xff]
    %v1014 = vld [vmem:[#allocation2 + $0x310] sm:$0xff]
    %v1015 = vld [vmem:[#allocation2 + $0x318] sm:$0xff]
    %v1016 = vld [vmem:[#allocation2 + $0x328] sm:$0xff]
    %v1017 = vld [vmem:[#allocation2 + $0x330] sm:$0xff]
    %v1018 = vperm.slane %v952, 4
    %v1019 = vmul.f32 %v954, %v1018
    %v1020 = vmul.f32 %v955, %v1018
    %v1021 = vmul.f32 %v956, %v1018
    %v1022 = vmul.f32 %v957, %v1018
    %v1023 = vmul.f32 %v958, %v1018
    %v1024 = vmul.f32 %v959, %v1018
    %v1025 = vmul.f32 %v960, %v1018
    %v1026 = vmul.f32 %v961, %v1018
    %v1027 = vmul.f32 %v962, %v1018
    %v1028 = vmul.f32 %v963, %v1018
    %v1029 = vmul.f32 %v964, %v1018
    %v1030 = vmul.f32 %v965, %v1018
    %v1031 = vmul.f32 %v966, %v1018
    %v1032 = vmul.f32 %v967, %v1018
    %v1033 = vmul.f32 %v968, %v1018
    %v1034 = vmul.f32 %v969, %v1018
    %v1035 = vmul.f32 %v970, %v1018
    %v1036 = vmul.f32 %v971, %v1018
    %v1037 = vmul.f32 %v972, %v1018
    %v1038 = vmul.f32 %v973, %v1018
    %v1039 = vmul.f32 %v974, %v1018
    %v1040 = vmul.f32 %v975, %v1018
    %v1041 = vmul.f32 %v976, %v1018
    %v1042 = vmul.f32 %v977, %v1018
    %v1043 = vmul.f32 %v978, %v1018
    %v1044 = vmul.f32 %v979, %v1018
    %v1045 = vmul.f32 %v980, %v1018
    %v1046 = vmul.f32 %v981, %v1018
    %v1047 = vmul.f32 %v982, %v1018
    %v1048 = vmul.f32 %v983, %v1018
    %v1049 = vmul.f32 %v984, %v1018
    %v1050 = vmul.f32 %v985, %v1018
    %v1051 = vmul.f32 %v986, %v1018
    %v1052 = vmul.f32 %v987, %v1018
    %v1053 = vmul.f32 %v988, %v1018
    %v1054 = vmul.f32 %v989, %v1018
    %v1055 = vmul.f32 %v990, %v1018
    %v1056 = vmul.f32 %v991, %v1018
    %v1057 = vmul.f32 %v992, %v1018
    %v1058 = vmul.f32 %v993, %v1018
    %v1059 = vmul.f32 %v994, %v1018
    %v1060 = vmul.f32 %v995, %v1018
    %v1061 = vmul.f32 %v996, %v1018
    %v1062 = vmul.f32 %v997, %v1018
    %v1063 = vmul.f32 %v998, %v1018
    %v1064 = vmul.f32 %v999, %v1018
    %v1065 = vmul.f32 %v1000, %v1018
    %v1066 = vmul.f32 %v1001, %v1018
    %v1067 = vmul.f32 %v1002, %v1018
    %v1068 = vmul.f32 %v1003, %v1018
    %v1069 = vmul.f32 %v1004, %v1018
    %v1070 = vmul.f32 %v1005, %v1018
    %v1071 = vmul.f32 %v1006, %v1018
    %v1072 = vmul.f32 %v1007, %v1018
    %v1073 = vmul.f32 %v1008, %v1018
    %v1074 = vmul.f32 %v1009, %v1018
    %v1075 = vmul.f32 %v1010, %v1018
    %v1076 = vmul.f32 %v1011, %v1018
    %v1077 = vmul.f32 %v1012, %v1018
    %v1078 = vmul.f32 %v1013, %v1018
    %v1079 = vmul.f32 %v1014, %v1018
    %v1080 = vmul.f32 %v1015, %v1018
    %v1081 = vmul.f32 %v1016, %v1018
    %v1082 = vmul.f32 %v1017, %v1018
    %v1083 = vld [vmem:[#allocation2 + $0x7] sm:$0xff]
    %v1084 = vld [vmem:[#allocation2 + $0xf] sm:$0xff]
    %v1085 = vld [vmem:[#allocation2 + $0x1f] sm:$0xff]
    %v1086 = vld [vmem:[#allocation2 + $0x27] sm:$0xff]
    %v1087 = vld [vmem:[#allocation2 + $0x37] sm:$0xff]
    %v1088 = vld [vmem:[#allocation2 + $0x3f] sm:$0xff]
    %v1089 = vld [vmem:[#allocation2 + $0x4f] sm:$0xff]
    %v1090 = vld [vmem:[#allocation2 + $0x57] sm:$0xff]
    %v1091 = vld [vmem:[#allocation2 + $0x67] sm:$0xff]
    %v1092 = vld [vmem:[#allocation2 + $0x6f] sm:$0xff]
    %v1093 = vld [vmem:[#allocation2 + $0x7f] sm:$0xff]
    %v1094 = vld [vmem:[#allocation2 + $0x87] sm:$0xff]
    %v1095 = vld [vmem:[#allocation2 + $0x97] sm:$0xff]
    %v1096 = vld [vmem:[#allocation2 + $0x9f] sm:$0xff]
    %v1097 = vld [vmem:[#allocation2 + $0xaf] sm:$0xff]
    %v1098 = vld [vmem:[#allocation2 + $0xb7] sm:$0xff]
    %v1099 = vld [vmem:[#allocation2 + $0xc7] sm:$0xff]
    %v1100 = vld [vmem:[#allocation2 + $0xcf] sm:$0xff]
    %v1101 = vld [vmem:[#allocation2 + $0xdf] sm:$0xff]
    %v1102 = vld [vmem:[#allocation2 + $0xe7] sm:$0xff]
    %v1103 = vld [vmem:[#allocation2 + $0xf7] sm:$0xff]
    %v1104 = vld [vmem:[#allocation2 + $0xff] sm:$0xff]
    %v1105 = vld [vmem:[#allocation2 + $0x10f] sm:$0xff]
    %v1106 = vld [vmem:[#allocation2 + $0x117] sm:$0xff]
    %v1107 = vld [vmem:[#allocation2 + $0x127] sm:$0xff]
    %v1108 = vld [vmem:[#allocation2 + $0x12f] sm:$0xff]
    %v1109 = vld [vmem:[#allocation2 + $0x13f] sm:$0xff]
    %v1110 = vld [vmem:[#allocation2 + $0x147] sm:$0xff]
    %v1111 = vld [vmem:[#allocation2 + $0x157] sm:$0xff]
    %v1112 = vld [vmem:[#allocation2 + $0x15f] sm:$0xff]
    %v1113 = vld [vmem:[#allocation2 + $0x16f] sm:$0xff]
    %v1114 = vld [vmem:[#allocation2 + $0x177] sm:$0xff]
    %v1115 = vld [vmem:[#allocation2 + $0x1a7] sm:$0xff]
    %v1116 = vld [vmem:[#allocation2 + $0x1af] sm:$0xff]
    %v1117 = vld [vmem:[#allocation2 + $0x1bf] sm:$0xff]
    %v1118 = vld [vmem:[#allocation2 + $0x1c7] sm:$0xff]
    %v1119 = vld [vmem:[#allocation2 + $0x1d7] sm:$0xff]
    %v1120 = vld [vmem:[#allocation2 + $0x1df] sm:$0xff]
    %v1121 = vld [vmem:[#allocation2 + $0x1ef] sm:$0xff]
    %v1122 = vld [vmem:[#allocation2 + $0x1f7] sm:$0xff]
    %v1123 = vld [vmem:[#allocation2 + $0x207] sm:$0xff]
    %v1124 = vld [vmem:[#allocation2 + $0x20f] sm:$0xff]
    %v1125 = vld [vmem:[#allocation2 + $0x21f] sm:$0xff]
    %v1126 = vld [vmem:[#allocation2 + $0x227] sm:$0xff]
    %v1127 = vld [vmem:[#allocation2 + $0x237] sm:$0xff]
    %v1128 = vld [vmem:[#allocation2 + $0x23f] sm:$0xff]
    %v1129 = vld [vmem:[#allocation2 + $0x24f] sm:$0xff]
    %v1130 = vld [vmem:[#allocation2 + $0x257] sm:$0xff]
    %v1131 = vld [vmem:[#allocation2 + $0x267] sm:$0xff]
    %v1132 = vld [vmem:[#allocation2 + $0x26f] sm:$0xff]
    %v1133 = vld [vmem:[#allocation2 + $0x27f] sm:$0xff]
    %v1134 = vld [vmem:[#allocation2 + $0x287] sm:$0xff]
    %v1135 = vld [vmem:[#allocation2 + $0x297] sm:$0xff]
    %v1136 = vld [vmem:[#allocation2 + $0x29f] sm:$0xff]
    %v1137 = vld [vmem:[#allocation2 + $0x2af] sm:$0xff]
    %v1138 = vld [vmem:[#allocation2 + $0x2b7] sm:$0xff]
    %v1139 = vld [vmem:[#allocation2 + $0x2c7] sm:$0xff]
    %v1140 = vld [vmem:[#allocation2 + $0x2cf] sm:$0xff]
    %v1141 = vld [vmem:[#allocation2 + $0x2df] sm:$0xff]
    %v1142 = vld [vmem:[#allocation2 + $0x2e7] sm:$0xff]
    %v1143 = vld [vmem:[#allocation2 + $0x2f7] sm:$0xff]
    %v1144 = vld [vmem:[#allocation2 + $0x2ff] sm:$0xff]
    %v1145 = vld [vmem:[#allocation2 + $0x30f] sm:$0xff]
    %v1146 = vld [vmem:[#allocation2 + $0x317] sm:$0xff]
    %v1147 = vperm.slane %v952, 0
    %v1148 = vmul.f32 %v1083, %v1147
    %v1149 = vmul.f32 %v1084, %v1147
    %v1150 = vmul.f32 %v1085, %v1147
    %v1151 = vmul.f32 %v1086, %v1147
    %v1152 = vmul.f32 %v1087, %v1147
    %v1153 = vmul.f32 %v1088, %v1147
    %v1154 = vmul.f32 %v1089, %v1147
    %v1155 = vmul.f32 %v1090, %v1147
    %v1156 = vmul.f32 %v1091, %v1147
    %v1157 = vmul.f32 %v1092, %v1147
    %v1158 = vmul.f32 %v1093, %v1147
    %v1159 = vmul.f32 %v1094, %v1147
    %v1160 = vmul.f32 %v1095, %v1147
    %v1161 = vmul.f32 %v1096, %v1147
    %v1162 = vmul.f32 %v1097, %v1147
    %v1163 = vmul.f32 %v1098, %v1147
    %v1164 = vmul.f32 %v1099, %v1147
    %v1165 = vmul.f32 %v1100, %v1147
    %v1166 = vmul.f32 %v1101, %v1147
    %v1167 = vmul.f32 %v1102, %v1147
    %v1168 = vmul.f32 %v1103, %v1147
    %v1169 = vmul.f32 %v1104, %v1147
    %v1170 = vmul.f32 %v1105, %v1147
    %v1171 = vmul.f32 %v1106, %v1147
    %v1172 = vmul.f32 %v1107, %v1147
    %v1173 = vmul.f32 %v1108, %v1147
    %v1174 = vmul.f32 %v1109, %v1147
    %v1175 = vmul.f32 %v1110, %v1147
    %v1176 = vmul.f32 %v1111, %v1147
    %v1177 = vmul.f32 %v1112, %v1147
    %v1178 = vmul.f32 %v1113, %v1147
    %v1179 = vmul.f32 %v1114, %v1147
    %v1180 = vmul.f32 %v1115, %v1147
    %v1181 = vmul.f32 %v1116, %v1147
    %v1182 = vmul.f32 %v1117, %v1147
    %v1183 = vmul.f32 %v1118, %v1147
    %v1184 = vmul.f32 %v1119, %v1147
    %v1185 = vmul.f32 %v1120, %v1147
    %v1186 = vmul.f32 %v1121, %v1147
    %v1187 = vmul.f32 %v1122, %v1147
    %v1188 = vmul.f32 %v1123, %v1147
    %v1189 = vmul.f32 %v1124, %v1147
    %v1190 = vmul.f32 %v1125, %v1147
    %v1191 = vmul.f32 %v1126, %v1147
    %v1192 = vmul.f32 %v1127, %v1147
    %v1193 = vmul.f32 %v1128, %v1147
    %v1194 = vmul.f32 %v1129, %v1147
    %v1195 = vmul.f32 %v1130, %v1147
    %v1196 = vmul.f32 %v1131, %v1147
    %v1197 = vmul.f32 %v1132, %v1147
    %v1198 = vmul.f32 %v1133, %v1147
    %v1199 = vmul.f32 %v1134, %v1147
    %v1200 = vmul.f32 %v1135, %v1147
    %v1201 = vmul.f32 %v1136, %v1147
    %v1202 = vmul.f32 %v1137, %v1147
    %v1203 = vmul.f32 %v1138, %v1147
    %v1204 = vmul.f32 %v1139, %v1147
    %v1205 = vmul.f32 %v1140, %v1147
    %v1206 = vmul.f32 %v1141, %v1147
    %v1207 = vmul.f32 %v1142, %v1147
    %v1208 = vmul.f32 %v1143, %v1147
    %v1209 = vmul.f32 %v1144, %v1147
    %v1210 = vmul.f32 %v1145, %v1147
    %v1211 = vmul.f32 %v1146, %v1147
    %v1212 = vadd.f32 %v1019, %v1148
    %v1213 = vadd.f32 %v1020, %v1149
    %v1214 = vadd.f32 %v1021, %v1150
    %v1215 = vadd.f32 %v1022, %v1151
    %v1216 = vadd.f32 %v1023, %v1152
    %v1217 = vadd.f32 %v1024, %v1153
    %v1218 = vadd.f32 %v1025, %v1154
    %v1219 = vadd.f32 %v1026, %v1155
    %v1220 = vadd.f32 %v1027, %v1156
    %v1221 = vadd.f32 %v1028, %v1157
    %v1222 = vadd.f32 %v1029, %v1158
    %v1223 = vadd.f32 %v1030, %v1159
    %v1224 = vadd.f32 %v1031, %v1160
    %v1225 = vadd.f32 %v1032, %v1161
    %v1226 = vadd.f32 %v1033, %v1162
    %v1227 = vadd.f32 %v1034, %v1163
    %v1228 = vadd.f32 %v1035, %v1164
    %v1229 = vadd.f32 %v1036, %v1165
    %v1230 = vadd.f32 %v1037, %v1166
    %v1231 = vadd.f32 %v1038, %v1167
    %v1232 = vadd.f32 %v1039, %v1168
    %v1233 = vadd.f32 %v1040, %v1169
    %v1234 = vadd.f32 %v1041, %v1170
    %v1235 = vadd.f32 %v1042, %v1171
    %v1236 = vadd.f32 %v1043, %v1172
    %v1237 = vadd.f32 %v1044, %v1173
    %v1238 = vadd.f32 %v1045, %v1174
    %v1239 = vadd.f32 %v1046, %v1175
    %v1240 = vadd.f32 %v1047, %v1176
    %v1241 = vadd.f32 %v1048, %v1177
    %v1242 = vadd.f32 %v1049, %v1178
    %v1243 = vadd.f32 %v1050, %v1179
    %v1244 = vadd.f32 %v1051, %v1180
    %v1245 = vadd.f32 %v1052, %v1181
    %v1246 = vadd.f32 %v1053, %v1182
    %v1247 = vadd.f32 %v1054, %v1183
    %v1248 = vadd.f32 %v1055, %v1184
    %v1249 = vadd.f32 %v1056, %v1185
    %v1250 = vadd.f32 %v1057, %v1186
    %v1251 = vadd.f32 %v1058, %v1187
    %v1252 = vadd.f32 %v1059, %v1188
    %v1253 = vadd.f32 %v1060, %v1189
    %v1254 = vadd.f32 %v1061, %v1190
    %v1255 = vadd.f32 %v1062, %v1191
    %v1256 = vadd.f32 %v1063, %v1192
    %v1257 = vadd.f32 %v1064, %v1193
    %v1258 = vadd.f32 %v1065, %v1194
    %v1259 = vadd.f32 %v1066, %v1195
    %v1260 = vadd.f32 %v1067, %v1196
    %v1261 = vadd.f32 %v1068, %v1197
    %v1262 = vadd.f32 %v1069, %v1198
    %v1263 = vadd.f32 %v1070, %v1199
    %v1264 = vadd.f32 %v1071, %v1200
    %v1265 = vadd.f32 %v1072, %v1201
    %v1266 = vadd.f32 %v1073, %v1202
    %v1267 = vadd.f32 %v1074, %v1203
    %v1268 = vadd.f32 %v1075, %v1204
    %v1269 = vadd.f32 %v1076, %v1205
    %v1270 = vadd.f32 %v1077, %v1206
    %v1271 = vadd.f32 %v1078, %v1207
    %v1272 = vadd.f32 %v1079, %v1208
    %v1273 = vadd.f32 %v1080, %v1209
    %v1274 = vadd.f32 %v1081, %v1210
    %v1275 = vadd.f32 %v1082, %v1211
    %v1276 = vld [vmem:[#allocation2 + $0x8] sm:$0xff]
    %v1277 = vld [vmem:[#allocation2 + $0x10] sm:$0xff]
    %v1278 = vld [vmem:[#allocation2 + $0x1a8] sm:$0xff]
    %v1279 = vld [vmem:[#allocation2 + $0x1b0] sm:$0xff]
    %v1280 = vperm.slane %v952, 1
    %v1281 = vmul.f32 %v1276, %v1280
    %v1282 = vmul.f32 %v1277, %v1280
    %v1283 = vmul.f32 %v954, %v1280
    %v1284 = vmul.f32 %v955, %v1280
    %v1285 = vmul.f32 %v956, %v1280
    %v1286 = vmul.f32 %v957, %v1280
    %v1287 = vmul.f32 %v958, %v1280
    %v1288 = vmul.f32 %v959, %v1280
    %v1289 = vmul.f32 %v960, %v1280
    %v1290 = vmul.f32 %v961, %v1280
    %v1291 = vmul.f32 %v962, %v1280
    %v1292 = vmul.f32 %v963, %v1280
    %v1293 = vmul.f32 %v964, %v1280
    %v1294 = vmul.f32 %v965, %v1280
    %v1295 = vmul.f32 %v966, %v1280
    %v1296 = vmul.f32 %v967, %v1280
    %v1297 = vmul.f32 %v968, %v1280
    %v1298 = vmul.f32 %v969, %v1280
    %v1299 = vmul.f32 %v970, %v1280
    %v1300 = vmul.f32 %v971, %v1280
    %v1301 = vmul.f32 %v972, %v1280
    %v1302 = vmul.f32 %v973, %v1280
    %v1303 = vmul.f32 %v974, %v1280
    %v1304 = vmul.f32 %v975, %v1280
    %v1305 = vmul.f32 %v976, %v1280
    %v1306 = vmul.f32 %v977, %v1280
    %v1307 = vmul.f32 %v978, %v1280
    %v1308 = vmul.f32 %v979, %v1280
    %v1309 = vmul.f32 %v980, %v1280
    %v1310 = vmul.f32 %v981, %v1280
    %v1311 = vmul.f32 %v982, %v1280
    %v1312 = vmul.f32 %v983, %v1280
    %v1313 = vmul.f32 %v1278, %v1280
    %v1314 = vmul.f32 %v1279, %v1280
    %v1315 = vmul.f32 %v986, %v1280
    %v1316 = vmul.f32 %v987, %v1280
    %v1317 = vmul.f32 %v988, %v1280
    %v1318 = vmul.f32 %v989, %v1280
    %v1319 = vmul.f32 %v990, %v1280
    %v1320 = vmul.f32 %v991, %v1280
    %v1321 = vmul.f32 %v992, %v1280
    %v1322 = vmul.f32 %v993, %v1280
    %v1323 = vmul.f32 %v994, %v1280
    %v1324 = vmul.f32 %v995, %v1280
    %v1325 = vmul.f32 %v996, %v1280
    %v1326 = vmul.f32 %v997, %v1280
    %v1327 = vmul.f32 %v998, %v1280
    %v1328 = vmul.f32 %v999, %v1280
    %v1329 = vmul.f32 %v1000, %v1280
    %v1330 = vmul.f32 %v1001, %v1280
    %v1331 = vmul.f32 %v1002, %v1280
    %v1332 = vmul.f32 %v1003, %v1280
    %v1333 = vmul.f32 %v1004, %v1280
    %v1334 = vmul.f32 %v1005, %v1280
    %v1335 = vmul.f32 %v1006, %v1280
    %v1336 = vmul.f32 %v1007, %v1280
    %v1337 = vmul.f32 %v1008, %v1280
    %v1338 = vmul.f32 %v1009, %v1280
    %v1339 = vmul.f32 %v1010, %v1280
    %v1340 = vmul.f32 %v1011, %v1280
    %v1341 = vmul.f32 %v1012, %v1280
    %v1342 = vmul.f32 %v1013, %v1280
    %v1343 = vmul.f32 %v1014, %v1280
    %v1344 = vmul.f32 %v1015, %v1280
    %v1345 = vadd.f32 %v1212, %v1281
    %v1346 = vadd.f32 %v1213, %v1282
    %v1347 = vadd.f32 %v1214, %v1283
    %v1348 = vadd.f32 %v1215, %v1284
    %v1349 = vadd.f32 %v1216, %v1285
    %v1350 = vadd.f32 %v1217, %v1286
    %v1351 = vadd.f32 %v1218, %v1287
    %v1352 = vadd.f32 %v1219, %v1288
    %v1353 = vadd.f32 %v1220, %v1289
    %v1354 = vadd.f32 %v1221, %v1290
    %v1355 = vadd.f32 %v1222, %v1291
    %v1356 = vadd.f32 %v1223, %v1292
    %v1357 = vadd.f32 %v1224, %v1293
    %v1358 = vadd.f32 %v1225, %v1294
    %v1359 = vadd.f32 %v1226, %v1295
    %v1360 = vadd.f32 %v1227, %v1296
    %v1361 = vadd.f32 %v1228, %v1297
    %v1362 = vadd.f32 %v1229, %v1298
    %v1363 = vadd.f32 %v1230, %v1299
    %v1364 = vadd.f32 %v1231, %v1300
    %v1365 = vadd.f32 %v1232, %v1301
    %v1366 = vadd.f32 %v1233, %v1302
    %v1367 = vadd.f32 %v1234, %v1303
    %v1368 = vadd.f32 %v1235, %v1304
    %v1369 = vadd.f32 %v1236, %v1305
    %v1370 = vadd.f32 %v1237, %v1306
    %v1371 = vadd.f32 %v1238, %v1307
    %v1372 = vadd.f32 %v1239, %v1308
    %v1373 = vadd.f32 %v1240, %v1309
    %v1374 = vadd.f32 %v1241, %v1310
    %v1375 = vadd.f32 %v1242, %v1311
    %v1376 = vadd.f32 %v1243, %v1312
    %v1377 = vadd.f32 %v1244, %v1313
    %v1378 = vadd.f32 %v1245, %v1314
    %v1379 = vadd.f32 %v1246, %v1315
    %v1380 = vadd.f32 %v1247, %v1316
    %v1381 = vadd.f32 %v1248, %v1317
    %v1382 = vadd.f32 %v1249, %v1318
    %v1383 = vadd.f32 %v1250, %v1319
    %v1384 = vadd.f32 %v1251, %v1320
    %v1385 = vadd.f32 %v1252, %v1321
    %v1386 = vadd.f32 %v1253, %v1322
    %v1387 = vadd.f32 %v1254, %v1323
    %v1388 = vadd.f32 %v1255, %v1324
    %v1389 = vadd.f32 %v1256, %v1325
    %v1390 = vadd.f32 %v1257, %v1326
    %v1391 = vadd.f32 %v1258, %v1327
    %v1392 = vadd.f32 %v1259, %v1328
    %v1393 = vadd.f32 %v1260, %v1329
    %v1394 = vadd.f32 %v1261, %v1330
    %v1395 = vadd.f32 %v1262, %v1331
    %v1396 = vadd.f32 %v1263, %v1332
    %v1397 = vadd.f32 %v1264, %v1333
    %v1398 = vadd.f32 %v1265, %v1334
    %v1399 = vadd.f32 %v1266, %v1335
    %v1400 = vadd.f32 %v1267, %v1336
    %v1401 = vadd.f32 %v1268, %v1337
    %v1402 = vadd.f32 %v1269, %v1338
    %v1403 = vadd.f32 %v1270, %v1339
    %v1404 = vadd.f32 %v1271, %v1340
    %v1405 = vadd.f32 %v1272, %v1341
    %v1406 = vadd.f32 %v1273, %v1342
    %v1407 = vadd.f32 %v1274, %v1343
    %v1408 = vadd.f32 %v1275, %v1344
    %v1409 = vld [vmem:[#allocation2 + $0x9] sm:$0xff]
    %v1410 = vld [vmem:[#allocation2 + $0x11] sm:$0xff]
    %v1411 = vld [vmem:[#allocation2 + $0x21] sm:$0xff]
    %v1412 = vld [vmem:[#allocation2 + $0x29] sm:$0xff]
    %v1413 = vld [vmem:[#allocation2 + $0x39] sm:$0xff]
    %v1414 = vld [vmem:[#allocation2 + $0x41] sm:$0xff]
    %v1415 = vld [vmem:[#allocation2 + $0x51] sm:$0xff]
    %v1416 = vld [vmem:[#allocation2 + $0x59] sm:$0xff]
    %v1417 = vld [vmem:[#allocation2 + $0x69] sm:$0xff]
    %v1418 = vld [vmem:[#allocation2 + $0x71] sm:$0xff]
    %v1419 = vld [vmem:[#allocation2 + $0x81] sm:$0xff]
    %v1420 = vld [vmem:[#allocation2 + $0x89] sm:$0xff]
    %v1421 = vld [vmem:[#allocation2 + $0x99] sm:$0xff]
    %v1422 = vld [vmem:[#allocation2 + $0xa1] sm:$0xff]
    %v1423 = vld [vmem:[#allocation2 + $0xb1] sm:$0xff]
    %v1424 = vld [vmem:[#allocation2 + $0xb9] sm:$0xff]
    %v1425 = vld [vmem:[#allocation2 + $0xc9] sm:$0xff]
    %v1426 = vld [vmem:[#allocation2 + $0xd1] sm:$0xff]
    %v1427 = vld [vmem:[#allocation2 + $0xe1] sm:$0xff]
    %v1428 = vld [vmem:[#allocation2 + $0xe9] sm:$0xff]
    %v1429 = vld [vmem:[#allocation2 + $0xf9] sm:$0xff]
    %v1430 = vld [vmem:[#allocation2 + $0x101] sm:$0xff]
    %v1431 = vld [vmem:[#allocation2 + $0x111] sm:$0xff]
    %v1432 = vld [vmem:[#allocation2 + $0x119] sm:$0xff]
    %v1433 = vld [vmem:[#allocation2 + $0x129] sm:$0xff]
    %v1434 = vld [vmem:[#allocation2 + $0x131] sm:$0xff]
    %v1435 = vld [vmem:[#allocation2 + $0x141] sm:$0xff]
    %v1436 = vld [vmem:[#allocation2 + $0x149] sm:$0xff]
    %v1437 = vld [vmem:[#allocation2 + $0x159] sm:$0xff]
    %v1438 = vld [vmem:[#allocation2 + $0x161] sm:$0xff]
    %v1439 = vld [vmem:[#allocation2 + $0x171] sm:$0xff]
    %v1440 = vld [vmem:[#allocation2 + $0x179] sm:$0xff]
    %v1441 = vld [vmem:[#allocation2 + $0x1a9] sm:$0xff]
    %v1442 = vld [vmem:[#allocation2 + $0x1b1] sm:$0xff]
    %v1443 = vld [vmem:[#allocation2 + $0x1c1] sm:$0xff]
    %v1444 = vld [vmem:[#allocation2 + $0x1c9] sm:$0xff]
    %v1445 = vld [vmem:[#allocation2 + $0x1d9] sm:$0xff]
    %v1446 = vld [vmem:[#allocation2 + $0x1e1] sm:$0xff]
    %v1447 = vld [vmem:[#allocation2 + $0x1f1] sm:$0xff]
    %v1448 = vld [vmem:[#allocation2 + $0x1f9] sm:$0xff]
    %v1449 = vld [vmem:[#allocation2 + $0x209] sm:$0xff]
    %v1450 = vld [vmem:[#allocation2 + $0x211] sm:$0xff]
    %v1451 = vld [vmem:[#allocation2 + $0x221] sm:$0xff]
    %v1452 = vld [vmem:[#allocation2 + $0x229] sm:$0xff]
    %v1453 = vld [vmem:[#allocation2 + $0x239] sm:$0xff]
    %v1454 = vld [vmem:[#allocation2 + $0x241] sm:$0xff]
    %v1455 = vld [vmem:[#allocation2 + $0x251] sm:$0xff]
    %v1456 = vld [vmem:[#allocation2 + $0x259] sm:$0xff]
    %v1457 = vld [vmem:[#allocation2 + $0x269] sm:$0xff]
    %v1458 = vld [vmem:[#allocation2 + $0x271] sm:$0xff]
    %v1459 = vld [vmem:[#allocation2 + $0x281] sm:$0xff]
    %v1460 = vld [vmem:[#allocation2 + $0x289] sm:$0xff]
    %v1461 = vld [vmem:[#allocation2 + $0x299] sm:$0xff]
    %v1462 = vld [vmem:[#allocation2 + $0x2a1] sm:$0xff]
    %v1463 = vld [vmem:[#allocation2 + $0x2b1] sm:$0xff]
    %v1464 = vld [vmem:[#allocation2 + $0x2b9] sm:$0xff]
    %v1465 = vld [vmem:[#allocation2 + $0x2c9] sm:$0xff]
    %v1466 = vld [vmem:[#allocation2 + $0x2d1] sm:$0xff]
    %v1467 = vld [vmem:[#allocation2 + $0x2e1] sm:$0xff]
    %v1468 = vld [vmem:[#allocation2 + $0x2e9] sm:$0xff]
    %v1469 = vld [vmem:[#allocation2 + $0x2f9] sm:$0xff]
    %v1470 = vld [vmem:[#allocation2 + $0x301] sm:$0xff]
    %v1471 = vld [vmem:[#allocation2 + $0x311] sm:$0xff]
    %v1472 = vld [vmem:[#allocation2 + $0x319] sm:$0xff]
    %v1473 = vperm.slane %v952, 2
    %v1474 = vmul.f32 %v1409, %v1473
    %v1475 = vmul.f32 %v1410, %v1473
    %v1476 = vmul.f32 %v1411, %v1473
    %v1477 = vmul.f32 %v1412, %v1473
    %v1478 = vmul.f32 %v1413, %v1473
    %v1479 = vmul.f32 %v1414, %v1473
    %v1480 = vmul.f32 %v1415, %v1473
    %v1481 = vmul.f32 %v1416, %v1473
    %v1482 = vmul.f32 %v1417, %v1473
    %v1483 = vmul.f32 %v1418, %v1473
    %v1484 = vmul.f32 %v1419, %v1473
    %v1485 = vmul.f32 %v1420, %v1473
    %v1486 = vmul.f32 %v1421, %v1473
    %v1487 = vmul.f32 %v1422, %v1473
    %v1488 = vmul.f32 %v1423, %v1473
    %v1489 = vmul.f32 %v1424, %v1473
    %v1490 = vmul.f32 %v1425, %v1473
    %v1491 = vmul.f32 %v1426, %v1473
    %v1492 = vmul.f32 %v1427, %v1473
    %v1493 = vmul.f32 %v1428, %v1473
    %v1494 = vmul.f32 %v1429, %v1473
    %v1495 = vmul.f32 %v1430, %v1473
    %v1496 = vmul.f32 %v1431, %v1473
    %v1497 = vmul.f32 %v1432, %v1473
    %v1498 = vmul.f32 %v1433, %v1473
    %v1499 = vmul.f32 %v1434, %v1473
    %v1500 = vmul.f32 %v1435, %v1473
    %v1501 = vmul.f32 %v1436, %v1473
    %v1502 = vmul.f32 %v1437, %v1473
    %v1503 = vmul.f32 %v1438, %v1473
    %v1504 = vmul.f32 %v1439, %v1473
    %v1505 = vmul.f32 %v1440, %v1473
    %v1506 = vmul.f32 %v1441, %v1473
    %v1507 = vmul.f32 %v1442, %v1473
    %v1508 = vmul.f32 %v1443, %v1473
    %v1509 = vmul.f32 %v1444, %v1473
    %v1510 = vmul.f32 %v1445, %v1473
    %v1511 = vmul.f32 %v1446, %v1473
    %v1512 = vmul.f32 %v1447, %v1473
    %v1513 = vmul.f32 %v1448, %v1473
    %v1514 = vmul.f32 %v1449, %v1473
    %v1515 = vmul.f32 %v1450, %v1473
    %v1516 = vmul.f32 %v1451, %v1473
    %v1517 = vmul.f32 %v1452, %v1473
    %v1518 = vmul.f32 %v1453, %v1473
    %v1519 = vmul.f32 %v1454, %v1473
    %v1520 = vmul.f32 %v1455, %v1473
    %v1521 = vmul.f32 %v1456, %v1473
    %v1522 = vmul.f32 %v1457, %v1473
    %v1523 = vmul.f32 %v1458, %v1473
    %v1524 = vmul.f32 %v1459, %v1473
    %v1525 = vmul.f32 %v1460, %v1473
    %v1526 = vmul.f32 %v1461, %v1473
    %v1527 = vmul.f32 %v1462, %v1473
    %v1528 = vmul.f32 %v1463, %v1473
    %v1529 = vmul.f32 %v1464, %v1473
    %v1530 = vmul.f32 %v1465, %v1473
    %v1531 = vmul.f32 %v1466, %v1473
    %v1532 = vmul.f32 %v1467, %v1473
    %v1533 = vmul.f32 %v1468, %v1473
    %v1534 = vmul.f32 %v1469, %v1473
    %v1535 = vmul.f32 %v1470, %v1473
    %v1536 = vmul.f32 %v1471, %v1473
    %v1537 = vmul.f32 %v1472, %v1473
    %v1538 = vadd.f32 %v1345, %v1474
    %v1539 = vadd.f32 %v1346, %v1475
    %v1540 = vadd.f32 %v1347, %v1476
    %v1541 = vadd.f32 %v1348, %v1477
    %v1542 = vadd.f32 %v1349, %v1478
    %v1543 = vadd.f32 %v1350, %v1479
    %v1544 = vadd.f32 %v1351, %v1480
    %v1545 = vadd.f32 %v1352, %v1481
    %v1546 = vadd.f32 %v1353, %v1482
    %v1547 = vadd.f32 %v1354, %v1483
    %v1548 = vadd.f32 %v1355, %v1484
    %v1549 = vadd.f32 %v1356, %v1485
    %v1550 = vadd.f32 %v1357, %v1486
    %v1551 = vadd.f32 %v1358, %v1487
    %v1552 = vadd.f32 %v1359, %v1488
    %v1553 = vadd.f32 %v1360, %v1489
    %v1554 = vadd.f32 %v1361, %v1490
    %v1555 = vadd.f32 %v1362, %v1491
    %v1556 = vadd.f32 %v1363, %v1492
    %v1557 = vadd.f32 %v1364, %v1493
    %v1558 = vadd.f32 %v1365, %v1494
    %v1559 = vadd.f32 %v1366, %v1495
    %v1560 = vadd.f32 %v1367, %v1496
    %v1561 = vadd.f32 %v1368, %v1497
    %v1562 = vadd.f32 %v1369, %v1498
    %v1563 = vadd.f32 %v1370, %v1499
    %v1564 = vadd.f32 %v1371, %v1500
    %v1565 = vadd.f32 %v1372, %v1501
    %v1566 = vadd.f32 %v1373, %v1502
    %v1567 = vadd.f32 %v1374, %v1503
    %v1568 = vadd.f32 %v1375, %v1504
    %v1569 = vadd.f32 %v1376, %v1505
    %v1570 = vadd.f32 %v1377, %v1506
    %v1571 = vadd.f32 %v1378, %v1507
    %v1572 = vadd.f32 %v1379, %v1508
    %v1573 = vadd.f32 %v1380, %v1509
    %v1574 = vadd.f32 %v1381, %v1510
    %v1575 = vadd.f32 %v1382, %v1511
    %v1576 = vadd.f32 %v1383, %v1512
    %v1577 = vadd.f32 %v1384, %v1513
    %v1578 = vadd.f32 %v1385, %v1514
    %v1579 = vadd.f32 %v1386, %v1515
    %v1580 = vadd.f32 %v1387, %v1516
    %v1581 = vadd.f32 %v1388, %v1517
    %v1582 = vadd.f32 %v1389, %v1518
    %v1583 = vadd.f32 %v1390, %v1519
    %v1584 = vadd.f32 %v1391, %v1520
    %v1585 = vadd.f32 %v1392, %v1521
    %v1586 = vadd.f32 %v1393, %v1522
    %v1587 = vadd.f32 %v1394, %v1523
    %v1588 = vadd.f32 %v1395, %v1524
    %v1589 = vadd.f32 %v1396, %v1525
    %v1590 = vadd.f32 %v1397, %v1526
    %v1591 = vadd.f32 %v1398, %v1527
    %v1592 = vadd.f32 %v1399, %v1528
    %v1593 = vadd.f32 %v1400, %v1529
    %v1594 = vadd.f32 %v1401, %v1530
    %v1595 = vadd.f32 %v1402, %v1531
    %v1596 = vadd.f32 %v1403, %v1532
    %v1597 = vadd.f32 %v1404, %v1533
    %v1598 = vadd.f32 %v1405, %v1534
    %v1599 = vadd.f32 %v1406, %v1535
    %v1600 = vadd.f32 %v1407, %v1536
    %v1601 = vadd.f32 %v1408, %v1537
    %v1602 = vld [vmem:[#allocation2 + $0x187] sm:$0xff]
    %v1603 = vld [vmem:[#allocation2 + $0x18f] sm:$0xff]
    %v1604 = vld [vmem:[#allocation2 + $0x327] sm:$0xff]
    %v1605 = vld [vmem:[#allocation2 + $0x32f] sm:$0xff]
    %v1606 = vperm.slane %v952, 3
    %v1607 = vmul.f32 %v1085, %v1606
    %v1608 = vmul.f32 %v1086, %v1606
    %v1609 = vmul.f32 %v1087, %v1606
    %v1610 = vmul.f32 %v1088, %v1606
    %v1611 = vmul.f32 %v1089, %v1606
    %v1612 = vmul.f32 %v1090, %v1606
    %v1613 = vmul.f32 %v1091, %v1606
    %v1614 = vmul.f32 %v1092, %v1606
    %v1615 = vmul.f32 %v1093, %v1606
    %v1616 = vmul.f32 %v1094, %v1606
    %v1617 = vmul.f32 %v1095, %v1606
    %v1618 = vmul.f32 %v1096, %v1606
    %v1619 = vmul.f32 %v1097, %v1606
    %v1620 = vmul.f32 %v1098, %v1606
    %v1621 = vmul.f32 %v1099, %v1606
    %v1622 = vmul.f32 %v1100, %v1606
    %v1623 = vmul.f32 %v1101, %v1606
    %v1624 = vmul.f32 %v1102, %v1606
    %v1625 = vmul.f32 %v1103, %v1606
    %v1626 = vmul.f32 %v1104, %v1606
    %v1627 = vmul.f32 %v1105, %v1606
    %v1628 = vmul.f32 %v1106, %v1606
    %v1629 = vmul.f32 %v1107, %v1606
    %v1630 = vmul.f32 %v1108, %v1606
    %v1631 = vmul.f32 %v1109, %v1606
    %v1632 = vmul.f32 %v1110, %v1606
    %v1633 = vmul.f32 %v1111, %v1606
    %v1634 = vmul.f32 %v1112, %v1606
    %v1635 = vmul.f32 %v1113, %v1606
    %v1636 = vmul.f32 %v1114, %v1606
    %v1637 = vmul.f32 %v1602, %v1606
    %v1638 = vmul.f32 %v1603, %v1606
    %v1639 = vmul.f32 %v1117, %v1606
    %v1640 = vmul.f32 %v1118, %v1606
    %v1641 = vmul.f32 %v1119, %v1606
    %v1642 = vmul.f32 %v1120, %v1606
    %v1643 = vmul.f32 %v1121, %v1606
    %v1644 = vmul.f32 %v1122, %v1606
    %v1645 = vmul.f32 %v1123, %v1606
    %v1646 = vmul.f32 %v1124, %v1606
    %v1647 = vmul.f32 %v1125, %v1606
    %v1648 = vmul.f32 %v1126, %v1606
    %v1649 = vmul.f32 %v1127, %v1606
    %v1650 = vmul.f32 %v1128, %v1606
    %v1651 = vmul.f32 %v1129, %v1606
    %v1652 = vmul.f32 %v1130, %v1606
    %v1653 = vmul.f32 %v1131, %v1606
    %v1654 = vmul.f32 %v1132, %v1606
    %v1655 = vmul.f32 %v1133, %v1606
    %v1656 = vmul.f32 %v1134, %v1606
    %v1657 = vmul.f32 %v1135, %v1606
    %v1658 = vmul.f32 %v1136, %v1606
    %v1659 = vmul.f32 %v1137, %v1606
    %v1660 = vmul.f32 %v1138, %v1606
    %v1661 = vmul.f32 %v1139, %v1606
    %v1662 = vmul.f32 %v1140, %v1606
    %v1663 = vmul.f32 %v1141, %v1606
    %v1664 = vmul.f32 %v1142, %v1606
    %v1665 = vmul.f32 %v1143, %v1606
    %v1666 = vmul.f32 %v1144, %v1606
    %v1667 = vmul.f32 %v1145, %v1606
    %v1668 = vmul.f32 %v1146, %v1606
    %v1669 = vmul.f32 %v1604, %v1606
    %v1670 = vmul.f32 %v1605, %v1606
    %v1671 = vadd.f32 %v1538, %v1607
    %v1672 = vadd.f32 %v1539, %v1608
    %v1673 = vadd.f32 %v1540, %v1609
    %v1674 = vadd.f32 %v1541, %v1610
    %v1675 = vadd.f32 %v1542, %v1611
    %v1676 = vadd.f32 %v1543, %v1612
    %v1677 = vadd.f32 %v1544, %v1613
    %v1678 = vadd.f32 %v1545, %v1614
    %v1679 = vadd.f32 %v1546, %v1615
    %v1680 = vadd.f32 %v1547, %v1616
    %v1681 = vadd.f32 %v1548, %v1617
    %v1682 = vadd.f32 %v1549, %v1618
    %v1683 = vadd.f32 %v1550, %v1619
    %v1684 = vadd.f32 %v1551, %v1620
    %v1685 = vadd.f32 %v1552, %v1621
    %v1686 = vadd.f32 %v1553, %v1622
    %v1687 = vadd.f32 %v1554, %v1623
    %v1688 = vadd.f32 %v1555, %v1624
    %v1689 = vadd.f32 %v1556, %v1625
    %v1690 = vadd.f32 %v1557, %v1626
    %v1691 = vadd.f32 %v1558, %v1627
    %v1692 = vadd.f32 %v1559, %v1628
    %v1693 = vadd.f32 %v1560, %v1629
    %v1694 = vadd.f32 %v1561, %v1630
    %v1695 = vadd.f32 %v1562, %v1631
    %v1696 = vadd.f32 %v1563, %v1632
    %v1697 = vadd.f32 %v1564, %v1633
    %v1698 = vadd.f32 %v1565, %v1634
    %v1699 = vadd.f32 %v1566, %v1635
    %v1700 = vadd.f32 %v1567, %v1636
    %v1701 = vadd.f32 %v1568, %v1637
    %v1702 = vadd.f32 %v1569, %v1638
    %v1703 = vadd.f32 %v1570, %v1639
    %v1704 = vadd.f32 %v1571, %v1640
    %v1705 = vadd.f32 %v1572, %v1641
    %v1706 = vadd.f32 %v1573, %v1642
    %v1707 = vadd.f32 %v1574, %v1643
    %v1708 = vadd.f32 %v1575, %v1644
    %v1709 = vadd.f32 %v1576, %v1645
    %v1710 = vadd.f32 %v1577, %v1646
    %v1711 = vadd.f32 %v1578, %v1647
    %v1712 = vadd.f32 %v1579, %v1648
    %v1713 = vadd.f32 %v1580, %v1649
    %v1714 = vadd.f32 %v1581, %v1650
    %v1715 = vadd.f32 %v1582, %v1651
    %v1716 = vadd.f32 %v1583, %v1652
    %v1717 = vadd.f32 %v1584, %v1653
    %v1718 = vadd.f32 %v1585, %v1654
    %v1719 = vadd.f32 %v1586, %v1655
    %v1720 = vadd.f32 %v1587, %v1656
    %v1721 = vadd.f32 %v1588, %v1657
    %v1722 = vadd.f32 %v1589, %v1658
    %v1723 = vadd.f32 %v1590, %v1659
    %v1724 = vadd.f32 %v1591, %v1660
    %v1725 = vadd.f32 %v1592, %v1661
    %v1726 = vadd.f32 %v1593, %v1662
    %v1727 = vadd.f32 %v1594, %v1663
    %v1728 = vadd.f32 %v1595, %v1664
    %v1729 = vadd.f32 %v1596, %v1665
    %v1730 = vadd.f32 %v1597, %v1666
    %v1731 = vadd.f32 %v1598, %v1667
    %v1732 = vadd.f32 %v1599, %v1668
    %v1733 = vadd.f32 %v1600, %v1669
    %v1734 = vadd.f32 %v1601, %v1670
    %v1735 = vld [vmem:[#allocation2 + $0x189] sm:$0xff]
    %v1736 = vld [vmem:[#allocation2 + $0x191] sm:$0xff]
    %v1737 = vld [vmem:[#allocation2 + $0x329] sm:$0xff]
    %v1738 = vld [vmem:[#allocation2 + $0x331] sm:$0xff]
    %v1739 = vperm.slane %v952, 5
    %v1740 = vmul.f32 %v1411, %v1739
    %v1741 = vmul.f32 %v1412, %v1739
    %v1742 = vmul.f32 %v1413, %v1739
    %v1743 = vmul.f32 %v1414, %v1739
    %v1744 = vmul.f32 %v1415, %v1739
    %v1745 = vmul.f32 %v1416, %v1739
    %v1746 = vmul.f32 %v1417, %v1739
    %v1747 = vmul.f32 %v1418, %v1739
    %v1748 = vmul.f32 %v1419, %v1739
    %v1749 = vmul.f32 %v1420, %v1739
    %v1750 = vmul.f32 %v1421, %v1739
    %v1751 = vmul.f32 %v1422, %v1739
    %v1752 = vmul.f32 %v1423, %v1739
    %v1753 = vmul.f32 %v1424, %v1739
    %v1754 = vmul.f32 %v1425, %v1739
    %v1755 = vmul.f32 %v1426, %v1739
    %v1756 = vmul.f32 %v1427, %v1739
    %v1757 = vmul.f32 %v1428, %v1739
    %v1758 = vmul.f32 %v1429, %v1739
    %v1759 = vmul.f32 %v1430, %v1739
    %v1760 = vmul.f32 %v1431, %v1739
    %v1761 = vmul.f32 %v1432, %v1739
    %v1762 = vmul.f32 %v1433, %v1739
    %v1763 = vmul.f32 %v1434, %v1739
    %v1764 = vmul.f32 %v1435, %v1739
    %v1765 = vmul.f32 %v1436, %v1739
    %v1766 = vmul.f32 %v1437, %v1739
    %v1767 = vmul.f32 %v1438, %v1739
    %v1768 = vmul.f32 %v1439, %v1739
    %v1769 = vmul.f32 %v1440, %v1739
    %v1770 = vmul.f32 %v1735, %v1739
    %v1771 = vmul.f32 %v1736, %v1739
    %v1772 = vmul.f32 %v1443, %v1739
    %v1773 = vmul.f32 %v1444, %v1739
    %v1774 = vmul.f32 %v1445, %v1739
    %v1775 = vmul.f32 %v1446, %v1739
    %v1776 = vmul.f32 %v1447, %v1739
    %v1777 = vmul.f32 %v1448, %v1739
    %v1778 = vmul.f32 %v1449, %v1739
    %v1779 = vmul.f32 %v1450, %v1739
    %v1780 = vmul.f32 %v1451, %v1739
    %v1781 = vmul.f32 %v1452, %v1739
    %v1782 = vmul.f32 %v1453, %v1739
    %v1783 = vmul.f32 %v1454, %v1739
    %v1784 = vmul.f32 %v1455, %v1739
    %v1785 = vmul.f32 %v1456, %v1739
    %v1786 = vmul.f32 %v1457, %v1739
    %v1787 = vmul.f32 %v1458, %v1739
    %v1788 = vmul.f32 %v1459, %v1739
    %v1789 = vmul.f32 %v1460, %v1739
    %v1790 = vmul.f32 %v1461, %v1739
    %v1791 = vmul.f32 %v1462, %v1739
    %v1792 = vmul.f32 %v1463, %v1739
    %v1793 = vmul.f32 %v1464, %v1739
    %v1794 = vmul.f32 %v1465, %v1739
    %v1795 = vmul.f32 %v1466, %v1739
    %v1796 = vmul.f32 %v1467, %v1739
    %v1797 = vmul.f32 %v1468, %v1739
    %v1798 = vmul.f32 %v1469, %v1739
    %v1799 = vmul.f32 %v1470, %v1739
    %v1800 = vmul.f32 %v1471, %v1739
    %v1801 = vmul.f32 %v1472, %v1739
    %v1802 = vmul.f32 %v1737, %v1739
    %v1803 = vmul.f32 %v1738, %v1739
    %v1804 = vadd.f32 %v1671, %v1740
    %v1805 = vadd.f32 %v1672, %v1741
    %v1806 = vadd.f32 %v1673, %v1742
    %v1807 = vadd.f32 %v1674, %v1743
    %v1808 = vadd.f32 %v1675, %v1744
    %v1809 = vadd.f32 %v1676, %v1745
    %v1810 = vadd.f32 %v1677, %v1746
    %v1811 = vadd.f32 %v1678, %v1747
    %v1812 = vadd.f32 %v1679, %v1748
    %v1813 = vadd.f32 %v1680, %v1749
    %v1814 = vadd.f32 %v1681, %v1750
    %v1815 = vadd.f32 %v1682, %v1751
    %v1816 = vadd.f32 %v1683, %v1752
    %v1817 = vadd.f32 %v1684, %v1753
    %v1818 = vadd.f32 %v1685, %v1754
    %v1819 = vadd.f32 %v1686, %v1755
    %v1820 = vadd.f32 %v1687, %v1756
    %v1821 = vadd.f32 %v1688, %v1757
    %v1822 = vadd.f32 %v1689, %v1758
    %v1823 = vadd.f32 %v1690, %v1759
    %v1824 = vadd.f32 %v1691, %v1760
    %v1825 = vadd.f32 %v1692, %v1761
    %v1826 = vadd.f32 %v1693, %v1762
    %v1827 = vadd.f32 %v1694, %v1763
    %v1828 = vadd.f32 %v1695, %v1764
    %v1829 = vadd.f32 %v1696, %v1765
    %v1830 = vadd.f32 %v1697, %v1766
    %v1831 = vadd.f32 %v1698, %v1767
    %v1832 = vadd.f32 %v1699, %v1768
    %v1833 = vadd.f32 %v1700, %v1769
    %v1834 = vadd.f32 %v1701, %v1770
    %v1835 = vadd.f32 %v1702, %v1771
    %v1836 = vadd.f32 %v1703, %v1772
    %v1837 = vadd.f32 %v1704, %v1773
    %v1838 = vadd.f32 %v1705, %v1774
    %v1839 = vadd.f32 %v1706, %v1775
    %v1840 = vadd.f32 %v1707, %v1776
    %v1841 = vadd.f32 %v1708, %v1777
    %v1842 = vadd.f32 %v1709, %v1778
    %v1843 = vadd.f32 %v1710, %v1779
    %v1844 = vadd.f32 %v1711, %v1780
    %v1845 = vadd.f32 %v1712, %v1781
    %v1846 = vadd.f32 %v1713, %v1782
    %v1847 = vadd.f32 %v1714, %v1783
    %v1848 = vadd.f32 %v1715, %v1784
    %v1849 = vadd.f32 %v1716, %v1785
    %v1850 = vadd.f32 %v1717, %v1786
    %v1851 = vadd.f32 %v1718, %v1787
    %v1852 = vadd.f32 %v1719, %v1788
    %v1853 = vadd.f32 %v1720, %v1789
    %v1854 = vadd.f32 %v1721, %v1790
    %v1855 = vadd.f32 %v1722, %v1791
    %v1856 = vadd.f32 %v1723, %v1792
    %v1857 = vadd.f32 %v1724, %v1793
    %v1858 = vadd.f32 %v1725, %v1794
    %v1859 = vadd.f32 %v1726, %v1795
    %v1860 = vadd.f32 %v1727, %v1796
    %v1861 = vadd.f32 %v1728, %v1797
    %v1862 = vadd.f32 %v1729, %v1798
    %v1863 = vadd.f32 %v1730, %v1799
    %v1864 = vadd.f32 %v1731, %v1800
    %v1865 = vadd.f32 %v1732, %v1801
    %v1866 = vadd.f32 %v1733, %v1802
    %v1867 = vadd.f32 %v1734, %v1803
    %v1868 = vld [vmem:[#allocation2 + $0x19f] sm:$0xff]
    %v1869 = vld [vmem:[#allocation2 + $0x33f] sm:$0xff]
    %v1870 = vld [vmem:[#allocation2 + $0x347] sm:$0xff]
    %v1871 = vperm.slane %v952, 6
    %v1872 = vmul.f32 %v1087, %v1871
    %v1873 = vmul.f32 %v1088, %v1871
    %v1874 = vmul.f32 %v1089, %v1871
    %v1875 = vmul.f32 %v1090, %v1871
    %v1876 = vmul.f32 %v1091, %v1871
    %v1877 = vmul.f32 %v1092, %v1871
    %v1878 = vmul.f32 %v1093, %v1871
    %v1879 = vmul.f32 %v1094, %v1871
    %v1880 = vmul.f32 %v1095, %v1871
    %v1881 = vmul.f32 %v1096, %v1871
    %v1882 = vmul.f32 %v1097, %v1871
    %v1883 = vmul.f32 %v1098, %v1871
    %v1884 = vmul.f32 %v1099, %v1871
    %v1885 = vmul.f32 %v1100, %v1871
    %v1886 = vmul.f32 %v1101, %v1871
    %v1887 = vmul.f32 %v1102, %v1871
    %v1888 = vmul.f32 %v1103, %v1871
    %v1889 = vmul.f32 %v1104, %v1871
    %v1890 = vmul.f32 %v1105, %v1871
    %v1891 = vmul.f32 %v1106, %v1871
    %v1892 = vmul.f32 %v1107, %v1871
    %v1893 = vmul.f32 %v1108, %v1871
    %v1894 = vmul.f32 %v1109, %v1871
    %v1895 = vmul.f32 %v1110, %v1871
    %v1896 = vmul.f32 %v1111, %v1871
    %v1897 = vmul.f32 %v1112, %v1871
    %v1898 = vmul.f32 %v1113, %v1871
    %v1899 = vmul.f32 %v1114, %v1871
    %v1900 = vmul.f32 %v1602, %v1871
    %v1901 = vmul.f32 %v1603, %v1871
    %v1902 = vmul.f32 %v1868, %v1871
    %v1903 = vmul.f32 %v1115, %v1871
    %v1904 = vmul.f32 %v1119, %v1871
    %v1905 = vmul.f32 %v1120, %v1871
    %v1906 = vmul.f32 %v1121, %v1871
    %v1907 = vmul.f32 %v1122, %v1871
    %v1908 = vmul.f32 %v1123, %v1871
    %v1909 = vmul.f32 %v1124, %v1871
    %v1910 = vmul.f32 %v1125, %v1871
    %v1911 = vmul.f32 %v1126, %v1871
    %v1912 = vmul.f32 %v1127, %v1871
    %v1913 = vmul.f32 %v1128, %v1871
    %v1914 = vmul.f32 %v1129, %v1871
    %v1915 = vmul.f32 %v1130, %v1871
    %v1916 = vmul.f32 %v1131, %v1871
    %v1917 = vmul.f32 %v1132, %v1871
    %v1918 = vmul.f32 %v1133, %v1871
    %v1919 = vmul.f32 %v1134, %v1871
    %v1920 = vmul.f32 %v1135, %v1871
    %v1921 = vmul.f32 %v1136, %v1871
    %v1922 = vmul.f32 %v1137, %v1871
    %v1923 = vmul.f32 %v1138, %v1871
    %v1924 = vmul.f32 %v1139, %v1871
    %v1925 = vmul.f32 %v1140, %v1871
    %v1926 = vmul.f32 %v1141, %v1871
    %v1927 = vmul.f32 %v1142, %v1871
    %v1928 = vmul.f32 %v1143, %v1871
    %v1929 = vmul.f32 %v1144, %v1871
    %v1930 = vmul.f32 %v1145, %v1871
    %v1931 = vmul.f32 %v1146, %v1871
    %v1932 = vmul.f32 %v1604, %v1871
    %v1933 = vmul.f32 %v1605, %v1871
    %v1934 = vmul.f32 %v1869, %v1871
    %v1935 = vmul.f32 %v1870, %v1871
    %v1936 = vadd.f32 %v1804, %v1872
    %v1937 = vadd.f32 %v1805, %v1873
    %v1938 = vadd.f32 %v1806, %v1874
    %v1939 = vadd.f32 %v1807, %v1875
    %v1940 = vadd.f32 %v1808, %v1876
    %v1941 = vadd.f32 %v1809, %v1877
    %v1942 = vadd.f32 %v1810, %v1878
    %v1943 = vadd.f32 %v1811, %v1879
    %v1944 = vadd.f32 %v1812, %v1880
    %v1945 = vadd.f32 %v1813, %v1881
    %v1946 = vadd.f32 %v1814, %v1882
    %v1947 = vadd.f32 %v1815, %v1883
    %v1948 = vadd.f32 %v1816, %v1884
    %v1949 = vadd.f32 %v1817, %v1885
    %v1950 = vadd.f32 %v1818, %v1886
    %v1951 = vadd.f32 %v1819, %v1887
    %v1952 = vadd.f32 %v1820, %v1888
    %v1953 = vadd.f32 %v1821, %v1889
    %v1954 = vadd.f32 %v1822, %v1890
    %v1955 = vadd.f32 %v1823, %v1891
    %v1956 = vadd.f32 %v1824, %v1892
    %v1957 = vadd.f32 %v1825, %v1893
    %v1958 = vadd.f32 %v1826, %v1894
    %v1959 = vadd.f32 %v1827, %v1895
    %v1960 = vadd.f32 %v1828, %v1896
    %v1961 = vadd.f32 %v1829, %v1897
    %v1962 = vadd.f32 %v1830, %v1898
    %v1963 = vadd.f32 %v1831, %v1899
    %v1964 = vadd.f32 %v1832, %v1900
    %v1965 = vadd.f32 %v1833, %v1901
    %v1966 = vadd.f32 %v1834, %v1902
    %v1967 = vadd.f32 %v1835, %v1903
    %v1968 = vadd.f32 %v1836, %v1904
    %v1969 = vadd.f32 %v1837, %v1905
    %v1970 = vadd.f32 %v1838, %v1906
    %v1971 = vadd.f32 %v1839, %v1907
    %v1972 = vadd.f32 %v1840, %v1908
    %v1973 = vadd.f32 %v1841, %v1909
    %v1974 = vadd.f32 %v1842, %v1910
    %v1975 = vadd.f32 %v1843, %v1911
    %v1976 = vadd.f32 %v1844, %v1912
    %v1977 = vadd.f32 %v1845, %v1913
    %v1978 = vadd.f32 %v1846, %v1914
    %v1979 = vadd.f32 %v1847, %v1915
    %v1980 = vadd.f32 %v1848, %v1916
    %v1981 = vadd.f32 %v1849, %v1917
    %v1982 = vadd.f32 %v1850, %v1918
    %v1983 = vadd.f32 %v1851, %v1919
    %v1984 = vadd.f32 %v1852, %v1920
    %v1985 = vadd.f32 %v1853, %v1921
    %v1986 = vadd.f32 %v1854, %v1922
    %v1987 = vadd.f32 %v1855, %v1923
    %v1988 = vadd.f32 %v1856, %v1924
    %v1989 = vadd.f32 %v1857, %v1925
    %v1990 = vadd.f32 %v1858, %v1926
    %v1991 = vadd.f32 %v1859, %v1927
    %v1992 = vadd.f32 %v1860, %v1928
    %v1993 = vadd.f32 %v1861, %v1929
    %v1994 = vadd.f32 %v1862, %v1930
    %v1995 = vadd.f32 %v1863, %v1931
    %v1996 = vadd.f32 %v1864, %v1932
    %v1997 = vadd.f32 %v1865, %v1933
    %v1998 = vadd.f32 %v1866, %v1934
    %v1999 = vadd.f32 %v1867, %v1935
    %v2000 = vld [vmem:[#allocation2 + $0x1a0] sm:$0xff]
    %v2001 = vld [vmem:[#allocation2 + $0x340] sm:$0xff]
    %v2002 = vld [vmem:[#allocation2 + $0x348] sm:$0xff]
    %v2003 = vperm.slane %v952, 7
    %v2004 = vmul.f32 %v956, %v2003
    %v2005 = vmul.f32 %v957, %v2003
    %v2006 = vmul.f32 %v958, %v2003
    %v2007 = vmul.f32 %v959, %v2003
    %v2008 = vmul.f32 %v960, %v2003
    %v2009 = vmul.f32 %v961, %v2003
    %v2010 = vmul.f32 %v962, %v2003
    %v2011 = vmul.f32 %v963, %v2003
    %v2012 = vmul.f32 %v964, %v2003
    %v2013 = vmul.f32 %v965, %v2003
    %v2014 = vmul.f32 %v966, %v2003
    %v2015 = vmul.f32 %v967, %v2003
    %v2016 = vmul.f32 %v968, %v2003
    %v2017 = vmul.f32 %v969, %v2003
    %v2018 = vmul.f32 %v970, %v2003
    %v2019 = vmul.f32 %v971, %v2003
    %v2020 = vmul.f32 %v972, %v2003
    %v2021 = vmul.f32 %v973, %v2003
    %v2022 = vmul.f32 %v974, %v2003
    %v2023 = vmul.f32 %v975, %v2003
    %v2024 = vmul.f32 %v976, %v2003
    %v2025 = vmul.f32 %v977, %v2003
    %v2026 = vmul.f32 %v978, %v2003
    %v2027 = vmul.f32 %v979, %v2003
    %v2028 = vmul.f32 %v980, %v2003
    %v2029 = vmul.f32 %v981, %v2003
    %v2030 = vmul.f32 %v982, %v2003
    %v2031 = vmul.f32 %v983, %v2003
    %v2032 = vmul.f32 %v984, %v2003
    %v2033 = vmul.f32 %v985, %v2003
    %v2034 = vmul.f32 %v2000, %v2003
    %v2035 = vmul.f32 %v1278, %v2003
    %v2036 = vmul.f32 %v988, %v2003
    %v2037 = vmul.f32 %v989, %v2003
    %v2038 = vmul.f32 %v990, %v2003
    %v2039 = vmul.f32 %v991, %v2003
    %v2040 = vmul.f32 %v992, %v2003
    %v2041 = vmul.f32 %v993, %v2003
    %v2042 = vmul.f32 %v994, %v2003
    %v2043 = vmul.f32 %v995, %v2003
    %v2044 = vmul.f32 %v996, %v2003
    %v2045 = vmul.f32 %v997, %v2003
    %v2046 = vmul.f32 %v998, %v2003
    %v2047 = vmul.f32 %v999, %v2003
    %v2048 = vmul.f32 %v1000, %v2003
    %v2049 = vmul.f32 %v1001, %v2003
    %v2050 = vmul.f32 %v1002, %v2003
    %v2051 = vmul.f32 %v1003, %v2003
    %v2052 = vmul.f32 %v1004, %v2003
    %v2053 = vmul.f32 %v1005, %v2003
    %v2054 = vmul.f32 %v1006, %v2003
    %v2055 = vmul.f32 %v1007, %v2003
    %v2056 = vmul.f32 %v1008, %v2003
    %v2057 = vmul.f32 %v1009, %v2003
    %v2058 = vmul.f32 %v1010, %v2003
    %v2059 = vmul.f32 %v1011, %v2003
    %v2060 = vmul.f32 %v1012, %v2003
    %v2061 = vmul.f32 %v1013, %v2003
    %v2062 = vmul.f32 %v1014, %v2003
    %v2063 = vmul.f32 %v1015, %v2003
    %v2064 = vmul.f32 %v1016, %v2003
    %v2065 = vmul.f32 %v1017, %v2003
    %v2066 = vmul.f32 %v2001, %v2003
    %v2067 = vmul.f32 %v2002, %v2003
    %v2068 = vadd.f32 %v1936, %v2004
    %v2069 = vadd.f32 %v1937, %v2005
    %v2070 = vadd.f32 %v1938, %v2006
    %v2071 = vadd.f32 %v1939, %v2007
    %v2072 = vadd.f32 %v1940, %v2008
    %v2073 = vadd.f32 %v1941, %v2009
    %v2074 = vadd.f32 %v1942, %v2010
    %v2075 = vadd.f32 %v1943, %v2011
    %v2076 = vadd.f32 %v1944, %v2012
    %v2077 = vadd.f32 %v1945, %v2013
    %v2078 = vadd.f32 %v1946, %v2014
    %v2079 = vadd.f32 %v1947, %v2015
    %v2080 = vadd.f32 %v1948, %v2016
    %v2081 = vadd.f32 %v1949, %v2017
    %v2082 = vadd.f32 %v1950, %v2018
    %v2083 = vadd.f32 %v1951, %v2019
    %v2084 = vadd.f32 %v1952, %v2020
    %v2085 = vadd.f32 %v1953, %v2021
    %v2086 = vadd.f32 %v1954, %v2022
    %v2087 = vadd.f32 %v1955, %v2023
    %v2088 = vadd.f32 %v1956, %v2024
    %v2089 = vadd.f32 %v1957, %v2025
    %v2090 = vadd.f32 %v1958, %v2026
    %v2091 = vadd.f32 %v1959, %v2027
    %v2092 = vadd.f32 %v1960, %v2028
    %v2093 = vadd.f32 %v1961, %v2029
    %v2094 = vadd.f32 %v1962, %v2030
    %v2095 = vadd.f32 %v1963, %v2031
    %v2096 = vadd.f32 %v1964, %v2032
    %v2097 = vadd.f32 %v1965, %v2033
    %v2098 = vadd.f32 %v1966, %v2034
    %v2099 = vadd.f32 %v1967, %v2035
    %v2100 = vadd.f32 %v1968, %v2036
    %v2101 = vadd.f32 %v1969, %v2037
    %v2102 = vadd.f32 %v1970, %v2038
    %v2103 = vadd.f32 %v1971, %v2039
    %v2104 = vadd.f32 %v1972, %v2040
    %v2105 = vadd.f32 %v1973, %v2041
    %v2106 = vadd.f32 %v1974, %v2042
    %v2107 = vadd.f32 %v1975, %v2043
    %v2108 = vadd.f32 %v1976, %v2044
    %v2109 = vadd.f32 %v1977, %v2045
    %v2110 = vadd.f32 %v1978, %v2046
    %v2111 = vadd.f32 %v1979, %v2047
    %v2112 = vadd.f32 %v1980, %v2048
    %v2113 = vadd.f32 %v1981, %v2049
    %v2114 = vadd.f32 %v1982, %v2050
    %v2115 = vadd.f32 %v1983, %v2051
    %v2116 = vadd.f32 %v1984, %v2052
    %v2117 = vadd.f32 %v1985, %v2053
    %v2118 = vadd.f32 %v1986, %v2054
    %v2119 = vadd.f32 %v1987, %v2055
    %v2120 = vadd.f32 %v1988, %v2056
    %v2121 = vadd.f32 %v1989, %v2057
    %v2122 = vadd.f32 %v1990, %v2058
    %v2123 = vadd.f32 %v1991, %v2059
    %v2124 = vadd.f32 %v1992, %v2060
    %v2125 = vadd.f32 %v1993, %v2061
    %v2126 = vadd.f32 %v1994, %v2062
    %v2127 = vadd.f32 %v1995, %v2063
    %v2128 = vadd.f32 %v1996, %v2064
    %v2129 = vadd.f32 %v1997, %v2065
    %v2130 = vadd.f32 %v1998, %v2066
    %v2131 = vadd.f32 %v1999, %v2067
    %v2132 = vld [vmem:[#allocation2 + $0x1a1] sm:$0xff]
    %v2133 = vld [vmem:[#allocation2 + $0x341] sm:$0xff]
    %v2134 = vld [vmem:[#allocation2 + $0x349] sm:$0xff]
    %v2135 = vperm.slane %v953, 0
    %v2136 = vmul.f32 %v1413, %v2135
    %v2137 = vmul.f32 %v1414, %v2135
    %v2138 = vmul.f32 %v1415, %v2135
    %v2139 = vmul.f32 %v1416, %v2135
    %v2140 = vmul.f32 %v1417, %v2135
    %v2141 = vmul.f32 %v1418, %v2135
    %v2142 = vmul.f32 %v1419, %v2135
    %v2143 = vmul.f32 %v1420, %v2135
    %v2144 = vmul.f32 %v1421, %v2135
    %v2145 = vmul.f32 %v1422, %v2135
    %v2146 = vmul.f32 %v1423, %v2135
    %v2147 = vmul.f32 %v1424, %v2135
    %v2148 = vmul.f32 %v1425, %v2135
    %v2149 = vmul.f32 %v1426, %v2135
    %v2150 = vmul.f32 %v1427, %v2135
    %v2151 = vmul.f32 %v1428, %v2135
    %v2152 = vmul.f32 %v1429, %v2135
    %v2153 = vmul.f32 %v1430, %v2135
    %v2154 = vmul.f32 %v1431, %v2135
    %v2155 = vmul.f32 %v1432, %v2135
    %v2156 = vmul.f32 %v1433, %v2135
    %v2157 = vmul.f32 %v1434, %v2135
    %v2158 = vmul.f32 %v1435, %v2135
    %v2159 = vmul.f32 %v1436, %v2135
    %v2160 = vmul.f32 %v1437, %v2135
    %v2161 = vmul.f32 %v1438, %v2135
    %v2162 = vmul.f32 %v1439, %v2135
    %v2163 = vmul.f32 %v1440, %v2135
    %v2164 = vmul.f32 %v1735, %v2135
    %v2165 = vmul.f32 %v1736, %v2135
    %v2166 = vmul.f32 %v2132, %v2135
    %v2167 = vmul.f32 %v1441, %v2135
    %v2168 = vmul.f32 %v1445, %v2135
    %v2169 = vmul.f32 %v1446, %v2135
    %v2170 = vmul.f32 %v1447, %v2135
    %v2171 = vmul.f32 %v1448, %v2135
    %v2172 = vmul.f32 %v1449, %v2135
    %v2173 = vmul.f32 %v1450, %v2135
    %v2174 = vmul.f32 %v1451, %v2135
    %v2175 = vmul.f32 %v1452, %v2135
    %v2176 = vmul.f32 %v1453, %v2135
    %v2177 = vmul.f32 %v1454, %v2135
    %v2178 = vmul.f32 %v1455, %v2135
    %v2179 = vmul.f32 %v1456, %v2135
    %v2180 = vmul.f32 %v1457, %v2135
    %v2181 = vmul.f32 %v1458, %v2135
    %v2182 = vmul.f32 %v1459, %v2135
    %v2183 = vmul.f32 %v1460, %v2135
    %v2184 = vmul.f32 %v1461, %v2135
    %v2185 = vmul.f32 %v1462, %v2135
    %v2186 = vmul.f32 %v1463, %v2135
    %v2187 = vmul.f32 %v1464, %v2135
    %v2188 = vmul.f32 %v1465, %v2135
    %v2189 = vmul.f32 %v1466, %v2135
    %v2190 = vmul.f32 %v1467, %v2135
    %v2191 = vmul.f32 %v1468, %v2135
    %v2192 = vmul.f32 %v1469, %v2135
    %v2193 = vmul.f32 %v1470, %v2135
    %v2194 = vmul.f32 %v1471, %v2135
    %v2195 = vmul.f32 %v1472, %v2135
    %v2196 = vmul.f32 %v1737, %v2135
    %v2197 = vmul.f32 %v1738, %v2135
    %v2198 = vmul.f32 %v2133, %v2135
    %v2199 = vmul.f32 %v2134, %v2135
    %v2200 = vadd.f32 %v2068, %v2136
    %v2201 = vadd.f32 %v2069, %v2137
    %v2202 = vadd.f32 %v2070, %v2138
    %v2203 = vadd.f32 %v2071, %v2139
    %v2204 = vadd.f32 %v2072, %v2140
    %v2205 = vadd.f32 %v2073, %v2141
    %v2206 = vadd.f32 %v2074, %v2142
    %v2207 = vadd.f32 %v2075, %v2143
    %v2208 = vadd.f32 %v2076, %v2144
    %v2209 = vadd.f32 %v2077, %v2145
    %v2210 = vadd.f32 %v2078, %v2146
    %v2211 = vadd.f32 %v2079, %v2147
    %v2212 = vadd.f32 %v2080, %v2148
    %v2213 = vadd.f32 %v2081, %v2149
    %v2214 = vadd.f32 %v2082, %v2150
    %v2215 = vadd.f32 %v2083, %v2151
    %v2216 = vadd.f32 %v2084, %v2152
    %v2217 = vadd.f32 %v2085, %v2153
    %v2218 = vadd.f32 %v2086, %v2154
    %v2219 = vadd.f32 %v2087, %v2155
    %v2220 = vadd.f32 %v2088, %v2156
    %v2221 = vadd.f32 %v2089, %v2157
    %v2222 = vadd.f32 %v2090, %v2158
    %v2223 = vadd.f32 %v2091, %v2159
    %v2224 = vadd.f32 %v2092, %v2160
    %v2225 = vadd.f32 %v2093, %v2161
    %v2226 = vadd.f32 %v2094, %v2162
    %v2227 = vadd.f32 %v2095, %v2163
    %v2228 = vadd.f32 %v2096, %v2164
    %v2229 = vadd.f32 %v2097, %v2165
    %v2230 = vadd.f32 %v2098, %v2166
    %v2231 = vadd.f32 %v2099, %v2167
    %v2232 = vadd.f32 %v2100, %v2168
    %v2233 = vadd.f32 %v2101, %v2169
    %v2234 = vadd.f32 %v2102, %v2170
    %v2235 = vadd.f32 %v2103, %v2171
    %v2236 = vadd.f32 %v2104, %v2172
    %v2237 = vadd.f32 %v2105, %v2173
    %v2238 = vadd.f32 %v2106, %v2174
    %v2239 = vadd.f32 %v2107, %v2175
    %v2240 = vadd.f32 %v2108, %v2176
    %v2241 = vadd.f32 %v2109, %v2177
    %v2242 = vadd.f32 %v2110, %v2178
    %v2243 = vadd.f32 %v2111, %v2179
    %v2244 = vadd.f32 %v2112, %v2180
    %v2245 = vadd.f32 %v2113, %v2181
    %v2246 = vadd.f32 %v2114, %v2182
    %v2247 = vadd.f32 %v2115, %v2183
    %v2248 = vadd.f32 %v2116, %v2184
    %v2249 = vadd.f32 %v2117, %v2185
    %v2250 = vadd.f32 %v2118, %v2186
    %v2251 = vadd.f32 %v2119, %v2187
    %v2252 = vadd.f32 %v2120, %v2188
    %v2253 = vadd.f32 %v2121, %v2189
    %v2254 = vadd.f32 %v2122, %v2190
    %v2255 = vadd.f32 %v2123, %v2191
    %v2256 = vadd.f32 %v2124, %v2192
    %v2257 = vadd.f32 %v2125, %v2193
    %v2258 = vadd.f32 %v2126, %v2194
    %v2259 = vadd.f32 %v2127, %v2195
    %v2260 = vadd.f32 %v2128, %v2196
    %v2261 = vadd.f32 %v2129, %v2197
    %v2262 = vadd.f32 %v2130, %v2198
    %v2263 = vadd.f32 %v2131, %v2199
    %v2264 = vadd.f32 %v2200, %v2201
    %v2265 = vadd.f32 %v2264, %v2202
    %v2266 = vadd.f32 %v2265, %v2203
    %v2267 = vadd.f32 %v2266, %v2204
    %v2268 = vadd.f32 %v2267, %v2205
    %v2269 = vadd.f32 %v2268, %v2206
    %v2270 = vadd.f32 %v2269, %v2207
    %v2271 = vadd.f32 %v2270, %v2208
    %v2272 = vadd.f32 %v2271, %v2209
    %v2273 = vadd.f32 %v2272, %v2210
    %v2274 = vadd.f32 %v2273, %v2211
    %v2275 = vadd.f32 %v2274, %v2212
    %v2276 = vadd.f32 %v2275, %v2213
    %v2277 = vadd.f32 %v2276, %v2214
    %v2278 = vadd.f32 %v2277, %v2215
    %v2279 = vadd.f32 %v2278, %v2216
    %v2280 = vadd.f32 %v2279, %v2217
    %v2281 = vadd.f32 %v2280, %v2218
    %v2282 = vadd.f32 %v2281, %v2219
    %v2283 = vadd.f32 %v2282, %v2220
    %v2284 = vadd.f32 %v2283, %v2221
    %v2285 = vadd.f32 %v2284, %v2222
    %v2286 = vadd.f32 %v2285, %v2223
    %v2287 = vadd.f32 %v2286, %v2224
    %v2288 = vadd.f32 %v2287, %v2225
    %v2289 = vadd.f32 %v2288, %v2226
    %v2290 = vadd.f32 %v2289, %v2227
    %v2291 = vadd.f32 %v2290, %v2228
    %v2292 = vadd.f32 %v2291, %v2229
    %v2293 = vadd.f32 %v2292, %v2230
    %v2294 = vadd.f32 %v2293, %v2231
    %v2295 = vadd.f32 %v2294, %v2232
    %v2296 = vadd.f32 %v2295, %v2233
    %v2297 = vadd.f32 %v2296, %v2234
    %v2298 = vadd.f32 %v2297, %v2235
    %v2299 = vadd.f32 %v2298, %v2236
    %v2300 = vadd.f32 %v2299, %v2237
    %v2301 = vadd.f32 %v2300, %v2238
    %v2302 = vadd.f32 %v2301, %v2239
    %v2303 = vadd.f32 %v2302, %v2240
    %v2304 = vadd.f32 %v2303, %v2241
    %v2305 = vadd.f32 %v2304, %v2242
    %v2306 = vadd.f32 %v2305, %v2243
    %v2307 = vadd.f32 %v2306, %v2244
    %v2308 = vadd.f32 %v2307, %v2245
    %v2309 = vadd.f32 %v2308, %v2246
    %v2310 = vadd.f32 %v2309, %v2247
    %v2311 = vadd.f32 %v2310, %v2248
    %v2312 = vadd.f32 %v2311, %v2249
    %v2313 = vadd.f32 %v2312, %v2250
    %v2314 = vadd.f32 %v2313, %v2251
    %v2315 = vadd.f32 %v2314, %v2252
    %v2316 = vadd.f32 %v2315, %v2253
    %v2317 = vadd.f32 %v2316, %v2254
    %v2318 = vadd.f32 %v2317, %v2255
    %v2319 = vadd.f32 %v2318, %v2256
    %v2320 = vadd.f32 %v2319, %v2257
    %v2321 = vadd.f32 %v2320, %v2258
    %v2322 = vadd.f32 %v2321, %v2259
    %v2323 = vadd.f32 %v2322, %v2260
    %v2324 = vadd.f32 %v2323, %v2261
    %v2325 = vadd.f32 %v2324, %v2262
    %v2326 = vadd.f32 %v2325, %v2263
    %v2327 = vrot.slane %v2326, 4
    %v2328 = vadd.f32 %v2326, %v2327
    %v2329 = vrot.slane %v2328, 2
    %v2330 = vadd.f32 %v2328, %v2329
    %v2331 = vrot.slane %v2330, 1
    %v2332 = vadd.f32 %v2330, %v2331
    %v2333 = vmul.f32 %v2332, 0.001953125
    %v2334 = vmul.f32 %v2200, %v2200
    %v2335 = vmul.f32 %v2201, %v2201
    %v2336 = vmul.f32 %v2202, %v2202
    %v2337 = vmul.f32 %v2203, %v2203
    %v2338 = vmul.f32 %v2204, %v2204
    %v2339 = vmul.f32 %v2205, %v2205
    %v2340 = vmul.f32 %v2206, %v2206
    %v2341 = vmul.f32 %v2207, %v2207
    %v2342 = vmul.f32 %v2208, %v2208
    %v2343 = vmul.f32 %v2209, %v2209
    %v2344 = vmul.f32 %v2210, %v2210
    %v2345 = vmul.f32 %v2211, %v2211
    %v2346 = vmul.f32 %v2212, %v2212
    %v2347 = vmul.f32 %v2213, %v2213
    %v2348 = vmul.f32 %v2214, %v2214
    %v2349 = vmul.f32 %v2215, %v2215
    %v2350 = vmul.f32 %v2216, %v2216
    %v2351 = vmul.f32 %v2217, %v2217
    %v2352 = vmul.f32 %v2218, %v2218
    %v2353 = vmul.f32 %v2219, %v2219
    %v2354 = vmul.f32 %v2220, %v2220
    %v2355 = vmul.f32 %v2221, %v2221
    %v2356 = vmul.f32 %v2222, %v2222
    %v2357 = vmul.f32 %v2223, %v2223
    %v2358 = vmul.f32 %v2224, %v2224
    %v2359 = vmul.f32 %v2225, %v2225
    %v2360 = vmul.f32 %v2226, %v2226
    %v2361 = vmul.f32 %v2227, %v2227
    %v2362 = vmul.f32 %v2228, %v2228
    %v2363 = vmul.f32 %v2229, %v2229
    %v2364 = vmul.f32 %v2230, %v2230
    %v2365 = vmul.f32 %v2231, %v2231
    %v2366 = vmul.f32 %v2232, %v2232
    %v2367 = vmul.f32 %v2233, %v2233
    %v2368 = vmul.f32 %v2234, %v2234
    %v2369 = vmul.f32 %v2235, %v2235
    %v2370 = vmul.f32 %v2236, %v2236
    %v2371 = vmul.f32 %v2237, %v2237
    %v2372 = vmul.f32 %v2238, %v2238
    %v2373 = vmul.f32 %v2239, %v2239
    %v2374 = vmul.f32 %v2240, %v2240
    %v2375 = vmul.f32 %v2241, %v2241
    %v2376 = vmul.f32 %v2242, %v2242
    %v2377 = vmul.f32 %v2243, %v2243
    %v2378 = vmul.f32 %v2244, %v2244
    %v2379 = vmul.f32 %v2245, %v2245
    %v2380 = vmul.f32 %v2246, %v2246
    %v2381 = vmul.f32 %v2247, %v2247
    %v2382 = vmul.f32 %v2248, %v2248
    %v2383 = vmul.f32 %v2249, %v2249
    %v2384 = vmul.f32 %v2250, %v2250
    %v2385 = vmul.f32 %v2251, %v2251
    %v2386 = vmul.f32 %v2252, %v2252
    %v2387 = vmul.f32 %v2253, %v2253
    %v2388 = vmul.f32 %v2254, %v2254
    %v2389 = vmul.f32 %v2255, %v2255
    %v2390 = vmul.f32 %v2256, %v2256
    %v2391 = vmul.f32 %v2257, %v2257
    %v2392 = vmul.f32 %v2258, %v2258
    %v2393 = vmul.f32 %v2259, %v2259
    %v2394 = vmul.f32 %v2260, %v2260
    %v2395 = vmul.f32 %v2261, %v2261
    %v2396 = vmul.f32 %v2262, %v2262
    %v2397 = vmul.f32 %v2263, %v2263
    %v2398 = vadd.f32 %v2334, %v2335
    %v2399 = vadd.f32 %v2398, %v2336
    %v2400 = vadd.f32 %v2399, %v2337
    %v2401 = vadd.f32 %v2400, %v2338
    %v2402 = vadd.f32 %v2401, %v2339
    %v2403 = vadd.f32 %v2402, %v2340
    %v2404 = vadd.f32 %v2403, %v2341
    %v2405 = vadd.f32 %v2404, %v2342
    %v2406 = vadd.f32 %v2405, %v2343
    %v2407 = vadd.f32 %v2406, %v2344
    %v2408 = vadd.f32 %v2407, %v2345
    %v2409 = vadd.f32 %v2408, %v2346
    %v2410 = vadd.f32 %v2409, %v2347
    %v2411 = vadd.f32 %v2410, %v2348
    %v2412 = vadd.f32 %v2411, %v2349
    %v2413 = vadd.f32 %v2412, %v2350
    %v2414 = vadd.f32 %v2413, %v2351
    %v2415 = vadd.f32 %v2414, %v2352
    %v2416 = vadd.f32 %v2415, %v2353
    %v2417 = vadd.f32 %v2416, %v2354
    %v2418 = vadd.f32 %v2417, %v2355
    %v2419 = vadd.f32 %v2418, %v2356
    %v2420 = vadd.f32 %v2419, %v2357
    %v2421 = vadd.f32 %v2420, %v2358
    %v2422 = vadd.f32 %v2421, %v2359
    %v2423 = vadd.f32 %v2422, %v2360
    %v2424 = vadd.f32 %v2423, %v2361
    %v2425 = vadd.f32 %v2424, %v2362
    %v2426 = vadd.f32 %v2425, %v2363
    %v2427 = vadd.f32 %v2426, %v2364
    %v2428 = vadd.f32 %v2427, %v2365
    %v2429 = vadd.f32 %v2428, %v2366
    %v2430 = vadd.f32 %v2429, %v2367
    %v2431 = vadd.f32 %v2430, %v2368
    %v2432 = vadd.f32 %v2431, %v2369
    %v2433 = vadd.f32 %v2432, %v2370
    %v2434 = vadd.f32 %v2433, %v2371
    %v2435 = vadd.f32 %v2434, %v2372
    %v2436 = vadd.f32 %v2435, %v2373
    %v2437 = vadd.f32 %v2436, %v2374
    %v2438 = vadd.f32 %v2437, %v2375
    %v2439 = vadd.f32 %v2438, %v2376
    %v2440 = vadd.f32 %v2439, %v2377
    %v2441 = vadd.f32 %v2440, %v2378
    %v2442 = vadd.f32 %v2441, %v2379
    %v2443 = vadd.f32 %v2442, %v2380
    %v2444 = vadd.f32 %v2443, %v2381
    %v2445 = vadd.f32 %v2444, %v2382
    %v2446 = vadd.f32 %v2445, %v2383
    %v2447 = vadd.f32 %v2446, %v2384
    %v2448 = vadd.f32 %v2447, %v2385
    %v2449 = vadd.f32 %v2448, %v2386
    %v2450 = vadd.f32 %v2449, %v2387
    %v2451 = vadd.f32 %v2450, %v2388
    %v2452 = vadd.f32 %v2451, %v2389
    %v2453 = vadd.f32 %v2452, %v2390
    %v2454 = vadd.f32 %v2453, %v2391
    %v2455 = vadd.f32 %v2454, %v2392
    %v2456 = vadd.f32 %v2455, %v2393
    %v2457 = vadd.f32 %v2456, %v2394
    %v2458 = vadd.f32 %v2457, %v2395
    %v2459 = vadd.f32 %v2458, %v2396
    %v2460 = vadd.f32 %v2459, %v2397
    %v2461 = vrot.slane %v2460, 4
    %v2462 = vadd.f32 %v2460, %v2461
    %v2463 = vrot.slane %v2462, 2
    %v2464 = vadd.f32 %v2462, %v2463
    %v2465 = vrot.slane %v2464, 1
    %v2466 = vadd.f32 %v2464, %v2465
    %v2467 = vmul.f32 %v2466, 0.001953125
    %v2468 = vmul.f32 %v2333, %v2333
    %v2469 = vsub.f32 %v2467, %v2468
    %v2470 = vmax.f32 %v2469, 0.0
    %v2471 = vsub.f32 %v2200, %v2333
    %v2472 = vsub.f32 %v2201, %v2333
    %v2473 = vsub.f32 %v2202, %v2333
    %v2474 = vsub.f32 %v2203, %v2333
    %v2475 = vsub.f32 %v2204, %v2333
    %v2476 = vsub.f32 %v2205, %v2333
    %v2477 = vsub.f32 %v2206, %v2333
    %v2478 = vsub.f32 %v2207, %v2333
    %v2479 = vsub.f32 %v2208, %v2333
    %v2480 = vsub.f32 %v2209, %v2333
    %v2481 = vsub.f32 %v2210, %v2333
    %v2482 = vsub.f32 %v2211, %v2333
    %v2483 = vsub.f32 %v2212, %v2333
    %v2484 = vsub.f32 %v2213, %v2333
    %v2485 = vsub.f32 %v2214, %v2333
    %v2486 = vsub.f32 %v2215, %v2333
    %v2487 = vsub.f32 %v2216, %v2333
    %v2488 = vsub.f32 %v2217, %v2333
    %v2489 = vsub.f32 %v2218, %v2333
    %v2490 = vsub.f32 %v2219, %v2333
    %v2491 = vsub.f32 %v2220, %v2333
    %v2492 = vsub.f32 %v2221, %v2333
    %v2493 = vsub.f32 %v2222, %v2333
    %v2494 = vsub.f32 %v2223, %v2333
    %v2495 = vsub.f32 %v2224, %v2333
    %v2496 = vsub.f32 %v2225, %v2333
    %v2497 = vsub.f32 %v2226, %v2333
    %v2498 = vsub.f32 %v2227, %v2333
    %v2499 = vsub.f32 %v2228, %v2333
    %v2500 = vsub.f32 %v2229, %v2333
    %v2501 = vsub.f32 %v2230, %v2333
    %v2502 = vsub.f32 %v2231, %v2333
    %v2503 = vsub.f32 %v2232, %v2333
    %v2504 = vsub.f32 %v2233, %v2333
    %v2505 = vsub.f32 %v2234, %v2333
    %v2506 = vsub.f32 %v2235, %v2333
    %v2507 = vsub.f32 %v2236, %v2333
    %v2508 = vsub.f32 %v2237, %v2333
    %v2509 = vsub.f32 %v2238, %v2333
    %v2510 = vsub.f32 %v2239, %v2333
    %v2511 = vsub.f32 %v2240, %v2333
    %v2512 = vsub.f32 %v2241, %v2333
    %v2513 = vsub.f32 %v2242, %v2333
    %v2514 = vsub.f32 %v2243, %v2333
    %v2515 = vsub.f32 %v2244, %v2333
    %v2516 = vsub.f32 %v2245, %v2333
    %v2517 = vsub.f32 %v2246, %v2333
    %v2518 = vsub.f32 %v2247, %v2333
    %v2519 = vsub.f32 %v2248, %v2333
    %v2520 = vsub.f32 %v2249, %v2333
    %v2521 = vsub.f32 %v2250, %v2333
    %v2522 = vsub.f32 %v2251, %v2333
    %v2523 = vsub.f32 %v2252, %v2333
    %v2524 = vsub.f32 %v2253, %v2333
    %v2525 = vsub.f32 %v2254, %v2333
    %v2526 = vsub.f32 %v2255, %v2333
    %v2527 = vsub.f32 %v2256, %v2333
    %v2528 = vsub.f32 %v2257, %v2333
    %v2529 = vsub.f32 %v2258, %v2333
    %v2530 = vsub.f32 %v2259, %v2333
    %v2531 = vsub.f32 %v2260, %v2333
    %v2532 = vsub.f32 %v2261, %v2333
    %v2533 = vsub.f32 %v2262, %v2333
    %v2534 = vsub.f32 %v2263, %v2333
    %v2535 = vadd.f32 %v2470, 1e-05
    %v2536 = vrsqrt.pop %v2535
    %v2537 = vmul.f32 %v2536, %v2535
    %v2538 = vmul.f32 %v2537, %v2536
    %v2539 = vmul.f32 0.5, %v2538
    %v2540 = vsub.f32 1.5, %v2539
    %v2541 = vmul.f32 %v2536, %v2540
    %vm2542 = vweird.f32 %v2535
    %vm2543 = vweird.f32 %v2536
    %vm2544 = vmor %vm2542, %vm2543
    %v2545 = vsel %vm2544, %v2536, %v2541
    %v2546 = vmul.f32 %v2471, %v2545
    %v2547 = vmul.f32 %v2472, %v2545
    %v2548 = vmul.f32 %v2473, %v2545
    %v2549 = vmul.f32 %v2474, %v2545
    %v2550 = vmul.f32 %v2475, %v2545
    %v2551 = vmul.f32 %v2476, %v2545
    %v2552 = vmul.f32 %v2477, %v2545
    %v2553 = vmul.f32 %v2478, %v2545
    %v2554 = vmul.f32 %v2479, %v2545
    %v2555 = vmul.f32 %v2480, %v2545
    %v2556 = vmul.f32 %v2481, %v2545
    %v2557 = vmul.f32 %v2482, %v2545
    %v2558 = vmul.f32 %v2483, %v2545
    %v2559 = vmul.f32 %v2484, %v2545
    %v2560 = vmul.f32 %v2485, %v2545
    %v2561 = vmul.f32 %v2486, %v2545
    %v2562 = vmul.f32 %v2487, %v2545
    %v2563 = vmul.f32 %v2488, %v2545
    %v2564 = vmul.f32 %v2489, %v2545
    %v2565 = vmul.f32 %v2490, %v2545
    %v2566 = vmul.f32 %v2491, %v2545
    %v2567 = vmul.f32 %v2492, %v2545
    %v2568 = vmul.f32 %v2493, %v2545
    %v2569 = vmul.f32 %v2494, %v2545
    %v2570 = vmul.f32 %v2495, %v2545
    %v2571 = vmul.f32 %v2496, %v2545
    %v2572 = vmul.f32 %v2497, %v2545
    %v2573 = vmul.f32 %v2498, %v2545
    %v2574 = vmul.f32 %v2499, %v2545
    %v2575 = vmul.f32 %v2500, %v2545
    %v2576 = vmul.f32 %v2501, %v2545
    %v2577 = vmul.f32 %v2502, %v2545
    %v2578 = vmul.f32 %v2503, %v2545
    %v2579 = vmul.f32 %v2504, %v2545
    %v2580 = vmul.f32 %v2505, %v2545
    %v2581 = vmul.f32 %v2506, %v2545
    %v2582 = vmul.f32 %v2507, %v2545
    %v2583 = vmul.f32 %v2508, %v2545
    %v2584 = vmul.f32 %v2509, %v2545
    %v2585 = vmul.f32 %v2510, %v2545
    %v2586 = vmul.f32 %v2511, %v2545
    %v2587 = vmul.f32 %v2512, %v2545
    %v2588 = vmul.f32 %v2513, %v2545
    %v2589 = vmul.f32 %v2514, %v2545
    %v2590 = vmul.f32 %v2515, %v2545
    %v2591 = vmul.f32 %v2516, %v2545
    %v2592 = vmul.f32 %v2517, %v2545
    %v2593 = vmul.f32 %v2518, %v2545
    %v2594 = vmul.f32 %v2519, %v2545
    %v2595 = vmul.f32 %v2520, %v2545
    %v2596 = vmul.f32 %v2521, %v2545
    %v2597 = vmul.f32 %v2522, %v2545
    %v2598 = vmul.f32 %v2523, %v2545
    %v2599 = vmul.f32 %v2524, %v2545
    %v2600 = vmul.f32 %v2525, %v2545
    %v2601 = vmul.f32 %v2526, %v2545
    %v2602 = vmul.f32 %v2527, %v2545
    %v2603 = vmul.f32 %v2528, %v2545
    %v2604 = vmul.f32 %v2529, %v2545
    %v2605 = vmul.f32 %v2530, %v2545
    %v2606 = vmul.f32 %v2531, %v2545
    %v2607 = vmul.f32 %v2532, %v2545
    %v2608 = vmul.f32 %v2533, %v2545
    %v2609 = vmul.f32 %v2534, %v2545
    %v2610 = vmax.f32 %v2546, 0.0
    %v2611 = vmax.f32 %v2547, 0.0
    %v2612 = vmax.f32 %v2548, 0.0
    %v2613 = vmax.f32 %v2549, 0.0
    %v2614 = vmax.f32 %v2550, 0.0
    %v2615 = vmax.f32 %v2551, 0.0
    %v2616 = vmax.f32 %v2552, 0.0
    %v2617 = vmax.f32 %v2553, 0.0
    %v2618 = vmax.f32 %v2554, 0.0
    %v2619 = vmax.f32 %v2555, 0.0
    %v2620 = vmax.f32 %v2556, 0.0
    %v2621 = vmax.f32 %v2557, 0.0
    %v2622 = vmax.f32 %v2558, 0.0
    %v2623 = vmax.f32 %v2559, 0.0
    %v2624 = vmax.f32 %v2560, 0.0
    %v2625 = vmax.f32 %v2561, 0.0
    %v2626 = vmax.f32 %v2562, 0.0
    %v2627 = vmax.f32 %v2563, 0.0
    %v2628 = vmax.f32 %v2564, 0.0
    %v2629 = vmax.f32 %v2565, 0.0
    %v2630 = vmax.f32 %v2566, 0.0
    %v2631 = vmax.f32 %v2567, 0.0
    %v2632 = vmax.f32 %v2568, 0.0
    %v2633 = vmax.f32 %v2569, 0.0
    %v2634 = vmax.f32 %v2570, 0.0
    %v2635 = vmax.f32 %v2571, 0.0
    %v2636 = vmax.f32 %v2572, 0.0
    %v2637 = vmax.f32 %v2573, 0.0
    %v2638 = vmax.f32 %v2574, 0.0
    %v2639 = vmax.f32 %v2575, 0.0
    %v2640 = vmax.f32 %v2576, 0.0
    %v2641 = vmax.f32 %v2577, 0.0
    %v2642 = vmax.f32 %v2578, 0.0
    %v2643 = vmax.f32 %v2579, 0.0
    %v2644 = vmax.f32 %v2580, 0.0
    %v2645 = vmax.f32 %v2581, 0.0
    %v2646 = vmax.f32 %v2582, 0.0
    %v2647 = vmax.f32 %v2583, 0.0
    %v2648 = vmax.f32 %v2584, 0.0
    %v2649 = vmax.f32 %v2585, 0.0
    %v2650 = vmax.f32 %v2586, 0.0
    %v2651 = vmax.f32 %v2587, 0.0
    %v2652 = vmax.f32 %v2588, 0.0
    %v2653 = vmax.f32 %v2589, 0.0
    %v2654 = vmax.f32 %v2590, 0.0
    %v2655 = vmax.f32 %v2591, 0.0
    %v2656 = vmax.f32 %v2592, 0.0
    %v2657 = vmax.f32 %v2593, 0.0
    %v2658 = vmax.f32 %v2594, 0.0
    %v2659 = vmax.f32 %v2595, 0.0
    %v2660 = vmax.f32 %v2596, 0.0
    %v2661 = vmax.f32 %v2597, 0.0
    %v2662 = vmax.f32 %v2598, 0.0
    %v2663 = vmax.f32 %v2599, 0.0
    %v2664 = vmax.f32 %v2600, 0.0
    %v2665 = vmax.f32 %v2601, 0.0
    %v2666 = vmax.f32 %v2602, 0.0
    %v2667 = vmax.f32 %v2603, 0.0
    %v2668 = vmax.f32 %v2604, 0.0
    %v2669 = vmax.f32 %v2605, 0.0
    %v2670 = vmax.f32 %v2606, 0.0
    %v2671 = vmax.f32 %v2607, 0.0
    %v2672 = vmax.f32 %v2608, 0.0
    %v2673 = vmax.f32 %v2609, 0.0
    %v2674 = vmin.f32 %v2610, 6.0
    %v2675 = vmin.f32 %v2611, 6.0
    %v2676 = vmin.f32 %v2612, 6.0
    %v2677 = vmin.f32 %v2613, 6.0
    %v2678 = vmin.f32 %v2614, 6.0
    %v2679 = vmin.f32 %v2615, 6.0
    %v2680 = vmin.f32 %v2616, 6.0
    %v2681 = vmin.f32 %v2617, 6.0
    %v2682 = vmin.f32 %v2618, 6.0
    %v2683 = vmin.f32 %v2619, 6.0
    %v2684 = vmin.f32 %v2620, 6.0
    %v2685 = vmin.f32 %v2621, 6.0
    %v2686 = vmin.f32 %v2622, 6.0
    %v2687 = vmin.f32 %v2623, 6.0
    %v2688 = vmin.f32 %v2624, 6.0
    %v2689 = vmin.f32 %v2625, 6.0
    %v2690 = vmin.f32 %v2626, 6.0
    %v2691 = vmin.f32 %v2627, 6.0
    %v2692 = vmin.f32 %v2628, 6.0
    %v2693 = vmin.f32 %v2629, 6.0
    %v2694 = vmin.f32 %v2630, 6.0
    %v2695 = vmin.f32 %v2631, 6.0
    %v2696 = vmin.f32 %v2632, 6.0
    %v2697 = vmin.f32 %v2633, 6.0
    %v2698 = vmin.f32 %v2634, 6.0
    %v2699 = vmin.f32 %v2635, 6.0
    %v2700 = vmin.f32 %v2636, 6.0
    %v2701 = vmin.f32 %v2637, 6.0
    %v2702 = vmin.f32 %v2638, 6.0
    %v2703 = vmin.f32 %v2639, 6.0
    %v2704 = vmin.f32 %v2640, 6.0
    %v2705 = vmin.f32 %v2641, 6.0
    %v2706 = vmin.f32 %v2642, 6.0
    %v2707 = vmin.f32 %v2643, 6.0
    %v2708 = vmin.f32 %v2644, 6.0
    %v2709 = vmin.f32 %v2645, 6.0
    %v2710 = vmin.f32 %v2646, 6.0
    %v2711 = vmin.f32 %v2647, 6.0
    %v2712 = vmin.f32 %v2648, 6.0
    %v2713 = vmin.f32 %v2649, 6.0
    %v2714 = vmin.f32 %v2650, 6.0
    %v2715 = vmin.f32 %v2651, 6.0
    %v2716 = vmin.f32 %v2652, 6.0
    %v2717 = vmin.f32 %v2653, 6.0
    %v2718 = vmin.f32 %v2654, 6.0
    %v2719 = vmin.f32 %v2655, 6.0
    %v2720 = vmin.f32 %v2656, 6.0
    %v2721 = vmin.f32 %v2657, 6.0
    %v2722 = vmin.f32 %v2658, 6.0
    %v2723 = vmin.f32 %v2659, 6.0
    %v2724 = vmin.f32 %v2660, 6.0
    %v2725 = vmin.f32 %v2661, 6.0
    %v2726 = vmin.f32 %v2662, 6.0
    %v2727 = vmin.f32 %v2663, 6.0
    %v2728 = vmin.f32 %v2664, 6.0
    %v2729 = vmin.f32 %v2665, 6.0
    %v2730 = vmin.f32 %v2666, 6.0
    %v2731 = vmin.f32 %v2667, 6.0
    %v2732 = vmin.f32 %v2668, 6.0
    %v2733 = vmin.f32 %v2669, 6.0
    %v2734 = vmin.f32 %v2670, 6.0
    %v2735 = vmin.f32 %v2671, 6.0
    %v2736 = vmin.f32 %v2672, 6.0
    %v2737 = vmin.f32 %v2673, 6.0
    %v2738 = vld [vmem:[#allocation9] sm:$0xff]
    %v2739 = vld [vmem:[#allocation9 + $0x8] sm:$0xff]
    %v2740 = vld [vmem:[#allocation9 + $0x10] sm:$0xff]
    %v2741 = vld [vmem:[#allocation9 + $0x18] sm:$0xff]
    %v2742 = vld [vmem:[#allocation9 + $0x20] sm:$0xff]
    %v2743 = vld [vmem:[#allocation9 + $0x28] sm:$0xff]
    %v2744 = vld [vmem:[#allocation9 + $0x30] sm:$0xff]
    %v2745 = vld [vmem:[#allocation9 + $0x38] sm:$0xff]
    %v2746 = vld [vmem:[#allocation9 + $0x40] sm:$0xff]
    %v2747 = vld [vmem:[#allocation9 + $0x48] sm:$0xff]
    %v2748 = vld [vmem:[#allocation9 + $0x50] sm:$0xff]
    %v2749 = vld [vmem:[#allocation9 + $0x58] sm:$0xff]
    %v2750 = vld [vmem:[#allocation9 + $0x60] sm:$0xff]
    %v2751 = vld [vmem:[#allocation9 + $0x68] sm:$0xff]
    %v2752 = vld [vmem:[#allocation9 + $0x70] sm:$0xff]
    %v2753 = vld [vmem:[#allocation9 + $0x78] sm:$0xff]
    %2754 = vmatpush.msra.mxu0 %v2753
    %2755 = vmatpush.msra.mxu0 %v2752
    %2756 = vmatpush.msra.mxu0 %v2751
    %2757 = vmatpush.msra.mxu0 %v2750
    %2758 = vmatpush.msra.mxu0 %v2749
    %2759 = vmatpush.msra.mxu0 %v2748
    %2760 = vmatpush.msra.mxu0 %v2747
    %2761 = vmatpush.msra.mxu0 %v2746
    %2762 = vmatpush.msra.mxu0 %v2745
    %2763 = vmatpush.msra.mxu0 %v2744
    %2764 = vmatpush.msra.mxu0 %v2743
    %2765 = vmatpush.msra.mxu0 %v2742
    %2766 = vmatpush.msra.mxu0 %v2741
    %2767 = vmatpush.msra.mxu0 %v2740
    %2768 = vmatpush.msra.mxu0 %v2739
    %2769 = vmatpush.msra.mxu0 %v2738
    %2770 = vmatmul.f32.gmra.mxu0 %v2674
    %v2771 = vpop.f32.mrf.mxu0
    %v2772 = vadd.f32 0.0, %v2771
    %2773 = vmatmul.f32.gmra.mxu0 %v2675
    %v2774 = vpop.f32.mrf.mxu0
    %v2775 = vadd.f32 0.0, %v2774
    %2776 = vmatmul.f32.gmra.mxu0 %v2676
    %v2777 = vpop.f32.mrf.mxu0
    %v2778 = vadd.f32 0.0, %v2777
    %2779 = vmatmul.f32.gmra.mxu0 %v2677
    %v2780 = vpop.f32.mrf.mxu0
    %v2781 = vadd.f32 0.0, %v2780
    %2782 = vmatmul.f32.gmra.mxu0 %v2678
    %v2783 = vpop.f32.mrf.mxu0
    %v2784 = vadd.f32 0.0, %v2783
    %2785 = vmatmul.f32.gmra.mxu0 %v2679
    %v2786 = vpop.f32.mrf.mxu0
    %v2787 = vadd.f32 0.0, %v2786
    %2788 = vmatmul.f32.gmra.mxu0 %v2680
    %v2789 = vpop.f32.mrf.mxu0
    %v2790 = vadd.f32 0.0, %v2789
    %2791 = vmatmul.f32.gmra.mxu0 %v2681
    %v2792 = vpop.f32.mrf.mxu0
    %v2793 = vadd.f32 0.0, %v2792
    %2794 = vmatmul.f32.gmra.mxu0 %v2682
    %v2795 = vpop.f32.mrf.mxu0
    %v2796 = vadd.f32 0.0, %v2795
    %2797 = vmatmul.f32.gmra.mxu0 %v2683
    %v2798 = vpop.f32.mrf.mxu0
    %v2799 = vadd.f32 0.0, %v2798
    %2800 = vmatmul.f32.gmra.mxu0 %v2684
    %v2801 = vpop.f32.mrf.mxu0
    %v2802 = vadd.f32 0.0, %v2801
    %2803 = vmatmul.f32.gmra.mxu0 %v2685
    %v2804 = vpop.f32.mrf.mxu0
    %v2805 = vadd.f32 0.0, %v2804
    %2806 = vmatmul.f32.gmra.mxu0 %v2686
    %v2807 = vpop.f32.mrf.mxu0
    %v2808 = vadd.f32 0.0, %v2807
    %2809 = vmatmul.f32.gmra.mxu0 %v2687
    %v2810 = vpop.f32.mrf.mxu0
    %v2811 = vadd.f32 0.0, %v2810
    %2812 = vmatmul.f32.gmra.mxu0 %v2688
    %v2813 = vpop.f32.mrf.mxu0
    %v2814 = vadd.f32 0.0, %v2813
    %2815 = vmatmul.f32.gmra.mxu0 %v2689
    %v2816 = vpop.f32.mrf.mxu0
    %v2817 = vadd.f32 0.0, %v2816
    %2818 = vmatmul.f32.gmra.mxu0 %v2690
    %v2819 = vpop.f32.mrf.mxu0
    %v2820 = vadd.f32 0.0, %v2819
    %2821 = vmatmul.f32.gmra.mxu0 %v2691
    %v2822 = vpop.f32.mrf.mxu0
    %v2823 = vadd.f32 0.0, %v2822
    %2824 = vmatmul.f32.gmra.mxu0 %v2692
    %v2825 = vpop.f32.mrf.mxu0
    %v2826 = vadd.f32 0.0, %v2825
    %2827 = vmatmul.f32.gmra.mxu0 %v2693
    %v2828 = vpop.f32.mrf.mxu0
    %v2829 = vadd.f32 0.0, %v2828
    %2830 = vmatmul.f32.gmra.mxu0 %v2694
    %v2831 = vpop.f32.mrf.mxu0
    %v2832 = vadd.f32 0.0, %v2831
    %2833 = vmatmul.f32.gmra.mxu0 %v2695
    %v2834 = vpop.f32.mrf.mxu0
    %v2835 = vadd.f32 0.0, %v2834
    %2836 = vmatmul.f32.gmra.mxu0 %v2696
    %v2837 = vpop.f32.mrf.mxu0
    %v2838 = vadd.f32 0.0, %v2837
    %2839 = vmatmul.f32.gmra.mxu0 %v2697
    %v2840 = vpop.f32.mrf.mxu0
    %v2841 = vadd.f32 0.0, %v2840
    %2842 = vmatmul.f32.gmra.mxu0 %v2698
    %v2843 = vpop.f32.mrf.mxu0
    %v2844 = vadd.f32 0.0, %v2843
    %2845 = vmatmul.f32.gmra.mxu0 %v2699
    %v2846 = vpop.f32.mrf.mxu0
    %v2847 = vadd.f32 0.0, %v2846
    %2848 = vmatmul.f32.gmra.mxu0 %v2700
    %v2849 = vpop.f32.mrf.mxu0
    %v2850 = vadd.f32 0.0, %v2849
    %2851 = vmatmul.f32.gmra.mxu0 %v2701
    %v2852 = vpop.f32.mrf.mxu0
    %v2853 = vadd.f32 0.0, %v2852
    %2854 = vmatmul.f32.gmra.mxu0 %v2702
    %v2855 = vpop.f32.mrf.mxu0
    %v2856 = vadd.f32 0.0, %v2855
    %2857 = vmatmul.f32.gmra.mxu0 %v2703
    %v2858 = vpop.f32.mrf.mxu0
    %v2859 = vadd.f32 0.0, %v2858
    %2860 = vmatmul.f32.gmra.mxu0 %v2704
    %v2861 = vpop.f32.mrf.mxu0
    %v2862 = vadd.f32 0.0, %v2861
    %2863 = vmatmul.f32.gmra.mxu0 %v2705
    %v2864 = vpop.f32.mrf.mxu0
    %v2865 = vadd.f32 0.0, %v2864
    %2866 = vmatmul.f32.gmra.mxu0 %v2706
    %v2867 = vpop.f32.mrf.mxu0
    %v2868 = vadd.f32 0.0, %v2867
    %2869 = vmatmul.f32.gmra.mxu0 %v2707
    %v2870 = vpop.f32.mrf.mxu0
    %v2871 = vadd.f32 0.0, %v2870
    %2872 = vmatmul.f32.gmra.mxu0 %v2708
    %v2873 = vpop.f32.mrf.mxu0
    %v2874 = vadd.f32 0.0, %v2873
    %2875 = vmatmul.f32.gmra.mxu0 %v2709
    %v2876 = vpop.f32.mrf.mxu0
    %v2877 = vadd.f32 0.0, %v2876
    %2878 = vmatmul.f32.gmra.mxu0 %v2710
    %v2879 = vpop.f32.mrf.mxu0
    %v2880 = vadd.f32 0.0, %v2879
    %2881 = vmatmul.f32.gmra.mxu0 %v2711
    %v2882 = vpop.f32.mrf.mxu0
    %v2883 = vadd.f32 0.0, %v2882
    %2884 = vmatmul.f32.gmra.mxu0 %v2712
    %v2885 = vpop.f32.mrf.mxu0
    %v2886 = vadd.f32 0.0, %v2885
    %2887 = vmatmul.f32.gmra.mxu0 %v2713
    %v2888 = vpop.f32.mrf.mxu0
    %v2889 = vadd.f32 0.0, %v2888
    %2890 = vmatmul.f32.gmra.mxu0 %v2714
    %v2891 = vpop.f32.mrf.mxu0
    %v2892 = vadd.f32 0.0, %v2891
    %2893 = vmatmul.f32.gmra.mxu0 %v2715
    %v2894 = vpop.f32.mrf.mxu0
    %v2895 = vadd.f32 0.0, %v2894
    %2896 = vmatmul.f32.gmra.mxu0 %v2716
    %v2897 = vpop.f32.mrf.mxu0
    %v2898 = vadd.f32 0.0, %v2897
    %2899 = vmatmul.f32.gmra.mxu0 %v2717
    %v2900 = vpop.f32.mrf.mxu0
    %v2901 = vadd.f32 0.0, %v2900
    %2902 = vmatmul.f32.gmra.mxu0 %v2718
    %v2903 = vpop.f32.mrf.mxu0
    %v2904 = vadd.f32 0.0, %v2903
    %2905 = vmatmul.f32.gmra.mxu0 %v2719
    %v2906 = vpop.f32.mrf.mxu0
    %v2907 = vadd.f32 0.0, %v2906
    %2908 = vmatmul.f32.gmra.mxu0 %v2720
    %v2909 = vpop.f32.mrf.mxu0
    %v2910 = vadd.f32 0.0, %v2909
    %2911 = vmatmul.f32.gmra.mxu0 %v2721
    %v2912 = vpop.f32.mrf.mxu0
    %v2913 = vadd.f32 0.0, %v2912
    %2914 = vmatmul.f32.gmra.mxu0 %v2722
    %v2915 = vpop.f32.mrf.mxu0
    %v2916 = vadd.f32 0.0, %v2915
    %2917 = vmatmul.f32.gmra.mxu0 %v2723
    %v2918 = vpop.f32.mrf.mxu0
    %v2919 = vadd.f32 0.0, %v2918
    %2920 = vmatmul.f32.gmra.mxu0 %v2724
    %v2921 = vpop.f32.mrf.mxu0
    %v2922 = vadd.f32 0.0, %v2921
    %2923 = vmatmul.f32.gmra.mxu0 %v2725
    %v2924 = vpop.f32.mrf.mxu0
    %v2925 = vadd.f32 0.0, %v2924
    %2926 = vmatmul.f32.gmra.mxu0 %v2726
    %v2927 = vpop.f32.mrf.mxu0
    %v2928 = vadd.f32 0.0, %v2927
    %2929 = vmatmul.f32.gmra.mxu0 %v2727
    %v2930 = vpop.f32.mrf.mxu0
    %v2931 = vadd.f32 0.0, %v2930
    %2932 = vmatmul.f32.gmra.mxu0 %v2728
    %v2933 = vpop.f32.mrf.mxu0
    %v2934 = vadd.f32 0.0, %v2933
    %2935 = vmatmul.f32.gmra.mxu0 %v2729
    %v2936 = vpop.f32.mrf.mxu0
    %v2937 = vadd.f32 0.0, %v2936
    %2938 = vmatmul.f32.gmra.mxu0 %v2730
    %v2939 = vpop.f32.mrf.mxu0
    %v2940 = vadd.f32 0.0, %v2939
    %2941 = vmatmul.f32.gmra.mxu0 %v2731
    %v2942 = vpop.f32.mrf.mxu0
    %v2943 = vadd.f32 0.0, %v2942
    %2944 = vmatmul.f32.gmra.mxu0 %v2732
    %v2945 = vpop.f32.mrf.mxu0
    %v2946 = vadd.f32 0.0, %v2945
    %2947 = vmatmul.f32.gmra.mxu0 %v2733
    %v2948 = vpop.f32.mrf.mxu0
    %v2949 = vadd.f32 0.0, %v2948
    %2950 = vmatmul.f32.gmra.mxu0 %v2734
    %v2951 = vpop.f32.mrf.mxu0
    %v2952 = vadd.f32 0.0, %v2951
    %2953 = vmatmul.f32.gmra.mxu0 %v2735
    %v2954 = vpop.f32.mrf.mxu0
    %v2955 = vadd.f32 0.0, %v2954
    %2956 = vmatmul.f32.gmra.mxu0 %v2736
    %v2957 = vpop.f32.mrf.mxu0
    %v2958 = vadd.f32 0.0, %v2957
    %2959 = vmatmul.f32.gmra.mxu0 %v2737
    %v2960 = vpop.f32.mrf.mxu0
    %v2961 = vadd.f32 0.0, %v2960
    %2962 = vdwg.mxu0
    %v2963 = vadd.f32 %v2772, %v2775
    %v2964 = vadd.f32 %v2963, %v2778
    %v2965 = vadd.f32 %v2964, %v2781
    %v2966 = vadd.f32 %v2965, %v2784
    %v2967 = vadd.f32 %v2966, %v2787
    %v2968 = vadd.f32 %v2967, %v2790
    %v2969 = vadd.f32 %v2968, %v2793
    %v2970 = vadd.f32 %v2969, %v2796
    %v2971 = vadd.f32 %v2970, %v2799
    %v2972 = vadd.f32 %v2971, %v2802
    %v2973 = vadd.f32 %v2972, %v2805
    %v2974 = vadd.f32 %v2973, %v2808
    %v2975 = vadd.f32 %v2974, %v2811
    %v2976 = vadd.f32 %v2975, %v2814
    %v2977 = vadd.f32 %v2976, %v2817
    %v2978 = vadd.f32 %v2977, %v2820
    %v2979 = vadd.f32 %v2978, %v2823
    %v2980 = vadd.f32 %v2979, %v2826
    %v2981 = vadd.f32 %v2980, %v2829
    %v2982 = vadd.f32 %v2981, %v2832
    %v2983 = vadd.f32 %v2982, %v2835
    %v2984 = vadd.f32 %v2983, %v2838
    %v2985 = vadd.f32 %v2984, %v2841
    %v2986 = vadd.f32 %v2985, %v2844
    %v2987 = vadd.f32 %v2986, %v2847
    %v2988 = vadd.f32 %v2987, %v2850
    %v2989 = vadd.f32 %v2988, %v2853
    %v2990 = vadd.f32 %v2989, %v2856
    %v2991 = vadd.f32 %v2990, %v2859
    %v2992 = vadd.f32 %v2991, %v2862
    %v2993 = vadd.f32 %v2992, %v2865
    %v2994 = vadd.f32 %v2993, %v2868
    %v2995 = vadd.f32 %v2994, %v2871
    %v2996 = vadd.f32 %v2995, %v2874
    %v2997 = vadd.f32 %v2996, %v2877
    %v2998 = vadd.f32 %v2997, %v2880
    %v2999 = vadd.f32 %v2998, %v2883
    %v3000 = vadd.f32 %v2999, %v2886
    %v3001 = vadd.f32 %v3000, %v2889
    %v3002 = vadd.f32 %v3001, %v2892
    %v3003 = vadd.f32 %v3002, %v2895
    %v3004 = vadd.f32 %v3003, %v2898
    %v3005 = vadd.f32 %v3004, %v2901
    %v3006 = vadd.f32 %v3005, %v2904
    %v3007 = vadd.f32 %v3006, %v2907
    %v3008 = vadd.f32 %v3007, %v2910
    %v3009 = vadd.f32 %v3008, %v2913
    %v3010 = vadd.f32 %v3009, %v2916
    %v3011 = vadd.f32 %v3010, %v2919
    %v3012 = vadd.f32 %v3011, %v2922
    %v3013 = vadd.f32 %v3012, %v2925
    %v3014 = vadd.f32 %v3013, %v2928
    %v3015 = vadd.f32 %v3014, %v2931
    %v3016 = vadd.f32 %v3015, %v2934
    %v3017 = vadd.f32 %v3016, %v2937
    %v3018 = vadd.f32 %v3017, %v2940
    %v3019 = vadd.f32 %v3018, %v2943
    %v3020 = vadd.f32 %v3019, %v2946
    %v3021 = vadd.f32 %v3020, %v2949
    %v3022 = vadd.f32 %v3021, %v2952
    %v3023 = vadd.f32 %v3022, %v2955
    %v3024 = vadd.f32 %v3023, %v2958
    %v3025 = vadd.f32 %v3024, %v2961
    %v3026 = vrot.slane %v3025, 4
    %v3027 = vadd.f32 %v3025, %v3026
    %v3028 = vrot.slane %v3027, 2
    %v3029 = vadd.f32 %v3027, %v3028
    %v3030 = vrot.slane %v3029, 1
    %v3031 = vadd.f32 %v3029, %v3030
    %v3032 = vmul.f32 %v3031, 0.001953125
    %v3033 = vmul.f32 %v2772, %v2772
    %v3034 = vmul.f32 %v2775, %v2775
    %v3035 = vmul.f32 %v2778, %v2778
    %v3036 = vmul.f32 %v2781, %v2781
    %v3037 = vmul.f32 %v2784, %v2784
    %v3038 = vmul.f32 %v2787, %v2787
    %v3039 = vmul.f32 %v2790, %v2790
    %v3040 = vmul.f32 %v2793, %v2793
    %v3041 = vmul.f32 %v2796, %v2796
    %v3042 = vmul.f32 %v2799, %v2799
    %v3043 = vmul.f32 %v2802, %v2802
    %v3044 = vmul.f32 %v2805, %v2805
    %v3045 = vmul.f32 %v2808, %v2808
    %v3046 = vmul.f32 %v2811, %v2811
    %v3047 = vmul.f32 %v2814, %v2814
    %v3048 = vmul.f32 %v2817, %v2817
    %v3049 = vmul.f32 %v2820, %v2820
    %v3050 = vmul.f32 %v2823, %v2823
    %v3051 = vmul.f32 %v2826, %v2826
    %v3052 = vmul.f32 %v2829, %v2829
    %v3053 = vmul.f32 %v2832, %v2832
    %v3054 = vmul.f32 %v2835, %v2835
    %v3055 = vmul.f32 %v2838, %v2838
    %v3056 = vmul.f32 %v2841, %v2841
    %v3057 = vmul.f32 %v2844, %v2844
    %v3058 = vmul.f32 %v2847, %v2847
    %v3059 = vmul.f32 %v2850, %v2850
    %v3060 = vmul.f32 %v2853, %v2853
    %v3061 = vmul.f32 %v2856, %v2856
    %v3062 = vmul.f32 %v2859, %v2859
    %v3063 = vmul.f32 %v2862, %v2862
    %v3064 = vmul.f32 %v2865, %v2865
    %v3065 = vmul.f32 %v2868, %v2868
    %v3066 = vmul.f32 %v2871, %v2871
    %v3067 = vmul.f32 %v2874, %v2874
    %v3068 = vmul.f32 %v2877, %v2877
    %v3069 = vmul.f32 %v2880, %v2880
    %v3070 = vmul.f32 %v2883, %v2883
    %v3071 = vmul.f32 %v2886, %v2886
    %v3072 = vmul.f32 %v2889, %v2889
    %v3073 = vmul.f32 %v2892, %v2892
    %v3074 = vmul.f32 %v2895, %v2895
    %v3075 = vmul.f32 %v2898, %v2898
    %v3076 = vmul.f32 %v2901, %v2901
    %v3077 = vmul.f32 %v2904, %v2904
    %v3078 = vmul.f32 %v2907, %v2907
    %v3079 = vmul.f32 %v2910, %v2910
    %v3080 = vmul.f32 %v2913, %v2913
    %v3081 = vmul.f32 %v2916, %v2916
    %v3082 = vmul.f32 %v2919, %v2919
    %v3083 = vmul.f32 %v2922, %v2922
    %v3084 = vmul.f32 %v2925, %v2925
    %v3085 = vmul.f32 %v2928, %v2928
    %v3086 = vmul.f32 %v2931, %v2931
    %v3087 = vmul.f32 %v2934, %v2934
    %v3088 = vmul.f32 %v2937, %v2937
    %v3089 = vmul.f32 %v2940, %v2940
    %v3090 = vmul.f32 %v2943, %v2943
    %v3091 = vmul.f32 %v2946, %v2946
    %v3092 = vmul.f32 %v2949, %v2949
    %v3093 = vmul.f32 %v2952, %v2952
    %v3094 = vmul.f32 %v2955, %v2955
    %v3095 = vmul.f32 %v2958, %v2958
    %v3096 = vmul.f32 %v2961, %v2961
    %v3097 = vadd.f32 %v3033, %v3034
    %v3098 = vadd.f32 %v3097, %v3035
    %v3099 = vadd.f32 %v3098, %v3036
    %v3100 = vadd.f32 %v3099, %v3037
    %v3101 = vadd.f32 %v3100, %v3038
    %v3102 = vadd.f32 %v3101, %v3039
    %v3103 = vadd.f32 %v3102, %v3040
    %v3104 = vadd.f32 %v3103, %v3041
    %v3105 = vadd.f32 %v3104, %v3042
    %v3106 = vadd.f32 %v3105, %v3043
    %v3107 = vadd.f32 %v3106, %v3044
    %v3108 = vadd.f32 %v3107, %v3045
    %v3109 = vadd.f32 %v3108, %v3046
    %v3110 = vadd.f32 %v3109, %v3047
    %v3111 = vadd.f32 %v3110, %v3048
    %v3112 = vadd.f32 %v3111, %v3049
    %v3113 = vadd.f32 %v3112, %v3050
    %v3114 = vadd.f32 %v3113, %v3051
    %v3115 = vadd.f32 %v3114, %v3052
    %v3116 = vadd.f32 %v3115, %v3053
    %v3117 = vadd.f32 %v3116, %v3054
    %v3118 = vadd.f32 %v3117, %v3055
    %v3119 = vadd.f32 %v3118, %v3056
    %v3120 = vadd.f32 %v3119, %v3057
    %v3121 = vadd.f32 %v3120, %v3058
    %v3122 = vadd.f32 %v3121, %v3059
    %v3123 = vadd.f32 %v3122, %v3060
    %v3124 = vadd.f32 %v3123, %v3061
    %v3125 = vadd.f32 %v3124, %v3062
    %v3126 = vadd.f32 %v3125, %v3063
    %v3127 = vadd.f32 %v3126, %v3064
    %v3128 = vadd.f32 %v3127, %v3065
    %v3129 = vadd.f32 %v3128, %v3066
    %v3130 = vadd.f32 %v3129, %v3067
    %v3131 = vadd.f32 %v3130, %v3068
    %v3132 = vadd.f32 %v3131, %v3069
    %v3133 = vadd.f32 %v3132, %v3070
    %v3134 = vadd.f32 %v3133, %v3071
    %v3135 = vadd.f32 %v3134, %v3072
    %v3136 = vadd.f32 %v3135, %v3073
    %v3137 = vadd.f32 %v3136, %v3074
    %v3138 = vadd.f32 %v3137, %v3075
    %v3139 = vadd.f32 %v3138, %v3076
    %v3140 = vadd.f32 %v3139, %v3077
    %v3141 = vadd.f32 %v3140, %v3078
    %v3142 = vadd.f32 %v3141, %v3079
    %v3143 = vadd.f32 %v3142, %v3080
    %v3144 = vadd.f32 %v3143, %v3081
    %v3145 = vadd.f32 %v3144, %v3082
    %v3146 = vadd.f32 %v3145, %v3083
    %v3147 = vadd.f32 %v3146, %v3084
    %v3148 = vadd.f32 %v3147, %v3085
    %v3149 = vadd.f32 %v3148, %v3086
    %v3150 = vadd.f32 %v3149, %v3087
    %v3151 = vadd.f32 %v3150, %v3088
    %v3152 = vadd.f32 %v3151, %v3089
    %v3153 = vadd.f32 %v3152, %v3090
    %v3154 = vadd.f32 %v3153, %v3091
    %v3155 = vadd.f32 %v3154, %v3092
    %v3156 = vadd.f32 %v3155, %v3093
    %v3157 = vadd.f32 %v3156, %v3094
    %v3158 = vadd.f32 %v3157, %v3095
    %v3159 = vadd.f32 %v3158, %v3096
    %v3160 = vrot.slane %v3159, 4
    %v3161 = vadd.f32 %v3159, %v3160
    %v3162 = vrot.slane %v3161, 2
    %v3163 = vadd.f32 %v3161, %v3162
    %v3164 = vrot.slane %v3163, 1
    %v3165 = vadd.f32 %v3163, %v3164
    %v3166 = vmul.f32 %v3165, 0.001953125
    %v3167 = vmul.f32 %v3032, %v3032
    %v3168 = vsub.f32 %v3166, %v3167
    %v3169 = vmax.f32 %v3168, 0.0
    %v3170 = vsub.f32 %v2772, %v3032
    %v3171 = vsub.f32 %v2775, %v3032
    %v3172 = vsub.f32 %v2778, %v3032
    %v3173 = vsub.f32 %v2781, %v3032
    %v3174 = vsub.f32 %v2784, %v3032
    %v3175 = vsub.f32 %v2787, %v3032
    %v3176 = vsub.f32 %v2790, %v3032
    %v3177 = vsub.f32 %v2793, %v3032
    %v3178 = vsub.f32 %v2796, %v3032
    %v3179 = vsub.f32 %v2799, %v3032
    %v3180 = vsub.f32 %v2802, %v3032
    %v3181 = vsub.f32 %v2805, %v3032
    %v3182 = vsub.f32 %v2808, %v3032
    %v3183 = vsub.f32 %v2811, %v3032
    %v3184 = vsub.f32 %v2814, %v3032
    %v3185 = vsub.f32 %v2817, %v3032
    %v3186 = vsub.f32 %v2820, %v3032
    %v3187 = vsub.f32 %v2823, %v3032
    %v3188 = vsub.f32 %v2826, %v3032
    %v3189 = vsub.f32 %v2829, %v3032
    %v3190 = vsub.f32 %v2832, %v3032
    %v3191 = vsub.f32 %v2835, %v3032
    %v3192 = vsub.f32 %v2838, %v3032
    %v3193 = vsub.f32 %v2841, %v3032
    %v3194 = vsub.f32 %v2844, %v3032
    %v3195 = vsub.f32 %v2847, %v3032
    %v3196 = vsub.f32 %v2850, %v3032
    %v3197 = vsub.f32 %v2853, %v3032
    %v3198 = vsub.f32 %v2856, %v3032
    %v3199 = vsub.f32 %v2859, %v3032
    %v3200 = vsub.f32 %v2862, %v3032
    %v3201 = vsub.f32 %v2865, %v3032
    %v3202 = vsub.f32 %v2868, %v3032
    %v3203 = vsub.f32 %v2871, %v3032
    %v3204 = vsub.f32 %v2874, %v3032
    %v3205 = vsub.f32 %v2877, %v3032
    %v3206 = vsub.f32 %v2880, %v3032
    %v3207 = vsub.f32 %v2883, %v3032
    %v3208 = vsub.f32 %v2886, %v3032
    %v3209 = vsub.f32 %v2889, %v3032
    %v3210 = vsub.f32 %v2892, %v3032
    %v3211 = vsub.f32 %v2895, %v3032
    %v3212 = vsub.f32 %v2898, %v3032
    %v3213 = vsub.f32 %v2901, %v3032
    %v3214 = vsub.f32 %v2904, %v3032
    %v3215 = vsub.f32 %v2907, %v3032
    %v3216 = vsub.f32 %v2910, %v3032
    %v3217 = vsub.f32 %v2913, %v3032
    %v3218 = vsub.f32 %v2916, %v3032
    %v3219 = vsub.f32 %v2919, %v3032
    %v3220 = vsub.f32 %v2922, %v3032
    %v3221 = vsub.f32 %v2925, %v3032
    %v3222 = vsub.f32 %v2928, %v3032
    %v3223 = vsub.f32 %v2931, %v3032
    %v3224 = vsub.f32 %v2934, %v3032
    %v3225 = vsub.f32 %v2937, %v3032
    %v3226 = vsub.f32 %v2940, %v3032
    %v3227 = vsub.f32 %v2943, %v3032
    %v3228 = vsub.f32 %v2946, %v3032
    %v3229 = vsub.f32 %v2949, %v3032
    %v3230 = vsub.f32 %v2952, %v3032
    %v3231 = vsub.f32 %v2955, %v3032
    %v3232 = vsub.f32 %v2958, %v3032
    %v3233 = vsub.f32 %v2961, %v3032
    %v3234 = vadd.f32 %v3169, 1e-05
    %v3235 = vrsqrt.pop %v3234
    %v3236 = vmul.f32 %v3235, %v3234
    %v3237 = vmul.f32 %v3236, %v3235
    %v3238 = vmul.f32 0.5, %v3237
    %v3239 = vsub.f32 1.5, %v3238
    %v3240 = vmul.f32 %v3235, %v3239
    %vm3241 = vweird.f32 %v3234
    %vm3242 = vweird.f32 %v3235
    %vm3243 = vmor %vm3241, %vm3242
    %v3244 = vsel %vm3243, %v3235, %v3240
    %v3245 = vmul.f32 %v3170, %v3244
    %v3246 = vmul.f32 %v3171, %v3244
    %v3247 = vmul.f32 %v3172, %v3244
    %v3248 = vmul.f32 %v3173, %v3244
    %v3249 = vmul.f32 %v3174, %v3244
    %v3250 = vmul.f32 %v3175, %v3244
    %v3251 = vmul.f32 %v3176, %v3244
    %v3252 = vmul.f32 %v3177, %v3244
    %v3253 = vmul.f32 %v3178, %v3244
    %v3254 = vmul.f32 %v3179, %v3244
    %v3255 = vmul.f32 %v3180, %v3244
    %v3256 = vmul.f32 %v3181, %v3244
    %v3257 = vmul.f32 %v3182, %v3244
    %v3258 = vmul.f32 %v3183, %v3244
    %v3259 = vmul.f32 %v3184, %v3244
    %v3260 = vmul.f32 %v3185, %v3244
    %v3261 = vmul.f32 %v3186, %v3244
    %v3262 = vmul.f32 %v3187, %v3244
    %v3263 = vmul.f32 %v3188, %v3244
    %v3264 = vmul.f32 %v3189, %v3244
    %v3265 = vmul.f32 %v3190, %v3244
    %v3266 = vmul.f32 %v3191, %v3244
    %v3267 = vmul.f32 %v3192, %v3244
    %v3268 = vmul.f32 %v3193, %v3244
    %v3269 = vmul.f32 %v3194, %v3244
    %v3270 = vmul.f32 %v3195, %v3244
    %v3271 = vmul.f32 %v3196, %v3244
    %v3272 = vmul.f32 %v3197, %v3244
    %v3273 = vmul.f32 %v3198, %v3244
    %v3274 = vmul.f32 %v3199, %v3244
    %v3275 = vmul.f32 %v3200, %v3244
    %v3276 = vmul.f32 %v3201, %v3244
    %v3277 = vmul.f32 %v3202, %v3244
    %v3278 = vmul.f32 %v3203, %v3244
    %v3279 = vmul.f32 %v3204, %v3244
    %v3280 = vmul.f32 %v3205, %v3244
    %v3281 = vmul.f32 %v3206, %v3244
    %v3282 = vmul.f32 %v3207, %v3244
    %v3283 = vmul.f32 %v3208, %v3244
    %v3284 = vmul.f32 %v3209, %v3244
    %v3285 = vmul.f32 %v3210, %v3244
    %v3286 = vmul.f32 %v3211, %v3244
    %v3287 = vmul.f32 %v3212, %v3244
    %v3288 = vmul.f32 %v3213, %v3244
    %v3289 = vmul.f32 %v3214, %v3244
    %v3290 = vmul.f32 %v3215, %v3244
    %v3291 = vmul.f32 %v3216, %v3244
    %v3292 = vmul.f32 %v3217, %v3244
    %v3293 = vmul.f32 %v3218, %v3244
    %v3294 = vmul.f32 %v3219, %v3244
    %v3295 = vmul.f32 %v3220, %v3244
    %v3296 = vmul.f32 %v3221, %v3244
    %v3297 = vmul.f32 %v3222, %v3244
    %v3298 = vmul.f32 %v3223, %v3244
    %v3299 = vmul.f32 %v3224, %v3244
    %v3300 = vmul.f32 %v3225, %v3244
    %v3301 = vmul.f32 %v3226, %v3244
    %v3302 = vmul.f32 %v3227, %v3244
    %v3303 = vmul.f32 %v3228, %v3244
    %v3304 = vmul.f32 %v3229, %v3244
    %v3305 = vmul.f32 %v3230, %v3244
    %v3306 = vmul.f32 %v3231, %v3244
    %v3307 = vmul.f32 %v3232, %v3244
    %v3308 = vmul.f32 %v3233, %v3244
    %v3309 = vld [vmem:[#allocation3] sm:$0xff]
    %v3310 = vld [vmem:[#allocation3 + $0x8] sm:$0xff]
    %v3311 = vld [vmem:[#allocation3 + $0x10] sm:$0xff]
    %v3312 = vld [vmem:[#allocation3 + $0x18] sm:$0xff]
    %v3313 = vld [vmem:[#allocation3 + $0x20] sm:$0xff]
    %v3314 = vld [vmem:[#allocation3 + $0x28] sm:$0xff]
    %v3315 = vld [vmem:[#allocation3 + $0x30] sm:$0xff]
    %v3316 = vld [vmem:[#allocation3 + $0x38] sm:$0xff]
    %v3317 = vld [vmem:[#allocation3 + $0x40] sm:$0xff]
    %v3318 = vld [vmem:[#allocation3 + $0x48] sm:$0xff]
    %v3319 = vld [vmem:[#allocation3 + $0x50] sm:$0xff]
    %v3320 = vld [vmem:[#allocation3 + $0x58] sm:$0xff]
    %v3321 = vld [vmem:[#allocation3 + $0x60] sm:$0xff]
    %v3322 = vld [vmem:[#allocation3 + $0x68] sm:$0xff]
    %v3323 = vld [vmem:[#allocation3 + $0x70] sm:$0xff]
    %v3324 = vld [vmem:[#allocation3 + $0x78] sm:$0xff]
    %v3325 = vld [vmem:[#allocation3 + $0x80] sm:$0xff]
    %v3326 = vld [vmem:[#allocation3 + $0x88] sm:$0xff]
    %v3327 = vld [vmem:[#allocation3 + $0x90] sm:$0xff]
    %v3328 = vld [vmem:[#allocation3 + $0x98] sm:$0xff]
    %v3329 = vld [vmem:[#allocation3 + $0xa0] sm:$0xff]
    %v3330 = vld [vmem:[#allocation3 + $0xa8] sm:$0xff]
    %v3331 = vld [vmem:[#allocation3 + $0xb0] sm:$0xff]
    %v3332 = vld [vmem:[#allocation3 + $0xb8] sm:$0xff]
    %v3333 = vld [vmem:[#allocation3 + $0xc0] sm:$0xff]
    %v3334 = vld [vmem:[#allocation3 + $0xc8] sm:$0xff]
    %v3335 = vld [vmem:[#allocation3 + $0xd0] sm:$0xff]
    %v3336 = vld [vmem:[#allocation3 + $0xd8] sm:$0xff]
    %v3337 = vld [vmem:[#allocation3 + $0xe0] sm:$0xff]
    %v3338 = vld [vmem:[#allocation3 + $0xe8] sm:$0xff]
    %v3339 = vld [vmem:[#allocation3 + $0xf0] sm:$0xff]
    %v3340 = vld [vmem:[#allocation3 + $0xf8] sm:$0xff]
    %v3341 = vld [vmem:[#allocation3 + $0x100] sm:$0xff]
    %v3342 = vld [vmem:[#allocation3 + $0x108] sm:$0xff]
    %v3343 = vld [vmem:[#allocation3 + $0x110] sm:$0xff]
    %v3344 = vld [vmem:[#allocation3 + $0x118] sm:$0xff]
    %v3345 = vld [vmem:[#allocation3 + $0x120] sm:$0xff]
    %v3346 = vld [vmem:[#allocation3 + $0x128] sm:$0xff]
    %v3347 = vld [vmem:[#allocation3 + $0x130] sm:$0xff]
    %v3348 = vld [vmem:[#allocation3 + $0x138] sm:$0xff]
    %v3349 = vld [vmem:[#allocation3 + $0x140] sm:$0xff]
    %v3350 = vld [vmem:[#allocation3 + $0x148] sm:$0xff]
    %v3351 = vld [vmem:[#allocation3 + $0x150] sm:$0xff]
    %v3352 = vld [vmem:[#allocation3 + $0x158] sm:$0xff]
    %v3353 = vld [vmem:[#allocation3 + $0x160] sm:$0xff]
    %v3354 = vld [vmem:[#allocation3 + $0x168] sm:$0xff]
    %v3355 = vld [vmem:[#allocation3 + $0x170] sm:$0xff]
    %v3356 = vld [vmem:[#allocation3 + $0x178] sm:$0xff]
    %v3357 = vld [vmem:[#allocation3 + $0x180] sm:$0xff]
    %v3358 = vld [vmem:[#allocation3 + $0x188] sm:$0xff]
    %v3359 = vld [vmem:[#allocation3 + $0x190] sm:$0xff]
    %v3360 = vld [vmem:[#allocation3 + $0x198] sm:$0xff]
    %v3361 = vld [vmem:[#allocation3 + $0x1a0] sm:$0xff]
    %v3362 = vld [vmem:[#allocation3 + $0x1a8] sm:$0xff]
    %v3363 = vld [vmem:[#allocation3 + $0x1b0] sm:$0xff]
    %v3364 = vld [vmem:[#allocation3 + $0x1b8] sm:$0xff]
    %v3365 = vld [vmem:[#allocation3 + $0x1c0] sm:$0xff]
    %v3366 = vld [vmem:[#allocation3 + $0x1c8] sm:$0xff]
    %v3367 = vld [vmem:[#allocation3 + $0x1d0] sm:$0xff]
    %v3368 = vld [vmem:[#allocation3 + $0x1d8] sm:$0xff]
    %v3369 = vld [vmem:[#allocation3 + $0x1e0] sm:$0xff]
    %v3370 = vld [vmem:[#allocation3 + $0x1e8] sm:$0xff]
    %v3371 = vld [vmem:[#allocation3 + $0x1f0] sm:$0xff]
    %v3372 = vld [vmem:[#allocation3 + $0x1f8] sm:$0xff]
    %v3373 = vadd.f32 %v3245, %v3309
    %v3374 = vadd.f32 %v3246, %v3310
    %v3375 = vadd.f32 %v3247, %v3311
    %v3376 = vadd.f32 %v3248, %v3312
    %v3377 = vadd.f32 %v3249, %v3313
    %v3378 = vadd.f32 %v3250, %v3314
    %v3379 = vadd.f32 %v3251, %v3315
    %v3380 = vadd.f32 %v3252, %v3316
    %v3381 = vadd.f32 %v3253, %v3317
    %v3382 = vadd.f32 %v3254, %v3318
    %v3383 = vadd.f32 %v3255, %v3319
    %v3384 = vadd.f32 %v3256, %v3320
    %v3385 = vadd.f32 %v3257, %v3321
    %v3386 = vadd.f32 %v3258, %v3322
    %v3387 = vadd.f32 %v3259, %v3323
    %v3388 = vadd.f32 %v3260, %v3324
    %v3389 = vadd.f32 %v3261, %v3325
    %v3390 = vadd.f32 %v3262, %v3326
    %v3391 = vadd.f32 %v3263, %v3327
    %v3392 = vadd.f32 %v3264, %v3328
    %v3393 = vadd.f32 %v3265, %v3329
    %v3394 = vadd.f32 %v3266, %v3330
    %v3395 = vadd.f32 %v3267, %v3331
    %v3396 = vadd.f32 %v3268, %v3332
    %v3397 = vadd.f32 %v3269, %v3333
    %v3398 = vadd.f32 %v3270, %v3334
    %v3399 = vadd.f32 %v3271, %v3335
    %v3400 = vadd.f32 %v3272, %v3336
    %v3401 = vadd.f32 %v3273, %v3337
    %v3402 = vadd.f32 %v3274, %v3338
    %v3403 = vadd.f32 %v3275, %v3339
    %v3404 = vadd.f32 %v3276, %v3340
    %v3405 = vadd.f32 %v3277, %v3341
    %v3406 = vadd.f32 %v3278, %v3342
    %v3407 = vadd.f32 %v3279, %v3343
    %v3408 = vadd.f32 %v3280, %v3344
    %v3409 = vadd.f32 %v3281, %v3345
    %v3410 = vadd.f32 %v3282, %v3346
    %v3411 = vadd.f32 %v3283, %v3347
    %v3412 = vadd.f32 %v3284, %v3348
    %v3413 = vadd.f32 %v3285, %v3349
    %v3414 = vadd.f32 %v3286, %v3350
    %v3415 = vadd.f32 %v3287, %v3351
    %v3416 = vadd.f32 %v3288, %v3352
    %v3417 = vadd.f32 %v3289, %v3353
    %v3418 = vadd.f32 %v3290, %v3354
    %v3419 = vadd.f32 %v3291, %v3355
    %v3420 = vadd.f32 %v3292, %v3356
    %v3421 = vadd.f32 %v3293, %v3357
    %v3422 = vadd.f32 %v3294, %v3358
    %v3423 = vadd.f32 %v3295, %v3359
    %v3424 = vadd.f32 %v3296, %v3360
    %v3425 = vadd.f32 %v3297, %v3361
    %v3426 = vadd.f32 %v3298, %v3362
    %v3427 = vadd.f32 %v3299, %v3363
    %v3428 = vadd.f32 %v3300, %v3364
    %v3429 = vadd.f32 %v3301, %v3365
    %v3430 = vadd.f32 %v3302, %v3366
    %v3431 = vadd.f32 %v3303, %v3367
    %v3432 = vadd.f32 %v3304, %v3368
    %v3433 = vadd.f32 %v3305, %v3369
    %v3434 = vadd.f32 %v3306, %v3370
    %v3435 = vadd.f32 %v3307, %v3371
    %v3436 = vadd.f32 %v3308, %v3372
    %3437 = vst [vmem:[#allocation11] sm:$0xff] %v3373
    %3438 = vst [vmem:[#allocation11 + $0x8] sm:$0xff] %v3374
    %3439 = vst [vmem:[#allocation11 + $0x10] sm:$0xff] %v3375
    %3440 = vst [vmem:[#allocation11 + $0x18] sm:$0xff] %v3376
    %3441 = vst [vmem:[#allocation11 + $0x20] sm:$0xff] %v3377
    %3442 = vst [vmem:[#allocation11 + $0x28] sm:$0xff] %v3378
    %3443 = vst [vmem:[#allocation11 + $0x30] sm:$0xff] %v3379
    %3444 = vst [vmem:[#allocation11 + $0x38] sm:$0xff] %v3380
    %3445 = vst [vmem:[#allocation11 + $0x40] sm:$0xff] %v3381
    %3446 = vst [vmem:[#allocation11 + $0x48] sm:$0xff] %v3382
    %3447 = vst [vmem:[#allocation11 + $0x50] sm:$0xff] %v3383
    %3448 = vst [vmem:[#allocation11 + $0x58] sm:$0xff] %v3384
    %3449 = vst [vmem:[#allocation11 + $0x60] sm:$0xff] %v3385
    %3450 = vst [vmem:[#allocation11 + $0x68] sm:$0xff] %v3386
    %3451 = vst [vmem:[#allocation11 + $0x70] sm:$0xff] %v3387
    %3452 = vst [vmem:[#allocation11 + $0x78] sm:$0xff] %v3388
    %3453 = vst [vmem:[#allocation11 + $0x80] sm:$0xff] %v3389
    %3454 = vst [vmem:[#allocation11 + $0x88] sm:$0xff] %v3390
    %3455 = vst [vmem:[#allocation11 + $0x90] sm:$0xff] %v3391
    %3456 = vst [vmem:[#allocation11 + $0x98] sm:$0xff] %v3392
    %3457 = vst [vmem:[#allocation11 + $0xa0] sm:$0xff] %v3393
    %3458 = vst [vmem:[#allocation11 + $0xa8] sm:$0xff] %v3394
    %3459 = vst [vmem:[#allocation11 + $0xb0] sm:$0xff] %v3395
    %3460 = vst [vmem:[#allocation11 + $0xb8] sm:$0xff] %v3396
    %3461 = vst [vmem:[#allocation11 + $0xc0] sm:$0xff] %v3397
    %3462 = vst [vmem:[#allocation11 + $0xc8] sm:$0xff] %v3398
    %3463 = vst [vmem:[#allocation11 + $0xd0] sm:$0xff] %v3399
    %3464 = vst [vmem:[#allocation11 + $0xd8] sm:$0xff] %v3400
    %3465 = vst [vmem:[#allocation11 + $0xe0] sm:$0xff] %v3401
    %3466 = vst [vmem:[#allocation11 + $0xe8] sm:$0xff] %v3402
    %3467 = vst [vmem:[#allocation11 + $0xf0] sm:$0xff] %v3403
    %3468 = vst [vmem:[#allocation11 + $0xf8] sm:$0xff] %v3404
    %3469 = vst [vmem:[#allocation11 + $0x100] sm:$0xff] %v3405
    %3470 = vst [vmem:[#allocation11 + $0x108] sm:$0xff] %v3406
    %3471 = vst [vmem:[#allocation11 + $0x110] sm:$0xff] %v3407
    %3472 = vst [vmem:[#allocation11 + $0x118] sm:$0xff] %v3408
    %3473 = vst [vmem:[#allocation11 + $0x120] sm:$0xff] %v3409
    %3474 = vst [vmem:[#allocation11 + $0x128] sm:$0xff] %v3410
    %3475 = vst [vmem:[#allocation11 + $0x130] sm:$0xff] %v3411
    %3476 = vst [vmem:[#allocation11 + $0x138] sm:$0xff] %v3412
    %3477 = vst [vmem:[#allocation11 + $0x140] sm:$0xff] %v3413
    %3478 = vst [vmem:[#allocation11 + $0x148] sm:$0xff] %v3414
    %3479 = vst [vmem:[#allocation11 + $0x150] sm:$0xff] %v3415
    %3480 = vst [vmem:[#allocation11 + $0x158] sm:$0xff] %v3416
    %3481 = vst [vmem:[#allocation11 + $0x160] sm:$0xff] %v3417
    %3482 = vst [vmem:[#allocation11 + $0x168] sm:$0xff] %v3418
    %3483 = vst [vmem:[#allocation11 + $0x170] sm:$0xff] %v3419
    %3484 = vst [vmem:[#allocation11 + $0x178] sm:$0xff] %v3420
    %3485 = vst [vmem:[#allocation11 + $0x180] sm:$0xff] %v3421
    %3486 = vst [vmem:[#allocation11 + $0x188] sm:$0xff] %v3422
    %3487 = vst [vmem:[#allocation11 + $0x190] sm:$0xff] %v3423
    %3488 = vst [vmem:[#allocation11 + $0x198] sm:$0xff] %v3424
    %3489 = vst [vmem:[#allocation11 + $0x1a0] sm:$0xff] %v3425
    %3490 = vst [vmem:[#allocation11 + $0x1a8] sm:$0xff] %v3426
    %3491 = vst [vmem:[#allocation11 + $0x1b0] sm:$0xff] %v3427
    %3492 = vst [vmem:[#allocation11 + $0x1b8] sm:$0xff] %v3428
    %3493 = vst [vmem:[#allocation11 + $0x1c0] sm:$0xff] %v3429
    %3494 = vst [vmem:[#allocation11 + $0x1c8] sm:$0xff] %v3430
    %3495 = vst [vmem:[#allocation11 + $0x1d0] sm:$0xff] %v3431
    %3496 = vst [vmem:[#allocation11 + $0x1d8] sm:$0xff] %v3432
    %3497 = vst [vmem:[#allocation11 + $0x1e0] sm:$0xff] %v3433
    %3498 = vst [vmem:[#allocation11 + $0x1e8] sm:$0xff] %v3434
    %3499 = vst [vmem:[#allocation11 + $0x1f0] sm:$0xff] %v3435
    %3500 = vst [vmem:[#allocation11 + $0x1f8] sm:$0xff] %v3436
    // Predicated region
    $region34: #{tpu_custom_call.1} parent=1 // pred_check
      _
    $region35: #{tpu_custom_call.1} parent=1 // pred_check_branch
      %3502 = sbr.rel (0) target = $region37
    $region36: #{tpu_custom_call.1} parent=1 // pred_region
      %3504 = vsyncadd [#allocation5], 0
      %s3505 = sshll.u32 [#allocation11], 4
      %s3506 = int_to_ptr.vmem [resolvable:$true] %s3505
      %s3507 = sshll.u32 %s4, 4
      %s3508 = int_to_ptr.hbm [resolvable:$true] %s3507
      %3513 = dma.vmem_to_hbm [thread:$0]  %s3506, 8192, %s3508, [#allocation5], 128, 128, 8
    $region37: #{tpu_custom_call.1} parent=1 // pred_fallthru
      _
    // Predicated region
    $region38: #{tpu_custom_call.1} parent=1 // pred_check
      _
    $region39: #{tpu_custom_call.1} parent=1 // pred_check_branch
      %3515 = sbr.rel (0) target = $region41
    $region40: #{tpu_custom_call.1} parent=1 // pred_region
      %3517 = dma.done [#allocation5], 8192
    $region41: #{tpu_custom_call.1} parent=1 // pred_fallthru
      _
    %3518 = vsyncpa [#allocation4], 1
    %3519 = vsyncpa [#allocation7], 1
    %3520 = vsyncpa [#allocation10], 1
    %3521 = vsyncpa [#allocation5], 1

</llo_original>
